<compile_context>
chip_gen: v6e
topology: v6e:2x2x1
jax: 0.10.0
libtpu: 0.0.40
codegen_flags: <defaults>
</compile_context>

<pallas_src>
import functools
import math

import jax
import jax.numpy as jnp
import numpy as np
from jax.experimental import pallas as pl
from jax.experimental.pallas import tpu as pltpu

LN_EPS = 1e-6  # config.layer_norm_eps (VJEPA2 default)


# ---------------------------------------------------------------------------
# generation-aware compiler params
# ---------------------------------------------------------------------------
@functools.lru_cache(maxsize=None)
def _vmem_limit_bytes():
    # ~75% of physical VMEM, capped at 100 MiB: v5e/v6e (128 MiB) -> 100 MiB,
    # v7x (64 MiB) -> 48 MiB.  Conservative fallback if the query is unavailable.
    try:
        cap = int(pltpu.get_tpu_info().vmem_capacity_bytes)
        return int(min(cap * 3 // 4, 100 * 1024 * 1024))
    except Exception:
        return 64 * 1024 * 1024


def _cparams(dim_semantics=None):
    return pltpu.CompilerParams(dimension_semantics=dim_semantics,
                                vmem_limit_bytes=_vmem_limit_bytes())


def _bcast_spec(shape):
    """Whole-array block, re-used (broadcast) at every grid step."""
    nd = len(shape)
    return pl.BlockSpec(tuple(shape), lambda *_: (0,) * nd)


# ---------------------------------------------------------------------------
# math helpers (all f32 on the VPU/EUP)
# ---------------------------------------------------------------------------
def _erf_poly(x):
    # Abramowitz & Stegun 7.1.26 (|err| < 1.5e-7, far below test tolerance);
    # the exp lands on the EUP.  Used unconditionally so results never depend
    # on call order / runtime probing.
    a1, a2, a3, a4, a5 = 0.254829592, -0.284496736, 1.421413741, -1.453152027, 1.061405429
    p = 0.3275911
    sign = jnp.where(x < 0.0, -1.0, 1.0)
    ax = jnp.abs(x)
    t = 1.0 / (1.0 + p * ax)
    poly = ((((a5 * t + a4) * t + a3) * t + a2) * t + a1) * t
    return sign * (1.0 - poly * jnp.exp(-ax * ax))


def _gelu_exact(x):
    # Exact (erf) GELU, matching torch ACT2FN["gelu"].
    return 0.5 * x * (1.0 + _erf_poly(x * (1.0 / math.sqrt(2.0))))


def _layernorm(x, g, b, eps):
    xf = x.astype(jnp.float32)
    mu = jnp.mean(xf, axis=-1, keepdims=True)
    var = jnp.mean(jnp.square(xf - mu), axis=-1, keepdims=True)
    return (xf - mu) * jax.lax.rsqrt(var + eps) * g + b


def _softmax_last(s, approx):
    """Row softmax (last axis) with the divide moved to the EUP on the fast path."""
    m = jnp.max(s, axis=-1, keepdims=True)
    p = jnp.exp(s - m)
    den = jnp.sum(p, axis=-1, keepdims=True)
    r = pl.reciprocal(den, approx=True) if approx else 1.0 / den
    return p * r


# ---------------------------------------------------------------------------
# kernel bodies
# ---------------------------------------------------------------------------
def _ln_qkv_kernel(x_ref, g_ref, b_ref, wqkv_ref, bqkv_ref, qkv_ref, *, eps):
    """LayerNorm1 + fused QKV projection (single (D, 3D) matmul) for one batch row."""
    x = x_ref[...].astype(jnp.float32)                                     # (S, D)
    h = _layernorm(x, g_ref[...], b_ref[...], eps).astype(wqkv_ref.dtype)
    qkv = jnp.dot(h, wqkv_ref[...], preferred_element_type=jnp.float32) + bqkv_ref[...]
    qkv_ref[...] = qkv.astype(qkv_ref.dtype)                               # (S, 3D)


def _attn_outproj_kernel(qkv_ref, wo_ref, bo_ref, o_ref, *, num_heads, scale, approx):
    """Eager multi-head attention fused with out_proj for one batch row.

    Heads are unrolled with static lane slices (q/k/v never leave VMEM); each
    head's context is pushed through its (hd, D) slice of wo and accumulated in
    f32, producing the lane-dense (S, D) attention output in a single pass.
    """
    S, threeD = qkv_ref.shape
    D = threeD // 3
    hd = D // num_heads
    qkv = qkv_ref[...]                                                     # (S, 3D) cd
    acc = jnp.zeros((S, D), jnp.float32)
    for h in range(num_heads):
        q = qkv[:, h * hd:(h + 1) * hd]                                    # (S, hd)
        k = qkv[:, D + h * hd:D + (h + 1) * hd]
        v = qkv[:, 2 * D + h * hd:2 * D + (h + 1) * hd]
        s = jnp.dot(q, k.T, preferred_element_type=jnp.float32) * scale    # (S, S) f32
        p = _softmax_last(s, approx).astype(v.dtype)
        ctx = jnp.dot(p, v, preferred_element_type=jnp.float32)            # (S, hd)
        acc = acc + jnp.dot(ctx.astype(wo_ref.dtype), wo_ref[h * hd:(h + 1) * hd, :],
                            preferred_element_type=jnp.float32)
    o_ref[...] = (acc + bo_ref[...]).astype(o_ref.dtype)                   # (S, D)


def _mlp_kernel(x_ref, a_ref, g_ref, b_ref, w1_ref, b1_ref, w2_ref, b2_ref,
                o_ref, *, eps):
    """residual + LayerNorm2 + MLP + residual for one batch row."""
    x = x_ref[...].astype(jnp.float32) + a_ref[...].astype(jnp.float32)    # (S, D)
    h = _layernorm(x, g_ref[...], b_ref[...], eps).astype(w1_ref.dtype)
    m = jnp.dot(h, w1_ref[...], preferred_element_type=jnp.float32) + b1_ref[...]
    m = _gelu_exact(m).astype(w2_ref.dtype)
    m = jnp.dot(m, w2_ref[...], preferred_element_type=jnp.float32) + b2_ref[...]
    o_ref[...] = (x + m).astype(o_ref.dtype)


def _cross_attn_kernel(x_ref, g_ref, b_ref, wkv_ref, bkv_ref, q_ref, sel_ref,
                       selt_ref, o_ref, *, eps, scale, approx):
    """LayerNorm1 + fused K/V projection + single-query attention over ALL heads
    for one batch row.  sel (D, H) / selT (H, D) are 0/1 head-group selectors:
      scores[t, h] = sum_{d in head h} k[t, d] * q[0, d]   (one (S,D)@(D,H) matmul)
    so no per-head 1-lane matmuls and no head split/merge transposes are needed.
    """
    S, D = x_ref.shape
    x = x_ref[...].astype(jnp.float32)
    hn = _layernorm(x, g_ref[...], b_ref[...], eps).astype(wkv_ref.dtype)
    kv = jnp.dot(hn, wkv_ref[...], preferred_element_type=jnp.float32) + bkv_ref[...]
    k = kv[:, :D]                                                          # (S, D) f32
    v = kv[:, D:]                                                          # (S, D) f32
    q = q_ref[...].astype(jnp.float32)                                     # (1, D)

    s = jnp.dot(k * q, sel_ref[...], preferred_element_type=jnp.float32) * scale  # (S, H)
    m = jnp.max(s, axis=0, keepdims=True)                                  # (1, H)
    p = jnp.exp(s - m)
    den = jnp.sum(p, axis=0, keepdims=True)
    r = pl.reciprocal(den, approx=True) if approx else 1.0 / den
    p = p * r                                                              # (S, H)
    p_full = jnp.dot(p, selt_ref[...], preferred_element_type=jnp.float32)  # (S, D)
    ctx = jnp.sum(p_full * v, axis=0, keepdims=True)                       # (1, D)
    o_ref[...] = ctx.astype(o_ref.dtype)


def _cross_mlp_kernel(ctx_ref, qtok_ref, g_ref, b_ref, w1_ref, b1_ref, w2_ref,
                      b2_ref, o_ref, *, eps):
    """residual + LayerNorm1 (reused, as in the reference) + MLP + residual,
    batched over ALL query rows (B, D) in one matmul."""
    h = qtok_ref[...].astype(jnp.float32) + ctx_ref[...].astype(jnp.float32)  # (B, D)
    h2 = _layernorm(h, g_ref[...], b_ref[...], eps).astype(w1_ref.dtype)
    m = jnp.dot(h2, w1_ref[...], preferred_element_type=jnp.float32) + b1_ref[...]
    m = _gelu_exact(m).astype(w2_ref.dtype)
    m = jnp.dot(m, w2_ref[...], preferred_element_type=jnp.float32) + b2_ref[...]
    o_ref[...] = (h + m).astype(o_ref.dtype)


# ---------------------------------------------------------------------------
# pallas_call wrappers
# ---------------------------------------------------------------------------
def self_attn_layer(x, p, num_heads, compute_dtype, eps=LN_EPS):
    """VJEPA2PoolerSelfAttentionLayer.forward: (B, S, D) -> (B, S, D)."""
    B, S, D = x.shape
    hd = D // num_heads
    scale = float(hd) ** -0.5
    approx = compute_dtype != jnp.float32
    cd = compute_dtype

    def row(width):
        return pl.BlockSpec((None, S, width), lambda b: (b, 0, 0))

    # (1) LayerNorm1 + fused QKV projection.
    qkv_args = (p["ln1_g"], p["ln1_b"], p["wqkv"], p["bqkv"])
    qkv = pl.pallas_call(
        functools.partial(_ln_qkv_kernel, eps=eps),
        out_shape=jax.ShapeDtypeStruct((B, S, 3 * D), cd),
        grid=(B,),
        in_specs=[row(D)] + [_bcast_spec(a.shape) for a in qkv_args],
        out_specs=row(3 * D),
        compiler_params=_cparams(("parallel",)),
    )(x, *qkv_args)

    # (2) attention fused with out_proj (lane-dense (B, S, D) output).
    attn = pl.pallas_call(
        functools.partial(_attn_outproj_kernel, num_heads=num_heads,
                          scale=scale, approx=approx),
        out_shape=jax.ShapeDtypeStruct((B, S, D), cd),
        grid=(B,),
        in_specs=[row(3 * D), _bcast_spec(p["wo"].shape), _bcast_spec(p["bo"].shape)],
        out_specs=row(D),
        compiler_params=_cparams(("parallel",)),
    )(qkv, p["wo"], p["bo"])

    # (3) residual + LayerNorm2 + MLP + residual.
    mlp_args = (p["ln2_g"], p["ln2_b"], p["w1"], p["b1"], p["w2"], p["b2"])
    return pl.pallas_call(
        functools.partial(_mlp_kernel, eps=eps),
        out_shape=jax.ShapeDtypeStruct((B, S, D), x.dtype),
        grid=(B,),
        in_specs=[row(D), row(D)] + [_bcast_spec(a.shape) for a in mlp_args],
        out_specs=row(D),
        compiler_params=_cparams(("parallel",)),
    )(x, attn, *mlp_args)


def cross_attn_layer(x, p, num_heads, compute_dtype, eps=LN_EPS):
    """VJEPA2PoolerCrossAttentionLayer.forward with queries = query_tokens
    broadcast over the batch.  Returns (B, D) (already squeezed)."""
    B, S, D = x.shape
    hd = D // num_heads
    scale = float(hd) ** -0.5
    approx = compute_dtype != jnp.float32

    row = pl.BlockSpec((None, S, D), lambda b: (b, 0, 0))
    out_row = pl.BlockSpec((None, 1, D), lambda b: (b, 0, 0))

    # (1) LN1 + K/V projection + all-heads single-query attention, one step per batch.
    attn_args = (p["ln1_g"], p["ln1_b"], p["wkv"], p["bkv"],
                 p["q_row"], p["sel"], p["selT"])
    ctx = pl.pallas_call(
        functools.partial(_cross_attn_kernel, eps=eps, scale=scale, approx=approx),
        out_shape=jax.ShapeDtypeStruct((B, 1, D), jnp.float32),
        grid=(B,),
        in_specs=[row] + [_bcast_spec(a.shape) for a in attn_args],
        out_specs=out_row,
        compiler_params=_cparams(("parallel",)),
    )(x, *attn_args)
    ctx = ctx.reshape(B, D)

    # (2) residual + LN1 (reused) + MLP + residual over the full (B, D) matrix.
    mlp_args = (p["ln1_g"], p["ln1_b"], p["w1"], p["b1"], p["w2"], p["b2"])
    return pl.pallas_call(
        functools.partial(_cross_mlp_kernel, eps=eps),
        out_shape=jax.ShapeDtypeStruct((B, D), x.dtype),
        grid=(1,),
        in_specs=[pl.BlockSpec((B, D), lambda i: (0, 0)), _bcast_spec((1, D))]
        + [_bcast_spec(a.shape) for a in mlp_args],
        out_specs=pl.BlockSpec((B, D), lambda i: (0, 0)),
        compiler_params=_cparams(("arbitrary",)),
    )(ctx, p["qtok"], *mlp_args)


@functools.partial(jax.jit, static_argnums=(2, 3))
def attentive_pooler_forward(hidden_state, prepared_params, num_heads,
                             compute_dtype=jnp.bfloat16):
    """== VJEPA2AttentivePooler.forward ==  (B, S, D) -> (B, D)."""
    x = hidden_state
    for layer_params in prepared_params["self_layers"]:
        x = self_attn_layer(x, layer_params, num_heads, compute_dtype)
    return cross_attn_layer(x, prepared_params["cross_layer"], num_heads, compute_dtype)


# ---------------------------------------------------------------------------
# One-time parameter preparation (outside the per-forward path)
# ---------------------------------------------------------------------------
def prepare_params(params, num_heads, compute_dtype):
    """Concat QKV/KV weights, pre-cast matmul weights to the compute dtype,
    pre-project the shared query token, and build head-group selectors.
    Runs ONCE; the forward never re-casts / re-tiles / re-projects weights."""
    cd = compute_dtype
    f32 = jnp.float32

    self_layers = []
    for p in params["self_layers"]:
        self_layers.append(dict(
            ln1_g=p["ln1_g"].astype(f32), ln1_b=p["ln1_b"].astype(f32),
            wqkv=jnp.concatenate([p["wq"], p["wk"], p["wv"]], axis=1).astype(cd),
            bqkv=jnp.concatenate([p["bq"], p["bk"], p["bv"]], axis=1).astype(f32),
            wo=p["wo"].astype(cd), bo=p["bo"].astype(f32),
            ln2_g=p["ln2_g"].astype(f32), ln2_b=p["ln2_b"].astype(f32),
            w1=p["w1"].astype(cd), b1=p["b1"].astype(f32),
            w2=p["w2"].astype(cd), b2=p["b2"].astype(f32)))

    c = params["cross_layer"]
    D = c["wq"].shape[0]
    hd = D // num_heads
    qtok = params["query_tokens"].reshape(1, D).astype(f32)
    # The shared query token is identical for every batch row -> project it once.
    q_row = qtok @ c["wq"].astype(f32) + c["bq"].astype(f32)               # (1, D) f32
    # Head-group selectors: sel[d, h] = 1 if d // head_dim == h.
    d_head = np.arange(D) // hd
    sel = (d_head[:, None] == np.arange(num_heads)[None, :]).astype(np.float32)
    cross_layer = dict(
        ln1_g=c["ln1_g"].astype(f32), ln1_b=c["ln1_b"].astype(f32),
        wkv=jnp.concatenate([c["wk"], c["wv"]], axis=1).astype(cd),
        bkv=jnp.concatenate([c["bk"], c["bv"]], axis=1).astype(f32),
        q_row=q_row, qtok=qtok,
        sel=jnp.asarray(sel), selT=jnp.asarray(np.ascontiguousarray(sel.T)),
        w1=c["w1"].astype(cd), b1=c["b1"].astype(f32),
        w2=c["w2"].astype(cd), b2=c["b2"].astype(f32))

    return dict(self_layers=self_layers, cross_layer=cross_layer)


# ---------------------------------------------------------------------------
# Deterministic parameter initialization (shapes from the module __init__)
# ---------------------------------------------------------------------------
def init_params(key, D, mlp_hidden, num_pooler_layers):
    def linear(k, din, dout, scale=0.05):
        kw, kb = jax.random.split(k)
        w = jax.random.normal(kw, (dout, din), jnp.float32) * scale       # PyTorch (out, in)
        b = jax.random.normal(kb, (dout,), jnp.float32) * scale
        return w.T, b.reshape(1, dout)                                    # (in, out), (1, out)

    keys = jax.random.split(key, num_pooler_layers + 1)
    self_layers = []
    for i in range(num_pooler_layers):
        ks = jax.random.split(keys[i], 6)
        wq, bq = linear(ks[0], D, D)
        wk, bk = linear(ks[1], D, D)
        wv, bv = linear(ks[2], D, D)
        wo, bo = linear(ks[3], D, D)
        w1, b1 = linear(ks[4], D, mlp_hidden)
        w2, b2 = linear(ks[5], mlp_hidden, D)
        self_layers.append(dict(
            ln1_g=jnp.ones((1, D), jnp.float32), ln1_b=jnp.zeros((1, D), jnp.float32),
            wq=wq, bq=bq, wk=wk, bk=bk, wv=wv, bv=bv, wo=wo, bo=bo,
            ln2_g=jnp.ones((1, D), jnp.float32), ln2_b=jnp.zeros((1, D), jnp.float32),
            w1=w1, b1=b1, w2=w2, b2=b2))

    kc = jax.random.split(keys[-1], 5)
    wq, bq = linear(kc[0], D, D)
    wk, bk = linear(kc[1], D, D)
    wv, bv = linear(kc[2], D, D)
    w1, b1 = linear(kc[3], D, mlp_hidden)
    w2, b2 = linear(kc[4], mlp_hidden, D)
    # layer_norm2 of the cross layer is never used in the reference forward -> omitted.
    cross_layer = dict(
        ln1_g=jnp.ones((1, D), jnp.float32), ln1_b=jnp.zeros((1, D), jnp.float32),
        wq=wq, bq=bq, wk=wk, bk=bk, wv=wv, bv=bv,
        w1=w1, b1=b1, w2=w2, b2=b2)

    return dict(
        query_tokens=jnp.zeros((1, 1, D), jnp.float32),  # nn.Parameter(torch.zeros(1,1,D))
        self_layers=self_layers,
        cross_layer=cross_layer)


# ---------------------------------------------------------------------------
# Pure-JAX f32 reference (mirrors the PyTorch forward) for the correctness check
# ---------------------------------------------------------------------------
def _ref_layernorm(x, g, b, eps=LN_EPS):
    mu = jnp.mean(x, axis=-1, keepdims=True)
    var = jnp.mean(jnp.square(x - mu), axis=-1, keepdims=True)
    return (x - mu) * jax.lax.rsqrt(var + eps) * g + b


def _ref_mha(q, k, v, num_heads, scale):
    B, Sq, D = q.shape
    hd = D // num_heads
    qh = q.reshape(B, Sq, num_heads, hd).transpose(0, 2, 1, 3)
    kh = k.reshape(B, -1, num_heads, hd).transpose(0, 2, 1, 3)
    vh = v.reshape(B, -1, num_heads, hd).transpose(0, 2, 1, 3)
    s = jnp.einsum("bhqd,bhkd->bhqk", qh, kh) * scale
    p = jax.nn.softmax(s.astype(jnp.float32), axis=-1)
    o = jnp.einsum("bhqk,bhkd->bhqd", p, vh)
    return o.transpose(0, 2, 1, 3).reshape(B, Sq, D)


def _ref_self_layer(x, p, num_heads):
    D = x.shape[-1]
    scale = (D // num_heads) ** -0.5
    h = _ref_layernorm(x, p["ln1_g"][0], p["ln1_b"][0])
    q = h @ p["wq"] + p["bq"][0]
    k = h @ p["wk"] + p["bk"][0]
    v = h @ p["wv"] + p["bv"][0]
    attn = _ref_mha(q, k, v, num_heads, scale) @ p["wo"] + p["bo"][0]
    x = x + attn
    h = _ref_layernorm(x, p["ln2_g"][0], p["ln2_b"][0])
    h = jax.nn.gelu(h @ p["w1"] + p["b1"][0], approximate=False)
    h = h @ p["w2"] + p["b2"][0]
    return x + h


def _ref_cross_layer(queries, x, p, num_heads):
    D = x.shape[-1]
    scale = (D // num_heads) ** -0.5
    kv = _ref_layernorm(x, p["ln1_g"][0], p["ln1_b"][0])
    q = queries @ p["wq"] + p["bq"][0]
    k = kv @ p["wk"] + p["bk"][0]
    v = kv @ p["wv"] + p["bv"][0]
    h = queries + _ref_mha(q, k, v, num_heads, scale)
    h2 = _ref_layernorm(h, p["ln1_g"][0], p["ln1_b"][0])
    m = jax.nn.gelu(h2 @ p["w1"] + p["b1"][0], approximate=False)
    m = m @ p["w2"] + p["b2"][0]
    return h + m


def reference_forward(hidden_state, params, num_heads):
    x = hidden_state
    for lp in params["self_layers"]:
        x = _ref_self_layer(x, lp, num_heads)
    B = x.shape[0]
    queries = jnp.tile(params["query_tokens"], (B, 1, 1))
    out = _ref_cross_layer(queries, x, params["cross_layer"], num_heads)
    return out[:, 0, :]


# ---------------------------------------------------------------------------
if __name__ == "__main__":
    B, S, D = 2, 8, 32            # batch, tokens, hidden_size
    num_heads = 4                 # config.num_attention_heads
    num_pooler_layers = 2         # config.num_pooler_layers
    mlp_hidden = int(D * 4.0)     # mlp_ratio = 4.0

    key = jax.random.PRNGKey(0)
    kx, kp = jax.random.split(key)
    hidden_state = jax.random.normal(kx, (B, S, D), jnp.float32)
    params = init_params(kp, D, mlp_hidden, num_pooler_layers)

    ref = reference_forward(hidden_state, params, num_heads)

    # f32 compute path: tight check against the pure-JAX reference.
    pf32 = prepare_params(params, num_heads, jnp.float32)
    out_f32 = attentive_pooler_forward(hidden_state, pf32, num_heads, jnp.float32)
    out_f32 = jax.block_until_ready(out_f32)
    assert out_f32.shape == (B, D)
    np.testing.assert_allclose(np.asarray(out_f32), np.asarray(ref), rtol=1e-3, atol=1e-3)

    # bf16 compute path (default fast path): looser tolerance vs the f32 reference.
    pbf16 = prepare_params(params, num_heads, jnp.bfloat16)
    out_bf16 = attentive_pooler_forward(hidden_state, pbf16, num_heads, jnp.bfloat16)
    out_bf16 = jax.block_until_ready(out_bf16)
    assert out_bf16.shape == (B, D)
    np.testing.assert_allclose(np.asarray(out_bf16), np.asarray(ref), rtol=3e-2, atol=3e-2)

    print("KERNEL_OK")
</pallas_src>

<mosaic_0001>
module attributes {stable_mosaic.version = 11 : i64} {
  func.func @_attn_outproj_kernel(%arg0: i32, %arg1: memref<1x8x96xf32, #tpu.memory_space<vmem>>, %arg2: memref<32x32xf32, #tpu.memory_space<vmem>>, %arg3: memref<1x32xf32, #tpu.memory_space<vmem>>, %arg4: memref<1x8x32xf32, #tpu.memory_space<vmem>>) attributes {dimension_semantics = [#tpu.dimension_semantics<parallel>], iteration_bounds = array<i64: 2>, scalar_prefetch = 0 : i64, scratch_operands = 0 : i64, tpu.core_type = #tpu.core_type<tc>, window_params = [{transform_indices = @transform_0, window_bounds = array<i64: 1, 8, 96>}, {pipeline_mode = #tpu.pipeline_mode<synchronous>, transform_indices = @transform_1, window_bounds = array<i64: 32, 32>}, {pipeline_mode = #tpu.pipeline_mode<synchronous>, transform_indices = @transform_2, window_bounds = array<i64: 1, 32>}, {transform_indices = @transform_3, window_bounds = array<i64: 1, 8, 32>}]} {
    %c0 = arith.constant 0 : index
    %c0_0 = arith.constant 0 : index
    %c0_1 = arith.constant 0 : index
    %0 = vector.load %arg1[%c0, %c0_0, %c0_1] : memref<1x8x96xf32, #tpu.memory_space<vmem>>, vector<1x8x96xf32>
    %1 = vector.shape_cast %0 : vector<1x8x96xf32> to vector<8x96xf32>
    %cst = arith.constant 0.000000e+00 : f32
    %2 = vector.broadcast %cst : f32 to vector<8x32xf32>
    %3 = vector.extract_strided_slice %1 {offsets = [0, 0], sizes = [8, 8], strides = [1, 1]} : vector<8x96xf32> to vector<8x8xf32>
    %4 = vector.extract_strided_slice %1 {offsets = [0, 32], sizes = [8, 8], strides = [1, 1]} : vector<8x96xf32> to vector<8x8xf32>
    %5 = vector.extract_strided_slice %1 {offsets = [0, 64], sizes = [8, 8], strides = [1, 1]} : vector<8x96xf32> to vector<8x8xf32>
    %6 = tpu.transpose %4, [1, 0] : vector<8x8xf32> -> vector<8x8xf32>
    %cst_2 = arith.constant dense<0.000000e+00> : vector<8x8xf32>
    %7 = tpu.matmul %3, %6, %cst_2 {dimension_numbers = #tpu.dot_dimension_numbers<[1], [0], [0], [1], [0, 0, 1, 1], [], []>} : vector<8x8xf32>, vector<8x8xf32>, vector<8x8xf32> -> vector<8x8xf32>
    %cst_3 = arith.constant 0.353553385 : f32
    %8 = vector.broadcast %cst_3 : f32 to vector<8x8xf32>
    %9 = arith.mulf %7, %8 : vector<8x8xf32>
    %cst_4 = arith.constant dense<0xFF800000> : vector<8xf32>
    %10 = vector.multi_reduction <maximumf>, %9, %cst_4 [1] : vector<8x8xf32> to vector<8xf32>
    %11 = vector.shape_cast %10 : vector<8xf32> to vector<8x1xf32>
    %12 = vector.broadcast %11 : vector<8x1xf32> to vector<8x8xf32>
    %13 = arith.subf %9, %12 : vector<8x8xf32>
    %14 = math.exp %13 : vector<8x8xf32>
    %cst_5 = arith.constant dense<0.000000e+00> : vector<8xf32>
    %15 = vector.multi_reduction <add>, %14, %cst_5 [1] : vector<8x8xf32> to vector<8xf32>
    %16 = vector.shape_cast %15 : vector<8xf32> to vector<8x1xf32>
    %cst_6 = arith.constant 1.000000e+00 : f32
    %17 = vector.broadcast %cst_6 : f32 to vector<8x1xf32>
    %18 = arith.divf %17, %16 : vector<8x1xf32>
    %19 = vector.broadcast %18 : vector<8x1xf32> to vector<8x8xf32>
    %20 = arith.mulf %14, %19 : vector<8x8xf32>
    %cst_7 = arith.constant dense<0.000000e+00> : vector<8x8xf32>
    %21 = tpu.matmul %20, %5, %cst_7 {dimension_numbers = #tpu.dot_dimension_numbers<[1], [0], [0], [1], [0, 0, 1, 1], [], []>} : vector<8x8xf32>, vector<8x8xf32>, vector<8x8xf32> -> vector<8x8xf32>
    %c0_8 = arith.constant 0 : index
    %c0_9 = arith.constant 0 : index
    %22 = vector.load %arg2[%c0_8, %c0_9] : memref<32x32xf32, #tpu.memory_space<vmem>>, vector<8x32xf32>
    %cst_10 = arith.constant dense<0.000000e+00> : vector<8x32xf32>
    %23 = tpu.matmul %21, %22, %cst_10 {dimension_numbers = #tpu.dot_dimension_numbers<[1], [0], [0], [1], [0, 0, 1, 1], [], []>} : vector<8x8xf32>, vector<8x32xf32>, vector<8x32xf32> -> vector<8x32xf32>
    %24 = arith.addf %2, %23 : vector<8x32xf32>
    %25 = vector.extract_strided_slice %1 {offsets = [0, 8], sizes = [8, 8], strides = [1, 1]} : vector<8x96xf32> to vector<8x8xf32>
    %26 = vector.extract_strided_slice %1 {offsets = [0, 40], sizes = [8, 8], strides = [1, 1]} : vector<8x96xf32> to vector<8x8xf32>
    %27 = vector.extract_strided_slice %1 {offsets = [0, 72], sizes = [8, 8], strides = [1, 1]} : vector<8x96xf32> to vector<8x8xf32>
    %28 = tpu.transpose %26, [1, 0] : vector<8x8xf32> -> vector<8x8xf32>
    %cst_11 = arith.constant dense<0.000000e+00> : vector<8x8xf32>
    %29 = tpu.matmul %25, %28, %cst_11 {dimension_numbers = #tpu.dot_dimension_numbers<[1], [0], [0], [1], [0, 0, 1, 1], [], []>} : vector<8x8xf32>, vector<8x8xf32>, vector<8x8xf32> -> vector<8x8xf32>
    %cst_12 = arith.constant 0.353553385 : f32
    %30 = vector.broadcast %cst_12 : f32 to vector<8x8xf32>
    %31 = arith.mulf %29, %30 : vector<8x8xf32>
    %cst_13 = arith.constant dense<0xFF800000> : vector<8xf32>
    %32 = vector.multi_reduction <maximumf>, %31, %cst_13 [1] : vector<8x8xf32> to vector<8xf32>
    %33 = vector.shape_cast %32 : vector<8xf32> to vector<8x1xf32>
    %34 = vector.broadcast %33 : vector<8x1xf32> to vector<8x8xf32>
    %35 = arith.subf %31, %34 : vector<8x8xf32>
    %36 = math.exp %35 : vector<8x8xf32>
    %cst_14 = arith.constant dense<0.000000e+00> : vector<8xf32>
    %37 = vector.multi_reduction <add>, %36, %cst_14 [1] : vector<8x8xf32> to vector<8xf32>
    %38 = vector.shape_cast %37 : vector<8xf32> to vector<8x1xf32>
    %cst_15 = arith.constant 1.000000e+00 : f32
    %39 = vector.broadcast %cst_15 : f32 to vector<8x1xf32>
    %40 = arith.divf %39, %38 : vector<8x1xf32>
    %41 = vector.broadcast %40 : vector<8x1xf32> to vector<8x8xf32>
    %42 = arith.mulf %36, %41 : vector<8x8xf32>
    %cst_16 = arith.constant dense<0.000000e+00> : vector<8x8xf32>
    %43 = tpu.matmul %42, %27, %cst_16 {dimension_numbers = #tpu.dot_dimension_numbers<[1], [0], [0], [1], [0, 0, 1, 1], [], []>} : vector<8x8xf32>, vector<8x8xf32>, vector<8x8xf32> -> vector<8x8xf32>
    %c8 = arith.constant 8 : index
    %c0_17 = arith.constant 0 : index
    %44 = vector.load %arg2[%c8, %c0_17] : memref<32x32xf32, #tpu.memory_space<vmem>>, vector<8x32xf32>
    %cst_18 = arith.constant dense<0.000000e+00> : vector<8x32xf32>
    %45 = tpu.matmul %43, %44, %cst_18 {dimension_numbers = #tpu.dot_dimension_numbers<[1], [0], [0], [1], [0, 0, 1, 1], [], []>} : vector<8x8xf32>, vector<8x32xf32>, vector<8x32xf32> -> vector<8x32xf32>
    %46 = arith.addf %24, %45 : vector<8x32xf32>
    %47 = vector.extract_strided_slice %1 {offsets = [0, 16], sizes = [8, 8], strides = [1, 1]} : vector<8x96xf32> to vector<8x8xf32>
    %48 = vector.extract_strided_slice %1 {offsets = [0, 48], sizes = [8, 8], strides = [1, 1]} : vector<8x96xf32> to vector<8x8xf32>
    %49 = vector.extract_strided_slice %1 {offsets = [0, 80], sizes = [8, 8], strides = [1, 1]} : vector<8x96xf32> to vector<8x8xf32>
    %50 = tpu.transpose %48, [1, 0] : vector<8x8xf32> -> vector<8x8xf32>
    %cst_19 = arith.constant dense<0.000000e+00> : vector<8x8xf32>
    %51 = tpu.matmul %47, %50, %cst_19 {dimension_numbers = #tpu.dot_dimension_numbers<[1], [0], [0], [1], [0, 0, 1, 1], [], []>} : vector<8x8xf32>, vector<8x8xf32>, vector<8x8xf32> -> vector<8x8xf32>
    %cst_20 = arith.constant 0.353553385 : f32
    %52 = vector.broadcast %cst_20 : f32 to vector<8x8xf32>
    %53 = arith.mulf %51, %52 : vector<8x8xf32>
    %cst_21 = arith.constant dense<0xFF800000> : vector<8xf32>
    %54 = vector.multi_reduction <maximumf>, %53, %cst_21 [1] : vector<8x8xf32> to vector<8xf32>
    %55 = vector.shape_cast %54 : vector<8xf32> to vector<8x1xf32>
    %56 = vector.broadcast %55 : vector<8x1xf32> to vector<8x8xf32>
    %57 = arith.subf %53, %56 : vector<8x8xf32>
    %58 = math.exp %57 : vector<8x8xf32>
    %cst_22 = arith.constant dense<0.000000e+00> : vector<8xf32>
    %59 = vector.multi_reduction <add>, %58, %cst_22 [1] : vector<8x8xf32> to vector<8xf32>
    %60 = vector.shape_cast %59 : vector<8xf32> to vector<8x1xf32>
    %cst_23 = arith.constant 1.000000e+00 : f32
    %61 = vector.broadcast %cst_23 : f32 to vector<8x1xf32>
    %62 = arith.divf %61, %60 : vector<8x1xf32>
    %63 = vector.broadcast %62 : vector<8x1xf32> to vector<8x8xf32>
    %64 = arith.mulf %58, %63 : vector<8x8xf32>
    %cst_24 = arith.constant dense<0.000000e+00> : vector<8x8xf32>
    %65 = tpu.matmul %64, %49, %cst_24 {dimension_numbers = #tpu.dot_dimension_numbers<[1], [0], [0], [1], [0, 0, 1, 1], [], []>} : vector<8x8xf32>, vector<8x8xf32>, vector<8x8xf32> -> vector<8x8xf32>
    %c16 = arith.constant 16 : index
    %c0_25 = arith.constant 0 : index
    %66 = vector.load %arg2[%c16, %c0_25] : memref<32x32xf32, #tpu.memory_space<vmem>>, vector<8x32xf32>
    %cst_26 = arith.constant dense<0.000000e+00> : vector<8x32xf32>
    %67 = tpu.matmul %65, %66, %cst_26 {dimension_numbers = #tpu.dot_dimension_numbers<[1], [0], [0], [1], [0, 0, 1, 1], [], []>} : vector<8x8xf32>, vector<8x32xf32>, vector<8x32xf32> -> vector<8x32xf32>
    %68 = arith.addf %46, %67 : vector<8x32xf32>
    %69 = vector.extract_strided_slice %1 {offsets = [0, 24], sizes = [8, 8], strides = [1, 1]} : vector<8x96xf32> to vector<8x8xf32>
    %70 = vector.extract_strided_slice %1 {offsets = [0, 56], sizes = [8, 8], strides = [1, 1]} : vector<8x96xf32> to vector<8x8xf32>
    %71 = vector.extract_strided_slice %1 {offsets = [0, 88], sizes = [8, 8], strides = [1, 1]} : vector<8x96xf32> to vector<8x8xf32>
    %72 = tpu.transpose %70, [1, 0] : vector<8x8xf32> -> vector<8x8xf32>
    %cst_27 = arith.constant dense<0.000000e+00> : vector<8x8xf32>
    %73 = tpu.matmul %69, %72, %cst_27 {dimension_numbers = #tpu.dot_dimension_numbers<[1], [0], [0], [1], [0, 0, 1, 1], [], []>} : vector<8x8xf32>, vector<8x8xf32>, vector<8x8xf32> -> vector<8x8xf32>
    %cst_28 = arith.constant 0.353553385 : f32
    %74 = vector.broadcast %cst_28 : f32 to vector<8x8xf32>
    %75 = arith.mulf %73, %74 : vector<8x8xf32>
    %cst_29 = arith.constant dense<0xFF800000> : vector<8xf32>
    %76 = vector.multi_reduction <maximumf>, %75, %cst_29 [1] : vector<8x8xf32> to vector<8xf32>
    %77 = vector.shape_cast %76 : vector<8xf32> to vector<8x1xf32>
    %78 = vector.broadcast %77 : vector<8x1xf32> to vector<8x8xf32>
    %79 = arith.subf %75, %78 : vector<8x8xf32>
    %80 = math.exp %79 : vector<8x8xf32>
    %cst_30 = arith.constant dense<0.000000e+00> : vector<8xf32>
    %81 = vector.multi_reduction <add>, %80, %cst_30 [1] : vector<8x8xf32> to vector<8xf32>
    %82 = vector.shape_cast %81 : vector<8xf32> to vector<8x1xf32>
    %cst_31 = arith.constant 1.000000e+00 : f32
    %83 = vector.broadcast %cst_31 : f32 to vector<8x1xf32>
    %84 = arith.divf %83, %82 : vector<8x1xf32>
    %85 = vector.broadcast %84 : vector<8x1xf32> to vector<8x8xf32>
    %86 = arith.mulf %80, %85 : vector<8x8xf32>
    %cst_32 = arith.constant dense<0.000000e+00> : vector<8x8xf32>
    %87 = tpu.matmul %86, %71, %cst_32 {dimension_numbers = #tpu.dot_dimension_numbers<[1], [0], [0], [1], [0, 0, 1, 1], [], []>} : vector<8x8xf32>, vector<8x8xf32>, vector<8x8xf32> -> vector<8x8xf32>
    %c24 = arith.constant 24 : index
    %c0_33 = arith.constant 0 : index
    %88 = vector.load %arg2[%c24, %c0_33] : memref<32x32xf32, #tpu.memory_space<vmem>>, vector<8x32xf32>
    %cst_34 = arith.constant dense<0.000000e+00> : vector<8x32xf32>
    %89 = tpu.matmul %87, %88, %cst_34 {dimension_numbers = #tpu.dot_dimension_numbers<[1], [0], [0], [1], [0, 0, 1, 1], [], []>} : vector<8x8xf32>, vector<8x32xf32>, vector<8x32xf32> -> vector<8x32xf32>
    %90 = arith.addf %68, %89 : vector<8x32xf32>
    %c0_35 = arith.constant 0 : index
    %c0_36 = arith.constant 0 : index
    %91 = vector.load %arg3[%c0_35, %c0_36] : memref<1x32xf32, #tpu.memory_space<vmem>>, vector<1x32xf32>
    %92 = vector.broadcast %91 : vector<1x32xf32> to vector<8x32xf32>
    %93 = arith.addf %90, %92 : vector<8x32xf32>
    %c0_37 = arith.constant 0 : index
    %c0_38 = arith.constant 0 : index
    %c0_39 = arith.constant 0 : index
    %94 = vector.load %arg4[%c0_37, %c0_38, %c0_39] : memref<1x8x32xf32, #tpu.memory_space<vmem>>, vector<1x8x32xf32>
    %95 = vector.shape_cast %94 : vector<1x8x32xf32> to vector<8x32xf32>
    %96 = vector.shape_cast %93 : vector<8x32xf32> to vector<1x8x32xf32>
    tpu.vector_store %arg4[%c0_37, %c0_38, %c0_39], %96 {strides = array<i32>} : memref<1x8x32xf32, #tpu.memory_space<vmem>>, vector<1x8x32xf32>,
    return
  }
  func.func @transform_0(%arg0: i32) -> (i32, i32, i32) {
    %c0_i32 = arith.constant 0 : i32
    %c0_i32_0 = arith.constant 0 : i32
    %c0_i32_1 = arith.constant 0 : i32
    return %arg0, %c0_i32, %c0_i32_0 : i32, i32, i32
  }
  func.func @transform_1(%arg0: i32) -> (i32, i32) {
    %c0_i32 = arith.constant 0 : i32
    %c0_i32_0 = arith.constant 0 : i32
    %c0_i32_1 = arith.constant 0 : i32
    return %c0_i32, %c0_i32_0 : i32, i32
  }
  func.func @transform_2(%arg0: i32) -> (i32, i32) {
    %c0_i32 = arith.constant 0 : i32
    %c0_i32_0 = arith.constant 0 : i32
    %c0_i32_1 = arith.constant 0 : i32
    return %c0_i32, %c0_i32_0 : i32, i32
  }
  func.func @transform_3(%arg0: i32) -> (i32, i32, i32) {
    %c0_i32 = arith.constant 0 : i32
    %c0_i32_0 = arith.constant 0 : i32
    %c0_i32_1 = arith.constant 0 : i32
    return %arg0, %c0_i32, %c0_i32_0 : i32, i32, i32
  }
}

module attributes {stable_mosaic.version = 11 : i64} {
  func.func @_ln_qkv_kernel(%arg0: i32, %arg1: memref<1x8x32xf32, #tpu.memory_space<vmem>>, %arg2: memref<1x32xf32, #tpu.memory_space<vmem>>, %arg3: memref<1x32xf32, #tpu.memory_space<vmem>>, %arg4: memref<32x96xf32, #tpu.memory_space<vmem>>, %arg5: memref<1x96xf32, #tpu.memory_space<vmem>>, %arg6: memref<1x8x96xf32, #tpu.memory_space<vmem>>) attributes {dimension_semantics = [#tpu.dimension_semantics<parallel>], iteration_bounds = array<i64: 2>, scalar_prefetch = 0 : i64, scratch_operands = 0 : i64, tpu.core_type = #tpu.core_type<tc>, window_params = [{transform_indices = @transform_0, window_bounds = array<i64: 1, 8, 32>}, {pipeline_mode = #tpu.pipeline_mode<synchronous>, transform_indices = @transform_1, window_bounds = array<i64: 1, 32>}, {pipeline_mode = #tpu.pipeline_mode<synchronous>, transform_indices = @transform_2, window_bounds = array<i64: 1, 32>}, {pipeline_mode = #tpu.pipeline_mode<synchronous>, transform_indices = @transform_3, window_bounds = array<i64: 32, 96>}, {pipeline_mode = #tpu.pipeline_mode<synchronous>, transform_indices = @transform_4, window_bounds = array<i64: 1, 96>}, {transform_indices = @transform_5, window_bounds = array<i64: 1, 8, 96>}]} {
    %c0 = arith.constant 0 : index
    %c0_0 = arith.constant 0 : index
    %c0_1 = arith.constant 0 : index
    %0 = vector.load %arg1[%c0, %c0_0, %c0_1] : memref<1x8x32xf32, #tpu.memory_space<vmem>>, vector<1x8x32xf32>
    %1 = vector.shape_cast %0 : vector<1x8x32xf32> to vector<8x32xf32>
    %c0_2 = arith.constant 0 : index
    %c0_3 = arith.constant 0 : index
    %2 = vector.load %arg2[%c0_2, %c0_3] : memref<1x32xf32, #tpu.memory_space<vmem>>, vector<1x32xf32>
    %c0_4 = arith.constant 0 : index
    %c0_5 = arith.constant 0 : index
    %3 = vector.load %arg3[%c0_4, %c0_5] : memref<1x32xf32, #tpu.memory_space<vmem>>, vector<1x32xf32>
    %cst = arith.constant dense<0.000000e+00> : vector<8xf32>
    %4 = vector.multi_reduction <add>, %1, %cst [1] : vector<8x32xf32> to vector<8xf32>
    %5 = vector.shape_cast %4 : vector<8xf32> to vector<8x1xf32>
    %cst_6 = arith.constant 3.200000e+01 : f32
    %6 = vector.broadcast %cst_6 : f32 to vector<8x1xf32>
    %7 = arith.divf %5, %6 : vector<8x1xf32>
    %8 = vector.broadcast %7 : vector<8x1xf32> to vector<8x32xf32>
    %9 = arith.subf %1, %8 : vector<8x32xf32>
    %10 = arith.mulf %9, %9 : vector<8x32xf32>
    %cst_7 = arith.constant dense<0.000000e+00> : vector<8xf32>
    %11 = vector.multi_reduction <add>, %10, %cst_7 [1] : vector<8x32xf32> to vector<8xf32>
    %12 = vector.shape_cast %11 : vector<8xf32> to vector<8x1xf32>
    %cst_8 = arith.constant 3.200000e+01 : f32
    %13 = vector.broadcast %cst_8 : f32 to vector<8x1xf32>
    %14 = arith.divf %12, %13 : vector<8x1xf32>
    %15 = vector.broadcast %7 : vector<8x1xf32> to vector<8x32xf32>
    %16 = arith.subf %1, %15 : vector<8x32xf32>
    %cst_9 = arith.constant 9.99999997E-7 : f32
    %17 = vector.broadcast %cst_9 : f32 to vector<8x1xf32>
    %18 = arith.addf %14, %17 : vector<8x1xf32>
    %19 = math.rsqrt %18 : vector<8x1xf32>
    %20 = vector.broadcast %19 : vector<8x1xf32> to vector<8x32xf32>
    %21 = arith.mulf %16, %20 : vector<8x32xf32>
    %22 = vector.broadcast %2 : vector<1x32xf32> to vector<8x32xf32>
    %23 = arith.mulf %21, %22 : vector<8x32xf32>
    %24 = vector.broadcast %3 : vector<1x32xf32> to vector<8x32xf32>
    %25 = arith.addf %23, %24 : vector<8x32xf32>
    %c0_10 = arith.constant 0 : index
    %c0_11 = arith.constant 0 : index
    %26 = vector.load %arg4[%c0_10, %c0_11] : memref<32x96xf32, #tpu.memory_space<vmem>>, vector<32x96xf32>
    %cst_12 = arith.constant dense<0.000000e+00> : vector<8x96xf32>
    %27 = tpu.matmul %25, %26, %cst_12 {dimension_numbers = #tpu.dot_dimension_numbers<[1], [0], [0], [1], [0, 0, 1, 1], [], []>} : vector<8x32xf32>, vector<32x96xf32>, vector<8x96xf32> -> vector<8x96xf32>
    %c0_13 = arith.constant 0 : index
    %c0_14 = arith.constant 0 : index
    %28 = vector.load %arg5[%c0_13, %c0_14] : memref<1x96xf32, #tpu.memory_space<vmem>>, vector<1x96xf32>
    %29 = vector.broadcast %28 : vector<1x96xf32> to vector<8x96xf32>
    %30 = arith.addf %27, %29 : vector<8x96xf32>
    %c0_15 = arith.constant 0 : index
    %c0_16 = arith.constant 0 : index
    %c0_17 = arith.constant 0 : index
    %31 = vector.load %arg6[%c0_15, %c0_16, %c0_17] : memref<1x8x96xf32, #tpu.memory_space<vmem>>, vector<1x8x96xf32>
    %32 = vector.shape_cast %31 : vector<1x8x96xf32> to vector<8x96xf32>
    %33 = vector.shape_cast %30 : vector<8x96xf32> to vector<1x8x96xf32>
    tpu.vector_store %arg6[%c0_15, %c0_16, %c0_17], %33 {strides = array<i32>} : memref<1x8x96xf32, #tpu.memory_space<vmem>>, vector<1x8x96xf32>,
    return
  }
  func.func @transform_0(%arg0: i32) -> (i32, i32, i32) {
    %c0_i32 = arith.constant 0 : i32
    %c0_i32_0 = arith.constant 0 : i32
    %c0_i32_1 = arith.constant 0 : i32
    return %arg0, %c0_i32, %c0_i32_0 : i32, i32, i32
  }
  func.func @transform_1(%arg0: i32) -> (i32, i32) {
    %c0_i32 = arith.constant 0 : i32
    %c0_i32_0 = arith.constant 0 : i32
    %c0_i32_1 = arith.constant 0 : i32
    return %c0_i32, %c0_i32_0 : i32, i32
  }
  func.func @transform_2(%arg0: i32) -> (i32, i32) {
    %c0_i32 = arith.constant 0 : i32
    %c0_i32_0 = arith.constant 0 : i32
    %c0_i32_1 = arith.constant 0 : i32
    return %c0_i32, %c0_i32_0 : i32, i32
  }
  func.func @transform_3(%arg0: i32) -> (i32, i32) {
    %c0_i32 = arith.constant 0 : i32
    %c0_i32_0 = arith.constant 0 : i32
    %c0_i32_1 = arith.constant 0 : i32
    return %c0_i32, %c0_i32_0 : i32, i32
  }
  func.func @transform_4(%arg0: i32) -> (i32, i32) {
    %c0_i32 = arith.constant 0 : i32
    %c0_i32_0 = arith.constant 0 : i32
    %c0_i32_1 = arith.constant 0 : i32
    return %c0_i32, %c0_i32_0 : i32, i32
  }
  func.func @transform_5(%arg0: i32) -> (i32, i32, i32) {
    %c0_i32 = arith.constant 0 : i32
    %c0_i32_0 = arith.constant 0 : i32
    %c0_i32_1 = arith.constant 0 : i32
    return %arg0, %c0_i32, %c0_i32_0 : i32, i32, i32
  }
}

module attributes {stable_mosaic.version = 11 : i64} {
  func.func @_mlp_kernel(%arg0: i32, %arg1: memref<1x8x32xf32, #tpu.memory_space<vmem>>, %arg2: memref<1x8x32xf32, #tpu.memory_space<vmem>>, %arg3: memref<1x32xf32, #tpu.memory_space<vmem>>, %arg4: memref<1x32xf32, #tpu.memory_space<vmem>>, %arg5: memref<32x128xf32, #tpu.memory_space<vmem>>, %arg6: memref<1x128xf32, #tpu.memory_space<vmem>>, %arg7: memref<128x32xf32, #tpu.memory_space<vmem>>, %arg8: memref<1x32xf32, #tpu.memory_space<vmem>>, %arg9: memref<1x8x32xf32, #tpu.memory_space<vmem>>) attributes {dimension_semantics = [#tpu.dimension_semantics<parallel>], iteration_bounds = array<i64: 2>, scalar_prefetch = 0 : i64, scratch_operands = 0 : i64, tpu.core_type = #tpu.core_type<tc>, window_params = [{transform_indices = @transform_0, window_bounds = array<i64: 1, 8, 32>}, {transform_indices = @transform_1, window_bounds = array<i64: 1, 8, 32>}, {pipeline_mode = #tpu.pipeline_mode<synchronous>, transform_indices = @transform_2, window_bounds = array<i64: 1, 32>}, {pipeline_mode = #tpu.pipeline_mode<synchronous>, transform_indices = @transform_3, window_bounds = array<i64: 1, 32>}, {pipeline_mode = #tpu.pipeline_mode<synchronous>, transform_indices = @transform_4, window_bounds = array<i64: 32, 128>}, {pipeline_mode = #tpu.pipeline_mode<synchronous>, transform_indices = @transform_5, window_bounds = array<i64: 1, 128>}, {pipeline_mode = #tpu.pipeline_mode<synchronous>, transform_indices = @transform_6, window_bounds = array<i64: 128, 32>}, {pipeline_mode = #tpu.pipeline_mode<synchronous>, transform_indices = @transform_7, window_bounds = array<i64: 1, 32>}, {transform_indices = @transform_8, window_bounds = array<i64: 1, 8, 32>}]} {
    %c0 = arith.constant 0 : index
    %c0_0 = arith.constant 0 : index
    %c0_1 = arith.constant 0 : index
    %0 = vector.load %arg1[%c0, %c0_0, %c0_1] : memref<1x8x32xf32, #tpu.memory_space<vmem>>, vector<1x8x32xf32>
    %1 = vector.shape_cast %0 : vector<1x8x32xf32> to vector<8x32xf32>
    %c0_2 = arith.constant 0 : index
    %c0_3 = arith.constant 0 : index
    %c0_4 = arith.constant 0 : index
    %2 = vector.load %arg2[%c0_2, %c0_3, %c0_4] : memref<1x8x32xf32, #tpu.memory_space<vmem>>, vector<1x8x32xf32>
    %3 = vector.shape_cast %2 : vector<1x8x32xf32> to vector<8x32xf32>
    %4 = arith.addf %1, %3 : vector<8x32xf32>
    %c0_5 = arith.constant 0 : index
    %c0_6 = arith.constant 0 : index
    %5 = vector.load %arg3[%c0_5, %c0_6] : memref<1x32xf32, #tpu.memory_space<vmem>>, vector<1x32xf32>
    %c0_7 = arith.constant 0 : index
    %c0_8 = arith.constant 0 : index
    %6 = vector.load %arg4[%c0_7, %c0_8] : memref<1x32xf32, #tpu.memory_space<vmem>>, vector<1x32xf32>
    %cst = arith.constant dense<0.000000e+00> : vector<8xf32>
    %7 = vector.multi_reduction <add>, %4, %cst [1] : vector<8x32xf32> to vector<8xf32>
    %8 = vector.shape_cast %7 : vector<8xf32> to vector<8x1xf32>
    %cst_9 = arith.constant 3.200000e+01 : f32
    %9 = vector.broadcast %cst_9 : f32 to vector<8x1xf32>
    %10 = arith.divf %8, %9 : vector<8x1xf32>
    %11 = vector.broadcast %10 : vector<8x1xf32> to vector<8x32xf32>
    %12 = arith.subf %4, %11 : vector<8x32xf32>
    %13 = arith.mulf %12, %12 : vector<8x32xf32>
    %cst_10 = arith.constant dense<0.000000e+00> : vector<8xf32>
    %14 = vector.multi_reduction <add>, %13, %cst_10 [1] : vector<8x32xf32> to vector<8xf32>
    %15 = vector.shape_cast %14 : vector<8xf32> to vector<8x1xf32>
    %cst_11 = arith.constant 3.200000e+01 : f32
    %16 = vector.broadcast %cst_11 : f32 to vector<8x1xf32>
    %17 = arith.divf %15, %16 : vector<8x1xf32>
    %18 = vector.broadcast %10 : vector<8x1xf32> to vector<8x32xf32>
    %19 = arith.subf %4, %18 : vector<8x32xf32>
    %cst_12 = arith.constant 9.99999997E-7 : f32
    %20 = vector.broadcast %cst_12 : f32 to vector<8x1xf32>
    %21 = arith.addf %17, %20 : vector<8x1xf32>
    %22 = math.rsqrt %21 : vector<8x1xf32>
    %23 = vector.broadcast %22 : vector<8x1xf32> to vector<8x32xf32>
    %24 = arith.mulf %19, %23 : vector<8x32xf32>
    %25 = vector.broadcast %5 : vector<1x32xf32> to vector<8x32xf32>
    %26 = arith.mulf %24, %25 : vector<8x32xf32>
    %27 = vector.broadcast %6 : vector<1x32xf32> to vector<8x32xf32>
    %28 = arith.addf %26, %27 : vector<8x32xf32>
    %c0_13 = arith.constant 0 : index
    %c0_14 = arith.constant 0 : index
    %29 = vector.load %arg5[%c0_13, %c0_14] : memref<32x128xf32, #tpu.memory_space<vmem>>, vector<32x128xf32>
    %cst_15 = arith.constant dense<0.000000e+00> : vector<8x128xf32>
    %30 = tpu.matmul %28, %29, %cst_15 {dimension_numbers = #tpu.dot_dimension_numbers<[1], [0], [0], [1], [0, 0, 1, 1], [], []>} : vector<8x32xf32>, vector<32x128xf32>, vector<8x128xf32> -> vector<8x128xf32>
    %c0_16 = arith.constant 0 : index
    %c0_17 = arith.constant 0 : index
    %31 = vector.load %arg6[%c0_16, %c0_17] : memref<1x128xf32, #tpu.memory_space<vmem>>, vector<1x128xf32>
    %32 = vector.broadcast %31 : vector<1x128xf32> to vector<8x128xf32>
    %33 = arith.addf %30, %32 : vector<8x128xf32>
    %cst_18 = arith.constant 5.000000e-01 : f32
    %34 = vector.broadcast %cst_18 : f32 to vector<8x128xf32>
    %35 = arith.mulf %34, %33 : vector<8x128xf32>
    %cst_19 = arith.constant 0.707106769 : f32
    %36 = vector.broadcast %cst_19 : f32 to vector<8x128xf32>
    %37 = arith.mulf %33, %36 : vector<8x128xf32>
    %cst_20 = arith.constant 0.000000e+00 : f32
    %38 = vector.broadcast %cst_20 : f32 to vector<8x128xf32>
    %39 = arith.cmpf olt, %37, %38 : vector<8x128xf32>
    %cst_21 = arith.constant -1.000000e+00 : f32
    %cst_22 = arith.constant 1.000000e+00 : f32
    %40 = vector.broadcast %cst_21 : f32 to vector<8x128xf32>
    %41 = vector.broadcast %cst_22 : f32 to vector<8x128xf32>
    %42 = arith.select %39, %40, %41 : vector<8x128xi1>, vector<8x128xf32>
    %43 = math.absf %37 : vector<8x128xf32>
    %cst_23 = arith.constant 0.327591091 : f32
    %44 = vector.broadcast %cst_23 : f32 to vector<8x128xf32>
    %45 = arith.mulf %44, %43 : vector<8x128xf32>
    %cst_24 = arith.constant 1.000000e+00 : f32
    %46 = vector.broadcast %cst_24 : f32 to vector<8x128xf32>
    %47 = arith.addf %46, %45 : vector<8x128xf32>
    %cst_25 = arith.constant 1.000000e+00 : f32
    %48 = vector.broadcast %cst_25 : f32 to vector<8x128xf32>
    %49 = arith.divf %48, %47 : vector<8x128xf32>
    %cst_26 = arith.constant 1.06140542 : f32
    %50 = vector.broadcast %cst_26 : f32 to vector<8x128xf32>
    %51 = arith.mulf %50, %49 : vector<8x128xf32>
    %cst_27 = arith.constant -1.45315206 : f32
    %52 = vector.broadcast %cst_27 : f32 to vector<8x128xf32>
    %53 = arith.addf %51, %52 : vector<8x128xf32>
    %54 = arith.mulf %53, %49 : vector<8x128xf32>
    %cst_28 = arith.constant 1.42141378 : f32
    %55 = vector.broadcast %cst_28 : f32 to vector<8x128xf32>
    %56 = arith.addf %54, %55 : vector<8x128xf32>
    %57 = arith.mulf %56, %49 : vector<8x128xf32>
    %cst_29 = arith.constant -0.284496725 : f32
    %58 = vector.broadcast %cst_29 : f32 to vector<8x128xf32>
    %59 = arith.addf %57, %58 : vector<8x128xf32>
    %60 = arith.mulf %59, %49 : vector<8x128xf32>
    %cst_30 = arith.constant 0.254829586 : f32
    %61 = vector.broadcast %cst_30 : f32 to vector<8x128xf32>
    %62 = arith.addf %60, %61 : vector<8x128xf32>
    %63 = arith.mulf %62, %49 : vector<8x128xf32>
    %cst_31 = arith.constant 0.000000e+00 : f32
    %64 = vector.broadcast %cst_31 : f32 to vector<8x128xf32>
    %65 = arith.subf %64, %43 : vector<8x128xf32>
    %66 = arith.mulf %65, %43 : vector<8x128xf32>
    %67 = math.exp %66 : vector<8x128xf32>
    %68 = arith.mulf %63, %67 : vector<8x128xf32>
    %cst_32 = arith.constant 1.000000e+00 : f32
    %69 = vector.broadcast %cst_32 : f32 to vector<8x128xf32>
    %70 = arith.subf %69, %68 : vector<8x128xf32>
    %71 = arith.mulf %42, %70 : vector<8x128xf32>
    %cst_33 = arith.constant 1.000000e+00 : f32
    %72 = vector.broadcast %cst_33 : f32 to vector<8x128xf32>
    %73 = arith.addf %72, %71 : vector<8x128xf32>
    %74 = arith.mulf %35, %73 : vector<8x128xf32>
    %c0_34 = arith.constant 0 : index
    %c0_35 = arith.constant 0 : index
    %75 = vector.load %arg7[%c0_34, %c0_35] : memref<128x32xf32, #tpu.memory_space<vmem>>, vector<128x32xf32>
    %cst_36 = arith.constant dense<0.000000e+00> : vector<8x32xf32>
    %76 = tpu.matmul %74, %75, %cst_36 {dimension_numbers = #tpu.dot_dimension_numbers<[1], [0], [0], [1], [0, 0, 1, 1], [], []>} : vector<8x128xf32>, vector<128x32xf32>, vector<8x32xf32> -> vector<8x32xf32>
    %c0_37 = arith.constant 0 : index
    %c0_38 = arith.constant 0 : index
    %77 = vector.load %arg8[%c0_37, %c0_38] : memref<1x32xf32, #tpu.memory_space<vmem>>, vector<1x32xf32>
    %78 = vector.broadcast %77 : vector<1x32xf32> to vector<8x32xf32>
    %79 = arith.addf %76, %78 : vector<8x32xf32>
    %80 = arith.addf %4, %79 : vector<8x32xf32>
    %c0_39 = arith.constant 0 : index
    %c0_40 = arith.constant 0 : index
    %c0_41 = arith.constant 0 : index
    %81 = vector.load %arg9[%c0_39, %c0_40, %c0_41] : memref<1x8x32xf32, #tpu.memory_space<vmem>>, vector<1x8x32xf32>
    %82 = vector.shape_cast %81 : vector<1x8x32xf32> to vector<8x32xf32>
    %83 = vector.shape_cast %80 : vector<8x32xf32> to vector<1x8x32xf32>
    tpu.vector_store %arg9[%c0_39, %c0_40, %c0_41], %83 {strides = array<i32>} : memref<1x8x32xf32, #tpu.memory_space<vmem>>, vector<1x8x32xf32>,
    return
  }
  func.func @transform_0(%arg0: i32) -> (i32, i32, i32) {
    %c0_i32 = arith.constant 0 : i32
    %c0_i32_0 = arith.constant 0 : i32
    %c0_i32_1 = arith.constant 0 : i32
    return %arg0, %c0_i32, %c0_i32_0 : i32, i32, i32
  }
  func.func @transform_1(%arg0: i32) -> (i32, i32, i32) {
    %c0_i32 = arith.constant 0 : i32
    %c0_i32_0 = arith.constant 0 : i32
    %c0_i32_1 = arith.constant 0 : i32
    return %arg0, %c0_i32, %c0_i32_0 : i32, i32, i32
  }
  func.func @transform_2(%arg0: i32) -> (i32, i32) {
    %c0_i32 = arith.constant 0 : i32
    %c0_i32_0 = arith.constant 0 : i32
    %c0_i32_1 = arith.constant 0 : i32
    return %c0_i32, %c0_i32_0 : i32, i32
  }
  func.func @transform_3(%arg0: i32) -> (i32, i32) {
    %c0_i32 = arith.constant 0 : i32
    %c0_i32_0 = arith.constant 0 : i32
    %c0_i32_1 = arith.constant 0 : i32
    return %c0_i32, %c0_i32_0 : i32, i32
  }
  func.func @transform_4(%arg0: i32) -> (i32, i32) {
    %c0_i32 = arith.constant 0 : i32
    %c0_i32_0 = arith.constant 0 : i32
    %c0_i32_1 = arith.constant 0 : i32
    return %c0_i32, %c0_i32_0 : i32, i32
  }
  func.func @transform_5(%arg0: i32) -> (i32, i32) {
    %c0_i32 = arith.constant 0 : i32
    %c0_i32_0 = arith.constant 0 : i32
    %c0_i32_1 = arith.constant 0 : i32
    return %c0_i32, %c0_i32_0 : i32, i32
  }
  func.func @transform_6(%arg0: i32) -> (i32, i32) {
    %c0_i32 = arith.constant 0 : i32
    %c0_i32_0 = arith.constant 0 : i32
    %c0_i32_1 = arith.constant 0 : i32
    return %c0_i32, %c0_i32_0 : i32, i32
  }
  func.func @transform_7(%arg0: i32) -> (i32, i32) {
    %c0_i32 = arith.constant 0 : i32
    %c0_i32_0 = arith.constant 0 : i32
    %c0_i32_1 = arith.constant 0 : i32
    return %c0_i32, %c0_i32_0 : i32, i32
  }
  func.func @transform_8(%arg0: i32) -> (i32, i32, i32) {
    %c0_i32 = arith.constant 0 : i32
    %c0_i32_0 = arith.constant 0 : i32
    %c0_i32_1 = arith.constant 0 : i32
    return %arg0, %c0_i32, %c0_i32_0 : i32, i32, i32
  }
}

module attributes {stable_mosaic.version = 11 : i64} {
  func.func @_cross_attn_kernel(%arg0: i32, %arg1: memref<1x8x32xf32, #tpu.memory_space<vmem>>, %arg2: memref<1x32xf32, #tpu.memory_space<vmem>>, %arg3: memref<1x32xf32, #tpu.memory_space<vmem>>, %arg4: memref<32x64xf32, #tpu.memory_space<vmem>>, %arg5: memref<1x64xf32, #tpu.memory_space<vmem>>, %arg6: memref<1x32xf32, #tpu.memory_space<vmem>>, %arg7: memref<32x4xf32, #tpu.memory_space<vmem>>, %arg8: memref<4x32xf32, #tpu.memory_space<vmem>>, %arg9: memref<1x1x32xf32, #tpu.memory_space<vmem>>) attributes {dimension_semantics = [#tpu.dimension_semantics<parallel>], iteration_bounds = array<i64: 2>, scalar_prefetch = 0 : i64, scratch_operands = 0 : i64, tpu.core_type = #tpu.core_type<tc>, window_params = [{transform_indices = @transform_0, window_bounds = array<i64: 1, 8, 32>}, {pipeline_mode = #tpu.pipeline_mode<synchronous>, transform_indices = @transform_1, window_bounds = array<i64: 1, 32>}, {pipeline_mode = #tpu.pipeline_mode<synchronous>, transform_indices = @transform_2, window_bounds = array<i64: 1, 32>}, {pipeline_mode = #tpu.pipeline_mode<synchronous>, transform_indices = @transform_3, window_bounds = array<i64: 32, 64>}, {pipeline_mode = #tpu.pipeline_mode<synchronous>, transform_indices = @transform_4, window_bounds = array<i64: 1, 64>}, {pipeline_mode = #tpu.pipeline_mode<synchronous>, transform_indices = @transform_5, window_bounds = array<i64: 1, 32>}, {pipeline_mode = #tpu.pipeline_mode<synchronous>, transform_indices = @transform_6, window_bounds = array<i64: 32, 4>}, {pipeline_mode = #tpu.pipeline_mode<synchronous>, transform_indices = @transform_7, window_bounds = array<i64: 4, 32>}, {transform_indices = @transform_8, window_bounds = array<i64: 1, 1, 32>}]} {
    %c0 = arith.constant 0 : index
    %c0_0 = arith.constant 0 : index
    %c0_1 = arith.constant 0 : index
    %0 = vector.load %arg1[%c0, %c0_0, %c0_1] : memref<1x8x32xf32, #tpu.memory_space<vmem>>, vector<1x8x32xf32>
    %1 = vector.shape_cast %0 : vector<1x8x32xf32> to vector<8x32xf32>
    %c0_2 = arith.constant 0 : index
    %c0_3 = arith.constant 0 : index
    %2 = vector.load %arg2[%c0_2, %c0_3] : memref<1x32xf32, #tpu.memory_space<vmem>>, vector<1x32xf32>
    %c0_4 = arith.constant 0 : index
    %c0_5 = arith.constant 0 : index
    %3 = vector.load %arg3[%c0_4, %c0_5] : memref<1x32xf32, #tpu.memory_space<vmem>>, vector<1x32xf32>
    %cst = arith.constant dense<0.000000e+00> : vector<8xf32>
    %4 = vector.multi_reduction <add>, %1, %cst [1] : vector<8x32xf32> to vector<8xf32>
    %5 = vector.shape_cast %4 : vector<8xf32> to vector<8x1xf32>
    %cst_6 = arith.constant 3.200000e+01 : f32
    %6 = vector.broadcast %cst_6 : f32 to vector<8x1xf32>
    %7 = arith.divf %5, %6 : vector<8x1xf32>
    %8 = vector.broadcast %7 : vector<8x1xf32> to vector<8x32xf32>
    %9 = arith.subf %1, %8 : vector<8x32xf32>
    %10 = arith.mulf %9, %9 : vector<8x32xf32>
    %cst_7 = arith.constant dense<0.000000e+00> : vector<8xf32>
    %11 = vector.multi_reduction <add>, %10, %cst_7 [1] : vector<8x32xf32> to vector<8xf32>
    %12 = vector.shape_cast %11 : vector<8xf32> to vector<8x1xf32>
    %cst_8 = arith.constant 3.200000e+01 : f32
    %13 = vector.broadcast %cst_8 : f32 to vector<8x1xf32>
    %14 = arith.divf %12, %13 : vector<8x1xf32>
    %15 = vector.broadcast %7 : vector<8x1xf32> to vector<8x32xf32>
    %16 = arith.subf %1, %15 : vector<8x32xf32>
    %cst_9 = arith.constant 9.99999997E-7 : f32
    %17 = vector.broadcast %cst_9 : f32 to vector<8x1xf32>
    %18 = arith.addf %14, %17 : vector<8x1xf32>
    %19 = math.rsqrt %18 : vector<8x1xf32>
    %20 = vector.broadcast %19 : vector<8x1xf32> to vector<8x32xf32>
    %21 = arith.mulf %16, %20 : vector<8x32xf32>
    %22 = vector.broadcast %2 : vector<1x32xf32> to vector<8x32xf32>
    %23 = arith.mulf %21, %22 : vector<8x32xf32>
    %24 = vector.broadcast %3 : vector<1x32xf32> to vector<8x32xf32>
    %25 = arith.addf %23, %24 : vector<8x32xf32>
    %c0_10 = arith.constant 0 : index
    %c0_11 = arith.constant 0 : index
    %26 = vector.load %arg4[%c0_10, %c0_11] : memref<32x64xf32, #tpu.memory_space<vmem>>, vector<32x64xf32>
    %cst_12 = arith.constant dense<0.000000e+00> : vector<8x64xf32>
    %27 = tpu.matmul %25, %26, %cst_12 {dimension_numbers = #tpu.dot_dimension_numbers<[1], [0], [0], [1], [0, 0, 1, 1], [], []>} : vector<8x32xf32>, vector<32x64xf32>, vector<8x64xf32> -> vector<8x64xf32>
    %c0_13 = arith.constant 0 : index
    %c0_14 = arith.constant 0 : index
    %28 = vector.load %arg5[%c0_13, %c0_14] : memref<1x64xf32, #tpu.memory_space<vmem>>, vector<1x64xf32>
    %29 = vector.broadcast %28 : vector<1x64xf32> to vector<8x64xf32>
    %30 = arith.addf %27, %29 : vector<8x64xf32>
    %31 = vector.extract_strided_slice %30 {offsets = [0, 0], sizes = [8, 32], strides = [1, 1]} : vector<8x64xf32> to vector<8x32xf32>
    %32 = vector.extract_strided_slice %30 {offsets = [0, 32], sizes = [8, 32], strides = [1, 1]} : vector<8x64xf32> to vector<8x32xf32>
    %c0_15 = arith.constant 0 : index
    %c0_16 = arith.constant 0 : index
    %33 = vector.load %arg6[%c0_15, %c0_16] : memref<1x32xf32, #tpu.memory_space<vmem>>, vector<1x32xf32>
    %34 = vector.broadcast %33 : vector<1x32xf32> to vector<8x32xf32>
    %35 = arith.mulf %31, %34 : vector<8x32xf32>
    %c0_17 = arith.constant 0 : index
    %c0_18 = arith.constant 0 : index
    %36 = vector.load %arg7[%c0_17, %c0_18] : memref<32x4xf32, #tpu.memory_space<vmem>>, vector<32x4xf32>
    %cst_19 = arith.constant dense<0.000000e+00> : vector<8x4xf32>
    %37 = tpu.matmul %35, %36, %cst_19 {dimension_numbers = #tpu.dot_dimension_numbers<[1], [0], [0], [1], [0, 0, 1, 1], [], []>} : vector<8x32xf32>, vector<32x4xf32>, vector<8x4xf32> -> vector<8x4xf32>
    %cst_20 = arith.constant 0.353553385 : f32
    %38 = vector.broadcast %cst_20 : f32 to vector<8x4xf32>
    %39 = arith.mulf %37, %38 : vector<8x4xf32>
    %cst_21 = arith.constant dense<0xFF800000> : vector<4xf32>
    %40 = vector.multi_reduction <maximumf>, %39, %cst_21 [0] : vector<8x4xf32> to vector<4xf32>
    %41 = vector.shape_cast %40 : vector<4xf32> to vector<1x4xf32>
    %42 = vector.broadcast %41 : vector<1x4xf32> to vector<8x4xf32>
    %43 = arith.subf %39, %42 : vector<8x4xf32>
    %44 = math.exp %43 : vector<8x4xf32>
    %cst_22 = arith.constant dense<0.000000e+00> : vector<4xf32>
    %45 = vector.multi_reduction <add>, %44, %cst_22 [0] : vector<8x4xf32> to vector<4xf32>
    %46 = vector.shape_cast %45 : vector<4xf32> to vector<1x4xf32>
    %cst_23 = arith.constant 1.000000e+00 : f32
    %47 = vector.broadcast %cst_23 : f32 to vector<1x4xf32>
    %48 = arith.divf %47, %46 : vector<1x4xf32>
    %49 = vector.broadcast %48 : vector<1x4xf32> to vector<8x4xf32>
    %50 = arith.mulf %44, %49 : vector<8x4xf32>
    %c0_24 = arith.constant 0 : index
    %c0_25 = arith.constant 0 : index
    %51 = vector.load %arg8[%c0_24, %c0_25] : memref<4x32xf32, #tpu.memory_space<vmem>>, vector<4x32xf32>
    %cst_26 = arith.constant dense<0.000000e+00> : vector<8x32xf32>
    %52 = tpu.matmul %50, %51, %cst_26 {dimension_numbers = #tpu.dot_dimension_numbers<[1], [0], [0], [1], [0, 0, 1, 1], [], []>} : vector<8x4xf32>, vector<4x32xf32>, vector<8x32xf32> -> vector<8x32xf32>
    %53 = arith.mulf %52, %32 : vector<8x32xf32>
    %cst_27 = arith.constant dense<0.000000e+00> : vector<32xf32>
    %54 = vector.multi_reduction <add>, %53, %cst_27 [0] : vector<8x32xf32> to vector<32xf32>
    %55 = vector.shape_cast %54 : vector<32xf32> to vector<1x32xf32>
    %c0_28 = arith.constant 0 : index
    %c0_29 = arith.constant 0 : index
    %c0_30 = arith.constant 0 : index
    %56 = vector.load %arg9[%c0_28, %c0_29, %c0_30] : memref<1x1x32xf32, #tpu.memory_space<vmem>>, vector<1x1x32xf32>
    %57 = vector.shape_cast %56 : vector<1x1x32xf32> to vector<1x32xf32>
    %58 = vector.shape_cast %55 : vector<1x32xf32> to vector<1x1x32xf32>
    tpu.vector_store %arg9[%c0_28, %c0_29, %c0_30], %58 {strides = array<i32>} : memref<1x1x32xf32, #tpu.memory_space<vmem>>, vector<1x1x32xf32>,
    return
  }
  func.func @transform_0(%arg0: i32) -> (i32, i32, i32) {
    %c0_i32 = arith.constant 0 : i32
    %c0_i32_0 = arith.constant 0 : i32
    %c0_i32_1 = arith.constant 0 : i32
    return %arg0, %c0_i32, %c0_i32_0 : i32, i32, i32
  }
  func.func @transform_1(%arg0: i32) -> (i32, i32) {
    %c0_i32 = arith.constant 0 : i32
    %c0_i32_0 = arith.constant 0 : i32
    %c0_i32_1 = arith.constant 0 : i32
    return %c0_i32, %c0_i32_0 : i32, i32
  }
  func.func @transform_2(%arg0: i32) -> (i32, i32) {
    %c0_i32 = arith.constant 0 : i32
    %c0_i32_0 = arith.constant 0 : i32
    %c0_i32_1 = arith.constant 0 : i32
    return %c0_i32, %c0_i32_0 : i32, i32
  }
  func.func @transform_3(%arg0: i32) -> (i32, i32) {
    %c0_i32 = arith.constant 0 : i32
    %c0_i32_0 = arith.constant 0 : i32
    %c0_i32_1 = arith.constant 0 : i32
    return %c0_i32, %c0_i32_0 : i32, i32
  }
  func.func @transform_4(%arg0: i32) -> (i32, i32) {
    %c0_i32 = arith.constant 0 : i32
    %c0_i32_0 = arith.constant 0 : i32
    %c0_i32_1 = arith.constant 0 : i32
    return %c0_i32, %c0_i32_0 : i32, i32
  }
  func.func @transform_5(%arg0: i32) -> (i32, i32) {
    %c0_i32 = arith.constant 0 : i32
    %c0_i32_0 = arith.constant 0 : i32
    %c0_i32_1 = arith.constant 0 : i32
    return %c0_i32, %c0_i32_0 : i32, i32
  }
  func.func @transform_6(%arg0: i32) -> (i32, i32) {
    %c0_i32 = arith.constant 0 : i32
    %c0_i32_0 = arith.constant 0 : i32
    %c0_i32_1 = arith.constant 0 : i32
    return %c0_i32, %c0_i32_0 : i32, i32
  }
  func.func @transform_7(%arg0: i32) -> (i32, i32) {
    %c0_i32 = arith.constant 0 : i32
    %c0_i32_0 = arith.constant 0 : i32
    %c0_i32_1 = arith.constant 0 : i32
    return %c0_i32, %c0_i32_0 : i32, i32
  }
  func.func @transform_8(%arg0: i32) -> (i32, i32, i32) {
    %c0_i32 = arith.constant 0 : i32
    %c0_i32_0 = arith.constant 0 : i32
    %c0_i32_1 = arith.constant 0 : i32
    return %arg0, %c0_i32, %c0_i32_0 : i32, i32, i32
  }
}

module attributes {stable_mosaic.version = 11 : i64} {
  func.func @_cross_mlp_kernel(%arg0: i32, %arg1: memref<2x32xf32, #tpu.memory_space<vmem>>, %arg2: memref<1x32xf32, #tpu.memory_space<vmem>>, %arg3: memref<1x32xf32, #tpu.memory_space<vmem>>, %arg4: memref<1x32xf32, #tpu.memory_space<vmem>>, %arg5: memref<32x128xf32, #tpu.memory_space<vmem>>, %arg6: memref<1x128xf32, #tpu.memory_space<vmem>>, %arg7: memref<128x32xf32, #tpu.memory_space<vmem>>, %arg8: memref<1x32xf32, #tpu.memory_space<vmem>>, %arg9: memref<2x32xf32, #tpu.memory_space<vmem>>) attributes {dimension_semantics = [#tpu.dimension_semantics<arbitrary>], iteration_bounds = array<i64: 1>, scalar_prefetch = 0 : i64, scratch_operands = 0 : i64, tpu.core_type = #tpu.core_type<tc>, window_params = [{pipeline_mode = #tpu.pipeline_mode<synchronous>, transform_indices = @transform_0, window_bounds = array<i64: 2, 32>}, {pipeline_mode = #tpu.pipeline_mode<synchronous>, transform_indices = @transform_1, window_bounds = array<i64: 1, 32>}, {pipeline_mode = #tpu.pipeline_mode<synchronous>, transform_indices = @transform_2, window_bounds = array<i64: 1, 32>}, {pipeline_mode = #tpu.pipeline_mode<synchronous>, transform_indices = @transform_3, window_bounds = array<i64: 1, 32>}, {pipeline_mode = #tpu.pipeline_mode<synchronous>, transform_indices = @transform_4, window_bounds = array<i64: 32, 128>}, {pipeline_mode = #tpu.pipeline_mode<synchronous>, transform_indices = @transform_5, window_bounds = array<i64: 1, 128>}, {pipeline_mode = #tpu.pipeline_mode<synchronous>, transform_indices = @transform_6, window_bounds = array<i64: 128, 32>}, {pipeline_mode = #tpu.pipeline_mode<synchronous>, transform_indices = @transform_7, window_bounds = array<i64: 1, 32>}, {pipeline_mode = #tpu.pipeline_mode<synchronous>, transform_indices = @transform_8, window_bounds = array<i64: 2, 32>}]} {
    %c0 = arith.constant 0 : index
    %c0_0 = arith.constant 0 : index
    %0 = vector.load %arg2[%c0, %c0_0] : memref<1x32xf32, #tpu.memory_space<vmem>>, vector<1x32xf32>
    %c0_1 = arith.constant 0 : index
    %c0_2 = arith.constant 0 : index
    %1 = vector.load %arg1[%c0_1, %c0_2] : memref<2x32xf32, #tpu.memory_space<vmem>>, vector<2x32xf32>
    %2 = vector.broadcast %0 : vector<1x32xf32> to vector<2x32xf32>
    %3 = arith.addf %2, %1 : vector<2x32xf32>
    %c0_3 = arith.constant 0 : index
    %c0_4 = arith.constant 0 : index
    %4 = vector.load %arg3[%c0_3, %c0_4] : memref<1x32xf32, #tpu.memory_space<vmem>>, vector<1x32xf32>
    %c0_5 = arith.constant 0 : index
    %c0_6 = arith.constant 0 : index
    %5 = vector.load %arg4[%c0_5, %c0_6] : memref<1x32xf32, #tpu.memory_space<vmem>>, vector<1x32xf32>
    %cst = arith.constant dense<0.000000e+00> : vector<2xf32>
    %6 = vector.multi_reduction <add>, %3, %cst [1] : vector<2x32xf32> to vector<2xf32>
    %7 = vector.shape_cast %6 : vector<2xf32> to vector<2x1xf32>
    %cst_7 = arith.constant 3.200000e+01 : f32
    %8 = vector.broadcast %cst_7 : f32 to vector<2x1xf32>
    %9 = arith.divf %7, %8 : vector<2x1xf32>
    %10 = vector.broadcast %9 : vector<2x1xf32> to vector<2x32xf32>
    %11 = arith.subf %3, %10 : vector<2x32xf32>
    %12 = arith.mulf %11, %11 : vector<2x32xf32>
    %cst_8 = arith.constant dense<0.000000e+00> : vector<2xf32>
    %13 = vector.multi_reduction <add>, %12, %cst_8 [1] : vector<2x32xf32> to vector<2xf32>
    %14 = vector.shape_cast %13 : vector<2xf32> to vector<2x1xf32>
    %cst_9 = arith.constant 3.200000e+01 : f32
    %15 = vector.broadcast %cst_9 : f32 to vector<2x1xf32>
    %16 = arith.divf %14, %15 : vector<2x1xf32>
    %17 = vector.broadcast %9 : vector<2x1xf32> to vector<2x32xf32>
    %18 = arith.subf %3, %17 : vector<2x32xf32>
    %cst_10 = arith.constant 9.99999997E-7 : f32
    %19 = vector.broadcast %cst_10 : f32 to vector<2x1xf32>
    %20 = arith.addf %16, %19 : vector<2x1xf32>
    %21 = math.rsqrt %20 : vector<2x1xf32>
    %22 = vector.broadcast %21 : vector<2x1xf32> to vector<2x32xf32>
    %23 = arith.mulf %18, %22 : vector<2x32xf32>
    %24 = vector.broadcast %4 : vector<1x32xf32> to vector<2x32xf32>
    %25 = arith.mulf %23, %24 : vector<2x32xf32>
    %26 = vector.broadcast %5 : vector<1x32xf32> to vector<2x32xf32>
    %27 = arith.addf %25, %26 : vector<2x32xf32>
    %c0_11 = arith.constant 0 : index
    %c0_12 = arith.constant 0 : index
    %28 = vector.load %arg5[%c0_11, %c0_12] : memref<32x128xf32, #tpu.memory_space<vmem>>, vector<32x128xf32>
    %cst_13 = arith.constant dense<0.000000e+00> : vector<2x128xf32>
    %29 = tpu.matmul %27, %28, %cst_13 {dimension_numbers = #tpu.dot_dimension_numbers<[1], [0], [0], [1], [0, 0, 1, 1], [], []>} : vector<2x32xf32>, vector<32x128xf32>, vector<2x128xf32> -> vector<2x128xf32>
    %c0_14 = arith.constant 0 : index
    %c0_15 = arith.constant 0 : index
    %30 = vector.load %arg6[%c0_14, %c0_15] : memref<1x128xf32, #tpu.memory_space<vmem>>, vector<1x128xf32>
    %31 = vector.broadcast %30 : vector<1x128xf32> to vector<2x128xf32>
    %32 = arith.addf %29, %31 : vector<2x128xf32>
    %cst_16 = arith.constant 5.000000e-01 : f32
    %33 = vector.broadcast %cst_16 : f32 to vector<2x128xf32>
    %34 = arith.mulf %33, %32 : vector<2x128xf32>
    %cst_17 = arith.constant 0.707106769 : f32
    %35 = vector.broadcast %cst_17 : f32 to vector<2x128xf32>
    %36 = arith.mulf %32, %35 : vector<2x128xf32>
    %cst_18 = arith.constant 0.000000e+00 : f32
    %37 = vector.broadcast %cst_18 : f32 to vector<2x128xf32>
    %38 = arith.cmpf olt, %36, %37 : vector<2x128xf32>
    %cst_19 = arith.constant -1.000000e+00 : f32
    %cst_20 = arith.constant 1.000000e+00 : f32
    %39 = vector.broadcast %cst_19 : f32 to vector<2x128xf32>
    %40 = vector.broadcast %cst_20 : f32 to vector<2x128xf32>
    %41 = arith.select %38, %39, %40 : vector<2x128xi1>, vector<2x128xf32>
    %42 = math.absf %36 : vector<2x128xf32>
    %cst_21 = arith.constant 0.327591091 : f32
    %43 = vector.broadcast %cst_21 : f32 to vector<2x128xf32>
    %44 = arith.mulf %43, %42 : vector<2x128xf32>
    %cst_22 = arith.constant 1.000000e+00 : f32
    %45 = vector.broadcast %cst_22 : f32 to vector<2x128xf32>
    %46 = arith.addf %45, %44 : vector<2x128xf32>
    %cst_23 = arith.constant 1.000000e+00 : f32
    %47 = vector.broadcast %cst_23 : f32 to vector<2x128xf32>
    %48 = arith.divf %47, %46 : vector<2x128xf32>
    %cst_24 = arith.constant 1.06140542 : f32
    %49 = vector.broadcast %cst_24 : f32 to vector<2x128xf32>
    %50 = arith.mulf %49, %48 : vector<2x128xf32>
    %cst_25 = arith.constant -1.45315206 : f32
    %51 = vector.broadcast %cst_25 : f32 to vector<2x128xf32>
    %52 = arith.addf %50, %51 : vector<2x128xf32>
    %53 = arith.mulf %52, %48 : vector<2x128xf32>
    %cst_26 = arith.constant 1.42141378 : f32
    %54 = vector.broadcast %cst_26 : f32 to vector<2x128xf32>
    %55 = arith.addf %53, %54 : vector<2x128xf32>
    %56 = arith.mulf %55, %48 : vector<2x128xf32>
    %cst_27 = arith.constant -0.284496725 : f32
    %57 = vector.broadcast %cst_27 : f32 to vector<2x128xf32>
    %58 = arith.addf %56, %57 : vector<2x128xf32>
    %59 = arith.mulf %58, %48 : vector<2x128xf32>
    %cst_28 = arith.constant 0.254829586 : f32
    %60 = vector.broadcast %cst_28 : f32 to vector<2x128xf32>
    %61 = arith.addf %59, %60 : vector<2x128xf32>
    %62 = arith.mulf %61, %48 : vector<2x128xf32>
    %cst_29 = arith.constant 0.000000e+00 : f32
    %63 = vector.broadcast %cst_29 : f32 to vector<2x128xf32>
    %64 = arith.subf %63, %42 : vector<2x128xf32>
    %65 = arith.mulf %64, %42 : vector<2x128xf32>
    %66 = math.exp %65 : vector<2x128xf32>
    %67 = arith.mulf %62, %66 : vector<2x128xf32>
    %cst_30 = arith.constant 1.000000e+00 : f32
    %68 = vector.broadcast %cst_30 : f32 to vector<2x128xf32>
    %69 = arith.subf %68, %67 : vector<2x128xf32>
    %70 = arith.mulf %41, %69 : vector<2x128xf32>
    %cst_31 = arith.constant 1.000000e+00 : f32
    %71 = vector.broadcast %cst_31 : f32 to vector<2x128xf32>
    %72 = arith.addf %71, %70 : vector<2x128xf32>
    %73 = arith.mulf %34, %72 : vector<2x128xf32>
    %c0_32 = arith.constant 0 : index
    %c0_33 = arith.constant 0 : index
    %74 = vector.load %arg7[%c0_32, %c0_33] : memref<128x32xf32, #tpu.memory_space<vmem>>, vector<128x32xf32>
    %cst_34 = arith.constant dense<0.000000e+00> : vector<2x32xf32>
    %75 = tpu.matmul %73, %74, %cst_34 {dimension_numbers = #tpu.dot_dimension_numbers<[1], [0], [0], [1], [0, 0, 1, 1], [], []>} : vector<2x128xf32>, vector<128x32xf32>, vector<2x32xf32> -> vector<2x32xf32>
    %c0_35 = arith.constant 0 : index
    %c0_36 = arith.constant 0 : index
    %76 = vector.load %arg8[%c0_35, %c0_36] : memref<1x32xf32, #tpu.memory_space<vmem>>, vector<1x32xf32>
    %77 = vector.broadcast %76 : vector<1x32xf32> to vector<2x32xf32>
    %78 = arith.addf %75, %77 : vector<2x32xf32>
    %79 = arith.addf %3, %78 : vector<2x32xf32>
    %c0_37 = arith.constant 0 : index
    %c0_38 = arith.constant 0 : index
    %80 = vector.load %arg9[%c0_37, %c0_38] : memref<2x32xf32, #tpu.memory_space<vmem>>, vector<2x32xf32>
    tpu.vector_store %arg9[%c0_37, %c0_38], %79 {strides = array<i32>} : memref<2x32xf32, #tpu.memory_space<vmem>>, vector<2x32xf32>,
    return
  }
  func.func @transform_0(%arg0: i32) -> (i32, i32) {
    %c0_i32 = arith.constant 0 : i32
    %c0_i32_0 = arith.constant 0 : i32
    %c0_i32_1 = arith.constant 0 : i32
    return %c0_i32, %c0_i32_0 : i32, i32
  }
  func.func @transform_1(%arg0: i32) -> (i32, i32) {
    %c0_i32 = arith.constant 0 : i32
    %c0_i32_0 = arith.constant 0 : i32
    %c0_i32_1 = arith.constant 0 : i32
    return %c0_i32, %c0_i32_0 : i32, i32
  }
  func.func @transform_2(%arg0: i32) -> (i32, i32) {
    %c0_i32 = arith.constant 0 : i32
    %c0_i32_0 = arith.constant 0 : i32
    %c0_i32_1 = arith.constant 0 : i32
    return %c0_i32, %c0_i32_0 : i32, i32
  }
  func.func @transform_3(%arg0: i32) -> (i32, i32) {
    %c0_i32 = arith.constant 0 : i32
    %c0_i32_0 = arith.constant 0 : i32
    %c0_i32_1 = arith.constant 0 : i32
    return %c0_i32, %c0_i32_0 : i32, i32
  }
  func.func @transform_4(%arg0: i32) -> (i32, i32) {
    %c0_i32 = arith.constant 0 : i32
    %c0_i32_0 = arith.constant 0 : i32
    %c0_i32_1 = arith.constant 0 : i32
    return %c0_i32, %c0_i32_0 : i32, i32
  }
  func.func @transform_5(%arg0: i32) -> (i32, i32) {
    %c0_i32 = arith.constant 0 : i32
    %c0_i32_0 = arith.constant 0 : i32
    %c0_i32_1 = arith.constant 0 : i32
    return %c0_i32, %c0_i32_0 : i32, i32
  }
  func.func @transform_6(%arg0: i32) -> (i32, i32) {
    %c0_i32 = arith.constant 0 : i32
    %c0_i32_0 = arith.constant 0 : i32
    %c0_i32_1 = arith.constant 0 : i32
    return %c0_i32, %c0_i32_0 : i32, i32
  }
  func.func @transform_7(%arg0: i32) -> (i32, i32) {
    %c0_i32 = arith.constant 0 : i32
    %c0_i32_0 = arith.constant 0 : i32
    %c0_i32_1 = arith.constant 0 : i32
    return %c0_i32, %c0_i32_0 : i32, i32
  }
  func.func @transform_8(%arg0: i32) -> (i32, i32) {
    %c0_i32 = arith.constant 0 : i32
    %c0_i32_0 = arith.constant 0 : i32
    %c0_i32_1 = arith.constant 0 : i32
    return %c0_i32, %c0_i32_0 : i32, i32
  }
}

</mosaic_0001>

<llo_original>
// kernel: attentive_pooler_forward.8
$region0: #{attentive_pooler_forward.8}
  #allocation0 [shape = 'u32[]', space=smem, size = 0x4, offset = 0x4, fixed_abs, tag = 'smem constant byte address 0x4 - core index']
  #allocation1 [shape = 'u32[144,128]{1,0:T(1,128)}', space=vmem, size = 0x12000, scoped, tag = 'internal scratch']
  %s0 = inlined_call_operand.vmem [shape: f32[2,8,32], index: 0, kind: input, shape index: {}]
  %s1 = inlined_call_operand.vmem [shape: f32[1,32], index: 1, kind: input, shape index: {}]
  %s2 = inlined_call_operand.vmem [shape: f32[1,32], index: 2, kind: input, shape index: {}]
  %s3 = inlined_call_operand.vmem [shape: f32[32,96], index: 3, kind: input, shape index: {}]
  %s4 = inlined_call_operand.vmem [shape: f32[1,96], index: 4, kind: input, shape index: {}]
  %s5 = inlined_call_operand.vmem [shape: f32[2,8,96], index: 5, kind: output, shape index: {}]
  %s6 = sld [smem:[#allocation0]]
  $region53: #{attentive_pooler_forward.8} parent=0
    _
  %s8 = ssub.s32 1, %s6
  %s9 = scalar_select 0, %s8, %s6
  loop: start=0, step=1, limit=4
  $region2: #{attentive_pooler_forward.8} parent=0 // loop_pre_header
    _
  $region3: #{attentive_pooler_forward.8} parent=0 // loop_header
    %s11 = sphi 0, %s15
    %p12 = scmp.ge.s32.totalorder %s11, 4
    %s21 = sphi 0, %s23
    %s24 = sphi 0, %s21
    %s25 = sphi 0, %s24
    %s41 = sphi 0, %s25
    %s45 = sphi 0, %s45
    %s47 = sphi 0, %s45
    %s48 = sphi 0, %s47
    %s62 = sphi 0, %s48
    %s66 = sphi 0, %s66
    %s68 = sphi 0, %s66
    %s69 = sphi 0, %s68
    %s83 = sphi 0, %s69
    %s87 = sphi 0, %s87
    %s89 = sphi 0, %s87
    %s90 = sphi 0, %s89
    %s104 = sphi 0, %s90
    %s108 = sphi 0, %s108
    %s110 = sphi 0, %s108
    %s111 = sphi 0, %s110
    %s125 = sphi 0, %s111
    %s131 = sphi 0, %s133
    %s134 = sphi 0, %s131
    %s135 = sphi 0, %s134
    %s151 = sphi 0, %s135
  $region4: #{attentive_pooler_forward.8} parent=0 // loop_header_branch
    %14 = sbr.rel (%p12) target = $region8
  $region5: #{attentive_pooler_forward.8} parent=0 // loop_body
    %s16 = ssub.s32 %s11, 1
    %s17 = ssub.s32 %s11, 2
    %s18 = sadd.s32 %s11, 1
    %s19 = ssub.s32 %s11, %s18
    %p20 = scmp.eq.s32.totalorder %s19, 0
    %s22 = sadd.s32 %s21, 1
    %s23 = scalar_select %p20, %s21, %s22
    %p26 = pneg %p20
    %p27 = scmp.eq.s32.totalorder %s11, 1
    %p28 = por %p26, %p27
    %p29 = scmp.ne.s32.totalorder %s21, %s24
    %p30 = scmp.eq.s32.totalorder %s11, 0
    %p31 = por %p29, %p30
    %p32 = scmp.ne.s32.totalorder %s21, %s24
    %p33 = scmp.eq.s32.totalorder %s16, 1
    %p34 = por %p32, %p33
    %p35 = scmp.ne.s32.totalorder %s24, %s25
    %p36 = scmp.eq.s32.totalorder %s16, 0
    %p37 = por %p35, %p36
    %p38 = scmp.ne.s32.totalorder %s24, %s25
    %p39 = scmp.eq.s32.totalorder %s17, 1
    %p40 = por %p38, %p39
    %p42 = scmp.ne.s32.totalorder %s25, %s41
    %p43 = scmp.eq.s32.totalorder %s17, 0
    %p44 = por %p42, %p43
    %s46 = sadd.s32 %s45, 1
    %p49 = scmp.eq.s32.totalorder %s11, 1
    %p50 = scmp.ne.s32.totalorder %s45, %s47
    %p51 = scmp.eq.s32.totalorder %s11, 0
    %p52 = por %p50, %p51
    %p53 = scmp.ne.s32.totalorder %s45, %s47
    %p54 = scmp.eq.s32.totalorder %s16, 1
    %p55 = por %p53, %p54
    %p56 = scmp.ne.s32.totalorder %s47, %s48
    %p57 = scmp.eq.s32.totalorder %s16, 0
    %p58 = por %p56, %p57
    %p59 = scmp.ne.s32.totalorder %s47, %s48
    %p60 = scmp.eq.s32.totalorder %s17, 1
    %p61 = por %p59, %p60
    %p63 = scmp.ne.s32.totalorder %s48, %s62
    %p64 = scmp.eq.s32.totalorder %s17, 0
    %p65 = por %p63, %p64
    %s67 = sadd.s32 %s66, 1
    %p70 = scmp.eq.s32.totalorder %s11, 1
    %p71 = scmp.ne.s32.totalorder %s66, %s68
    %p72 = scmp.eq.s32.totalorder %s11, 0
    %p73 = por %p71, %p72
    %p74 = scmp.ne.s32.totalorder %s66, %s68
    %p75 = scmp.eq.s32.totalorder %s16, 1
    %p76 = por %p74, %p75
    %p77 = scmp.ne.s32.totalorder %s68, %s69
    %p78 = scmp.eq.s32.totalorder %s16, 0
    %p79 = por %p77, %p78
    %p80 = scmp.ne.s32.totalorder %s68, %s69
    %p81 = scmp.eq.s32.totalorder %s17, 1
    %p82 = por %p80, %p81
    %p84 = scmp.ne.s32.totalorder %s69, %s83
    %p85 = scmp.eq.s32.totalorder %s17, 0
    %p86 = por %p84, %p85
    %s88 = sadd.s32 %s87, 1
    %p91 = scmp.eq.s32.totalorder %s11, 1
    %p92 = scmp.ne.s32.totalorder %s87, %s89
    %p93 = scmp.eq.s32.totalorder %s11, 0
    %p94 = por %p92, %p93
    %p95 = scmp.ne.s32.totalorder %s87, %s89
    %p96 = scmp.eq.s32.totalorder %s16, 1
    %p97 = por %p95, %p96
    %p98 = scmp.ne.s32.totalorder %s89, %s90
    %p99 = scmp.eq.s32.totalorder %s16, 0
    %p100 = por %p98, %p99
    %p101 = scmp.ne.s32.totalorder %s89, %s90
    %p102 = scmp.eq.s32.totalorder %s17, 1
    %p103 = por %p101, %p102
    %p105 = scmp.ne.s32.totalorder %s90, %s104
    %p106 = scmp.eq.s32.totalorder %s17, 0
    %p107 = por %p105, %p106
    %s109 = sadd.s32 %s108, 1
    %p112 = scmp.eq.s32.totalorder %s11, 1
    %p113 = scmp.ne.s32.totalorder %s108, %s110
    %p114 = scmp.eq.s32.totalorder %s11, 0
    %p115 = por %p113, %p114
    %p116 = scmp.ne.s32.totalorder %s108, %s110
    %p117 = scmp.eq.s32.totalorder %s16, 1
    %p118 = por %p116, %p117
    %p119 = scmp.ne.s32.totalorder %s110, %s111
    %p120 = scmp.eq.s32.totalorder %s16, 0
    %p121 = por %p119, %p120
    %p122 = scmp.ne.s32.totalorder %s110, %s111
    %p123 = scmp.eq.s32.totalorder %s17, 1
    %p124 = por %p122, %p123
    %p126 = scmp.ne.s32.totalorder %s111, %s125
    %p127 = scmp.eq.s32.totalorder %s17, 0
    %p128 = por %p126, %p127
    %s129 = ssub.s32 %s11, %s18
    %p130 = scmp.eq.s32.totalorder %s129, 0
    %s132 = sadd.s32 %s131, 1
    %s133 = scalar_select %p130, %s131, %s132
    %p136 = pneg %p130
    %p137 = scmp.eq.s32.totalorder %s11, 1
    %p138 = por %p136, %p137
    %p139 = scmp.ne.s32.totalorder %s131, %s134
    %p140 = scmp.eq.s32.totalorder %s11, 0
    %p141 = por %p139, %p140
    %p142 = scmp.ne.s32.totalorder %s131, %s134
    %p143 = scmp.eq.s32.totalorder %s16, 1
    %p144 = por %p142, %p143
    %p145 = scmp.ne.s32.totalorder %s134, %s135
    %p146 = scmp.eq.s32.totalorder %s16, 0
    %p147 = por %p145, %p146
    %p148 = scmp.ne.s32.totalorder %s134, %s135
    %p149 = scmp.eq.s32.totalorder %s17, 1
    %p150 = por %p148, %p149
    %p152 = scmp.ne.s32.totalorder %s135, %s151
    %p153 = scmp.eq.s32.totalorder %s17, 0
    %p154 = por %p152, %p153
    %p155 = scmp.le.s32.totalorder 1, %s11
    %p156 = scmp.lt.s32.totalorder %s11, 3
    %p157 = pnand %p155, %p156
    %p158 = pneg %p157
    // Predicated region
    $region9: #{attentive_pooler_forward.8} parent=5 // pred_check
      _
    $region10: #{attentive_pooler_forward.8} parent=5 // pred_check_branch
      %160 = sbr.rel (%p157) target = $region12
    $region11: #{attentive_pooler_forward.8} parent=5 // pred_region
      %s161 = ssub.s32 %s11, 1
      // Predicated region
      $region13: #{attentive_pooler_forward.8} parent=11 // pred_check
        %p162 = pneg %p58
      $region14: #{attentive_pooler_forward.8} parent=11 // pred_check_branch
        %164 = sbr.rel (%p162) target = $region16
      $region15: #{attentive_pooler_forward.8} parent=11 // pred_region
        _
      $region16: #{attentive_pooler_forward.8} parent=11 // pred_fallthru
        _
      // Predicated region
      $region17: #{attentive_pooler_forward.8} parent=11 // pred_check
        %p165 = pneg %p79
      $region18: #{attentive_pooler_forward.8} parent=11 // pred_check_branch
        %167 = sbr.rel (%p165) target = $region20
      $region19: #{attentive_pooler_forward.8} parent=11 // pred_region
        _
      $region20: #{attentive_pooler_forward.8} parent=11 // pred_fallthru
        _
      // Predicated region
      $region21: #{attentive_pooler_forward.8} parent=11 // pred_check
        %p168 = pneg %p100
      $region22: #{attentive_pooler_forward.8} parent=11 // pred_check_branch
        %170 = sbr.rel (%p168) target = $region24
      $region23: #{attentive_pooler_forward.8} parent=11 // pred_region
        _
      $region24: #{attentive_pooler_forward.8} parent=11 // pred_fallthru
        _
      // Predicated region
      $region25: #{attentive_pooler_forward.8} parent=11 // pred_check
        %p171 = pneg %p121
      $region26: #{attentive_pooler_forward.8} parent=11 // pred_check_branch
        %173 = sbr.rel (%p171) target = $region28
      $region27: #{attentive_pooler_forward.8} parent=11 // pred_region
        _
      $region28: #{attentive_pooler_forward.8} parent=11 // pred_fallthru
        _
    $region12: #{attentive_pooler_forward.8} parent=5 // pred_fallthru
      _
    %p174 = scmp.lt.s32.totalorder %s11, 2
    // Predicated region
    $region29: #{attentive_pooler_forward.8} parent=5 // pred_check
      %p175 = pneg %p174
    $region30: #{attentive_pooler_forward.8} parent=5 // pred_check_branch
      %177 = sbr.rel (%p175) target = $region32
    $region31: #{attentive_pooler_forward.8} parent=5 // pred_region
      // Predicated region
      $region33: #{attentive_pooler_forward.8} parent=31 // pred_check
        %p178 = pneg %p31
      $region34: #{attentive_pooler_forward.8} parent=31 // pred_check_branch
        %180 = sbr.rel (%p178) target = $region36
      $region35: #{attentive_pooler_forward.8} parent=31 // pred_region
        %p181 = scmp.lt.s32.totalorder %s11, 1
        %s182 = scalar_select %p181, %s11, 1
        %s183 = smul.addr %s182, 8
        %s184 = scalar_lea.vmem %s0, %s183
      $region36: #{attentive_pooler_forward.8} parent=31 // pred_fallthru
        _
    $region32: #{attentive_pooler_forward.8} parent=5 // pred_fallthru
      _
    %p185 = scmp.le.s32.totalorder 1, %s11
    %p186 = scmp.lt.s32.totalorder %s11, 3
    %p187 = pnand %p185, %p186
    %p188 = pneg %p187
    // Predicated region
    $region37: #{attentive_pooler_forward.8} parent=5 // pred_check
      _
    $region38: #{attentive_pooler_forward.8} parent=5 // pred_check_branch
      %190 = sbr.rel (%p187) target = $region40
    $region39: #{attentive_pooler_forward.8} parent=5 // pred_region
      %s191 = ssub.s32 %s11, 1
      %p192 = scmp.lt.s32.totalorder %s16, 1
      %s193 = scalar_select %p192, %s16, 1
      %s194 = smul.addr %s193, 8
      %s195 = scalar_lea.vmem %s0, %s194
      %p196 = pneg %p37
      %p197 = pneg %p34
      %p198 = pneg %p58
      %p199 = pneg %p55
      %p200 = pneg %p79
      %p201 = pneg %p76
      %p202 = pneg %p100
      %p203 = pneg %p97
      %p204 = pneg %p121
      %p205 = pneg %p118
      %p206 = pneg %p147
      %p207 = pneg %p144
      %p208 = scmp.lt.s32.totalorder %s16, 1
      %s209 = scalar_select %p208, %s16, 1
      %s210 = smul.addr %s209, 8
      %s211 = scalar_lea.vmem %s5, %s210
      %p212 = scmp.lt.s32.totalorder %s16, 1
      %s213 = scalar_select %p212, %s16, 1
      %s214 = smul.addr %s213, 8
      %s215 = scalar_lea.vmem %s0, %s214
      %p216 = scmp.lt.s32.totalorder %s16, 1
      %s217 = scalar_select %p216, %s16, 1
      %s218 = smul.addr %s217, 8
      %s219 = scalar_lea.vmem %s5, %s218
      %v220 = vld [vmem:[%s215] sm:$0xff]
      %v221 = vld [vmem:[%s1] sm:$0x1]
      %v222 = vld [vmem:[%s2] sm:$0x1]
      %vm223 = vcmask 261120
      %v224 = vsel %vm223, %v220, 0.0
      %225 = vadd.xlane.f32.xlu0 %v224
      %v226 = vpop.xlane.xlu0 %225
      %v227 = vrcp.pop 32.0
      %v228 = vmul.f32 %v226, %v227
      %v229 = vsub.f32 %v220, %v228
      %v230 = vmul.f32 %v229, %v229
      %v231 = vsel %vm223, %v230, 0.0
      %232 = vadd.xlane.f32.xlu0 %v231
      %v233 = vpop.xlane.xlu0 %232
      %v234 = vmul.f32 %v233, %v227
      %v235 = vadd.f32 %v234, 1e-06
      %v236 = vrsqrt.pop %v235
      %v237 = vmul.f32 %v229, %v236
      %v239 = vlaneseq
      %v240 = vshrl.u32 %v239, 7
      %v241 = vsub.s32 0, %v240
      %v242 = vrot.slane %v221, %v241
      %v244 = vmul.f32 %v237, %v242
      %v246 = vlaneseq
      %v247 = vshrl.u32 %v246, 7
      %v248 = vsub.s32 0, %v247
      %v249 = vrot.slane %v222, %v248
      %v251 = vadd.f32 %v244, %v249
      %v252 = vld [vmem:[%s3] sm:$0xff]
      %v253 = vld [vmem:[%s3 + $0x8] sm:$0xff]
      %v254 = vld [vmem:[%s3 + $0x10] sm:$0xff]
      %v255 = vld [vmem:[%s3 + $0x18] sm:$0xff]
      %v256 = vld [vmem:[%s4] sm:$0x1]
      %v258 = vlaneseq
      %v259 = vshrl.u32 %v258, 7
      %v260 = vsub.s32 0, %v259
      %v261 = vrot.slane %v256, %v260
      %v264 = vsel %vm223, %v251, 0
      %266 = vmatprep.subr.mxu0 0.0
      %267 = vmatpush1.msra.mxu0 0.0
      %268 = vmatprep.subr.mxu0 0.0
      %269 = vmatpush1.msra.mxu0 0.0
      %270 = vmatprep.subr.mxu0 0.0
      %271 = vmatpush1.msra.mxu0 0.0
      %272 = vmatprep.subr.mxu0 0.0
      %273 = vmatpush1.msra.mxu0 0.0
      %274 = vmatprep.subr.mxu0 0.0
      %275 = vmatpush1.msra.mxu0 0.0
      %276 = vmatprep.subr.mxu0 0.0
      %277 = vmatpush1.msra.mxu0 0.0
      %278 = vmatprep.subr.mxu0 0.0
      %279 = vmatpush1.msra.mxu0 0.0
      %280 = vmatprep.subr.mxu0 0.0
      %281 = vmatpush1.msra.mxu0 0.0
      %282 = vmatprep.subr.mxu0 0.0
      %283 = vmatpush1.msra.mxu0 0.0
      %284 = vmatprep.subr.mxu0 0.0
      %285 = vmatpush1.msra.mxu0 0.0
      %286 = vmatprep.subr.mxu0 0.0
      %287 = vmatpush1.msra.mxu0 0.0
      %288 = vmatprep.subr.mxu0 0.0
      %289 = vmatpush1.msra.mxu0 0.0
      %290 = vmatprep.subr.mxu0 0.0
      %291 = vmatpush1.msra.mxu0 %v255
      %292 = vmatprep.subr.mxu0 0.0
      %293 = vmatpush1.msra.mxu0 %v254
      %294 = vmatprep.subr.mxu0 0.0
      %295 = vmatpush1.msra.mxu0 %v253
      %296 = vmatprep.subr.mxu0 0.0
      %297 = vmatpush1.msra.mxu0 %v252
      %298 = vmatprep.subr.mxu0 0.0
      %299 = vmatpush2.msra.mxu0 0.0
      %300 = vmatprep.subr.mxu0 0.0
      %301 = vmatpush2.msra.mxu0 0.0
      %302 = vmatprep.subr.mxu0 0.0
      %303 = vmatpush2.msra.mxu0 0.0
      %304 = vmatprep.subr.mxu0 0.0
      %305 = vmatpush2.msra.mxu0 0.0
      %306 = vmatprep.subr.mxu0 0.0
      %307 = vmatpush2.msra.mxu0 0.0
      %308 = vmatprep.subr.mxu0 0.0
      %309 = vmatpush2.msra.mxu0 0.0
      %310 = vmatprep.subr.mxu0 0.0
      %311 = vmatpush2.msra.mxu0 0.0
      %312 = vmatprep.subr.mxu0 0.0
      %313 = vmatpush2.msra.mxu0 0.0
      %314 = vmatprep.subr.mxu0 0.0
      %315 = vmatpush2.msra.mxu0 0.0
      %316 = vmatprep.subr.mxu0 0.0
      %317 = vmatpush2.msra.mxu0 0.0
      %318 = vmatprep.subr.mxu0 0.0
      %319 = vmatpush2.msra.mxu0 0.0
      %320 = vmatprep.subr.mxu0 0.0
      %321 = vmatpush2.msra.mxu0 0.0
      %322 = vmatprep.subr.mxu0 0.0
      %323 = vmatpush2.msra.mxu0 0.0
      %324 = vmatprep.subr.mxu0 0.0
      %325 = vmatpush2.msra.mxu0 0.0
      %326 = vmatprep.subr.mxu0 0.0
      %327 = vmatpush2.msra.mxu0 0.0
      %328 = vmatprep.subr.mxu0 0.0
      %329 = vmatpush2.msra.mxu0 0.0
      %330 = vmatprep.mubr.f32.mxu0 0.0
      %331 = vmatmul.mubr.f32.gmra.mxu0 %v264
      %v332 = vpop.f32.mrf.mxu0
      %v333 = vadd.f32 %v261, %v332
      %v334 = vpop.f32.mrf.mxu0
      %335 = vdwg.mxu0
      %vm336 = vcmask 785408
      %337 = vst.msk [vmem:[%s219] sm:$0xff] %vm336, %v333
      %p338 = scmp.lt.s32.totalorder %s16, 1
      %s339 = scalar_select %p338, %s16, 1
      %s340 = smul.addr %s339, 8
      %s341 = scalar_lea.vmem %s5, %s340
      // Predicated region
      $region41: #{attentive_pooler_forward.8} parent=39 // pred_check
        %p342 = pneg %p144
      $region42: #{attentive_pooler_forward.8} parent=39 // pred_check_branch
        %344 = sbr.rel (%p342) target = $region44
      $region43: #{attentive_pooler_forward.8} parent=39 // pred_region
        _
      $region44: #{attentive_pooler_forward.8} parent=39 // pred_fallthru
        _
    $region40: #{attentive_pooler_forward.8} parent=5 // pred_fallthru
      _
    %p345 = scmp.le.s32.totalorder 2, %s11
    // Predicated region
    $region45: #{attentive_pooler_forward.8} parent=5 // pred_check
      %p346 = pneg %p345
    $region46: #{attentive_pooler_forward.8} parent=5 // pred_check_branch
      %348 = sbr.rel (%p346) target = $region48
    $region47: #{attentive_pooler_forward.8} parent=5 // pred_region
      %s349 = ssub.s32 %s11, 2
      // Predicated region
      $region49: #{attentive_pooler_forward.8} parent=47 // pred_check
        %p350 = pneg %p150
      $region50: #{attentive_pooler_forward.8} parent=47 // pred_check_branch
        %352 = sbr.rel (%p350) target = $region52
      $region51: #{attentive_pooler_forward.8} parent=47 // pred_region
        %p353 = scmp.lt.s32.totalorder %s17, 1
        %s354 = scalar_select %p353, %s17, 1
        %s355 = smul.addr %s354, 8
        %s356 = scalar_lea.vmem %s5, %s355
      $region52: #{attentive_pooler_forward.8} parent=47 // pred_fallthru
        _
    $region48: #{attentive_pooler_forward.8} parent=5 // pred_fallthru
      _
  $region6: #{attentive_pooler_forward.8} parent=0 // loop_footer
    %s15 = sadd.s32 1, %s11
  $region7: #{attentive_pooler_forward.8} parent=0 // loop_footer_branch
    %10 = sbr.rel target = $region3
  $region8: #{attentive_pooler_forward.8} parent=0 // loop_exit
    _

// kernel: attentive_pooler_forward.10
$region0: #{attentive_pooler_forward.10}
  #allocation0 [shape = 'u32[]', space=smem, size = 0x4, offset = 0x4, fixed_abs, tag = 'smem constant byte address 0x4 - core index']
  #allocation1 [shape = 'u32[144,128]{1,0:T(1,128)}', space=vmem, size = 0x12000, scoped, tag = 'internal scratch']
  %s0 = inlined_call_operand.vmem [shape: f32[2,8,32], index: 0, kind: input, shape index: {}]
  %s1 = inlined_call_operand.vmem [shape: f32[2,8,32], index: 1, kind: input, shape index: {}]
  %s2 = inlined_call_operand.vmem [shape: f32[1,32], index: 2, kind: input, shape index: {}]
  %s3 = inlined_call_operand.vmem [shape: f32[1,32], index: 3, kind: input, shape index: {}]
  %s4 = inlined_call_operand.vmem [shape: f32[32,128], index: 4, kind: input, shape index: {}]
  %s5 = inlined_call_operand.vmem [shape: f32[1,128], index: 5, kind: input, shape index: {}]
  %s6 = inlined_call_operand.vmem [shape: f32[128,32], index: 6, kind: input, shape index: {}]
  %s7 = inlined_call_operand.vmem [shape: f32[1,32], index: 7, kind: input, shape index: {}]
  %s8 = inlined_call_operand.vmem [shape: f32[2,8,32], index: 8, kind: output, shape index: {}]
  %s9 = sld [smem:[#allocation0]]
  $region65: #{attentive_pooler_forward.10} parent=0
    _
  %s11 = ssub.s32 1, %s9
  %s12 = scalar_select 0, %s11, %s9
  loop: start=0, step=1, limit=4
  $region2: #{attentive_pooler_forward.10} parent=0 // loop_pre_header
    _
  $region3: #{attentive_pooler_forward.10} parent=0 // loop_header
    %s14 = sphi 0, %s18
    %p15 = scmp.ge.s32.totalorder %s14, 4
    %s24 = sphi 0, %s26
    %s27 = sphi 0, %s24
    %s28 = sphi 0, %s27
    %s44 = sphi 0, %s28
    %s50 = sphi 0, %s52
    %s53 = sphi 0, %s50
    %s54 = sphi 0, %s53
    %s70 = sphi 0, %s54
    %s74 = sphi 0, %s74
    %s76 = sphi 0, %s74
    %s77 = sphi 0, %s76
    %s91 = sphi 0, %s77
    %s95 = sphi 0, %s95
    %s97 = sphi 0, %s95
    %s98 = sphi 0, %s97
    %s112 = sphi 0, %s98
    %s116 = sphi 0, %s116
    %s118 = sphi 0, %s116
    %s119 = sphi 0, %s118
    %s133 = sphi 0, %s119
    %s137 = sphi 0, %s137
    %s139 = sphi 0, %s137
    %s140 = sphi 0, %s139
    %s154 = sphi 0, %s140
    %s158 = sphi 0, %s158
    %s160 = sphi 0, %s158
    %s161 = sphi 0, %s160
    %s175 = sphi 0, %s161
    %s179 = sphi 0, %s179
    %s181 = sphi 0, %s179
    %s182 = sphi 0, %s181
    %s196 = sphi 0, %s182
    %s202 = sphi 0, %s204
    %s205 = sphi 0, %s202
    %s206 = sphi 0, %s205
    %s222 = sphi 0, %s206
  $region4: #{attentive_pooler_forward.10} parent=0 // loop_header_branch
    %17 = sbr.rel (%p15) target = $region8
  $region5: #{attentive_pooler_forward.10} parent=0 // loop_body
    %s19 = ssub.s32 %s14, 1
    %s20 = ssub.s32 %s14, 2
    %s21 = sadd.s32 %s14, 1
    %s22 = ssub.s32 %s14, %s21
    %p23 = scmp.eq.s32.totalorder %s22, 0
    %s25 = sadd.s32 %s24, 1
    %s26 = scalar_select %p23, %s24, %s25
    %p29 = pneg %p23
    %p30 = scmp.eq.s32.totalorder %s14, 1
    %p31 = por %p29, %p30
    %p32 = scmp.ne.s32.totalorder %s24, %s27
    %p33 = scmp.eq.s32.totalorder %s14, 0
    %p34 = por %p32, %p33
    %p35 = scmp.ne.s32.totalorder %s24, %s27
    %p36 = scmp.eq.s32.totalorder %s19, 1
    %p37 = por %p35, %p36
    %p38 = scmp.ne.s32.totalorder %s27, %s28
    %p39 = scmp.eq.s32.totalorder %s19, 0
    %p40 = por %p38, %p39
    %p41 = scmp.ne.s32.totalorder %s27, %s28
    %p42 = scmp.eq.s32.totalorder %s20, 1
    %p43 = por %p41, %p42
    %p45 = scmp.ne.s32.totalorder %s28, %s44
    %p46 = scmp.eq.s32.totalorder %s20, 0
    %p47 = por %p45, %p46
    %s48 = ssub.s32 %s14, %s21
    %p49 = scmp.eq.s32.totalorder %s48, 0
    %s51 = sadd.s32 %s50, 1
    %s52 = scalar_select %p49, %s50, %s51
    %p55 = pneg %p49
    %p56 = scmp.eq.s32.totalorder %s14, 1
    %p57 = por %p55, %p56
    %p58 = scmp.ne.s32.totalorder %s50, %s53
    %p59 = scmp.eq.s32.totalorder %s14, 0
    %p60 = por %p58, %p59
    %p61 = scmp.ne.s32.totalorder %s50, %s53
    %p62 = scmp.eq.s32.totalorder %s19, 1
    %p63 = por %p61, %p62
    %p64 = scmp.ne.s32.totalorder %s53, %s54
    %p65 = scmp.eq.s32.totalorder %s19, 0
    %p66 = por %p64, %p65
    %p67 = scmp.ne.s32.totalorder %s53, %s54
    %p68 = scmp.eq.s32.totalorder %s20, 1
    %p69 = por %p67, %p68
    %p71 = scmp.ne.s32.totalorder %s54, %s70
    %p72 = scmp.eq.s32.totalorder %s20, 0
    %p73 = por %p71, %p72
    %s75 = sadd.s32 %s74, 1
    %p78 = scmp.eq.s32.totalorder %s14, 1
    %p79 = scmp.ne.s32.totalorder %s74, %s76
    %p80 = scmp.eq.s32.totalorder %s14, 0
    %p81 = por %p79, %p80
    %p82 = scmp.ne.s32.totalorder %s74, %s76
    %p83 = scmp.eq.s32.totalorder %s19, 1
    %p84 = por %p82, %p83
    %p85 = scmp.ne.s32.totalorder %s76, %s77
    %p86 = scmp.eq.s32.totalorder %s19, 0
    %p87 = por %p85, %p86
    %p88 = scmp.ne.s32.totalorder %s76, %s77
    %p89 = scmp.eq.s32.totalorder %s20, 1
    %p90 = por %p88, %p89
    %p92 = scmp.ne.s32.totalorder %s77, %s91
    %p93 = scmp.eq.s32.totalorder %s20, 0
    %p94 = por %p92, %p93
    %s96 = sadd.s32 %s95, 1
    %p99 = scmp.eq.s32.totalorder %s14, 1
    %p100 = scmp.ne.s32.totalorder %s95, %s97
    %p101 = scmp.eq.s32.totalorder %s14, 0
    %p102 = por %p100, %p101
    %p103 = scmp.ne.s32.totalorder %s95, %s97
    %p104 = scmp.eq.s32.totalorder %s19, 1
    %p105 = por %p103, %p104
    %p106 = scmp.ne.s32.totalorder %s97, %s98
    %p107 = scmp.eq.s32.totalorder %s19, 0
    %p108 = por %p106, %p107
    %p109 = scmp.ne.s32.totalorder %s97, %s98
    %p110 = scmp.eq.s32.totalorder %s20, 1
    %p111 = por %p109, %p110
    %p113 = scmp.ne.s32.totalorder %s98, %s112
    %p114 = scmp.eq.s32.totalorder %s20, 0
    %p115 = por %p113, %p114
    %s117 = sadd.s32 %s116, 1
    %p120 = scmp.eq.s32.totalorder %s14, 1
    %p121 = scmp.ne.s32.totalorder %s116, %s118
    %p122 = scmp.eq.s32.totalorder %s14, 0
    %p123 = por %p121, %p122
    %p124 = scmp.ne.s32.totalorder %s116, %s118
    %p125 = scmp.eq.s32.totalorder %s19, 1
    %p126 = por %p124, %p125
    %p127 = scmp.ne.s32.totalorder %s118, %s119
    %p128 = scmp.eq.s32.totalorder %s19, 0
    %p129 = por %p127, %p128
    %p130 = scmp.ne.s32.totalorder %s118, %s119
    %p131 = scmp.eq.s32.totalorder %s20, 1
    %p132 = por %p130, %p131
    %p134 = scmp.ne.s32.totalorder %s119, %s133
    %p135 = scmp.eq.s32.totalorder %s20, 0
    %p136 = por %p134, %p135
    %s138 = sadd.s32 %s137, 1
    %p141 = scmp.eq.s32.totalorder %s14, 1
    %p142 = scmp.ne.s32.totalorder %s137, %s139
    %p143 = scmp.eq.s32.totalorder %s14, 0
    %p144 = por %p142, %p143
    %p145 = scmp.ne.s32.totalorder %s137, %s139
    %p146 = scmp.eq.s32.totalorder %s19, 1
    %p147 = por %p145, %p146
    %p148 = scmp.ne.s32.totalorder %s139, %s140
    %p149 = scmp.eq.s32.totalorder %s19, 0
    %p150 = por %p148, %p149
    %p151 = scmp.ne.s32.totalorder %s139, %s140
    %p152 = scmp.eq.s32.totalorder %s20, 1
    %p153 = por %p151, %p152
    %p155 = scmp.ne.s32.totalorder %s140, %s154
    %p156 = scmp.eq.s32.totalorder %s20, 0
    %p157 = por %p155, %p156
    %s159 = sadd.s32 %s158, 1
    %p162 = scmp.eq.s32.totalorder %s14, 1
    %p163 = scmp.ne.s32.totalorder %s158, %s160
    %p164 = scmp.eq.s32.totalorder %s14, 0
    %p165 = por %p163, %p164
    %p166 = scmp.ne.s32.totalorder %s158, %s160
    %p167 = scmp.eq.s32.totalorder %s19, 1
    %p168 = por %p166, %p167
    %p169 = scmp.ne.s32.totalorder %s160, %s161
    %p170 = scmp.eq.s32.totalorder %s19, 0
    %p171 = por %p169, %p170
    %p172 = scmp.ne.s32.totalorder %s160, %s161
    %p173 = scmp.eq.s32.totalorder %s20, 1
    %p174 = por %p172, %p173
    %p176 = scmp.ne.s32.totalorder %s161, %s175
    %p177 = scmp.eq.s32.totalorder %s20, 0
    %p178 = por %p176, %p177
    %s180 = sadd.s32 %s179, 1
    %p183 = scmp.eq.s32.totalorder %s14, 1
    %p184 = scmp.ne.s32.totalorder %s179, %s181
    %p185 = scmp.eq.s32.totalorder %s14, 0
    %p186 = por %p184, %p185
    %p187 = scmp.ne.s32.totalorder %s179, %s181
    %p188 = scmp.eq.s32.totalorder %s19, 1
    %p189 = por %p187, %p188
    %p190 = scmp.ne.s32.totalorder %s181, %s182
    %p191 = scmp.eq.s32.totalorder %s19, 0
    %p192 = por %p190, %p191
    %p193 = scmp.ne.s32.totalorder %s181, %s182
    %p194 = scmp.eq.s32.totalorder %s20, 1
    %p195 = por %p193, %p194
    %p197 = scmp.ne.s32.totalorder %s182, %s196
    %p198 = scmp.eq.s32.totalorder %s20, 0
    %p199 = por %p197, %p198
    %s200 = ssub.s32 %s14, %s21
    %p201 = scmp.eq.s32.totalorder %s200, 0
    %s203 = sadd.s32 %s202, 1
    %s204 = scalar_select %p201, %s202, %s203
    %p207 = pneg %p201
    %p208 = scmp.eq.s32.totalorder %s14, 1
    %p209 = por %p207, %p208
    %p210 = scmp.ne.s32.totalorder %s202, %s205
    %p211 = scmp.eq.s32.totalorder %s14, 0
    %p212 = por %p210, %p211
    %p213 = scmp.ne.s32.totalorder %s202, %s205
    %p214 = scmp.eq.s32.totalorder %s19, 1
    %p215 = por %p213, %p214
    %p216 = scmp.ne.s32.totalorder %s205, %s206
    %p217 = scmp.eq.s32.totalorder %s19, 0
    %p218 = por %p216, %p217
    %p219 = scmp.ne.s32.totalorder %s205, %s206
    %p220 = scmp.eq.s32.totalorder %s20, 1
    %p221 = por %p219, %p220
    %p223 = scmp.ne.s32.totalorder %s206, %s222
    %p224 = scmp.eq.s32.totalorder %s20, 0
    %p225 = por %p223, %p224
    %p226 = scmp.le.s32.totalorder 1, %s14
    %p227 = scmp.lt.s32.totalorder %s14, 3
    %p228 = pnand %p226, %p227
    %p229 = pneg %p228
    // Predicated region
    $region9: #{attentive_pooler_forward.10} parent=5 // pred_check
      _
    $region10: #{attentive_pooler_forward.10} parent=5 // pred_check_branch
      %231 = sbr.rel (%p228) target = $region12
    $region11: #{attentive_pooler_forward.10} parent=5 // pred_region
      %s232 = ssub.s32 %s14, 1
      // Predicated region
      $region13: #{attentive_pooler_forward.10} parent=11 // pred_check
        %p233 = pneg %p87
      $region14: #{attentive_pooler_forward.10} parent=11 // pred_check_branch
        %235 = sbr.rel (%p233) target = $region16
      $region15: #{attentive_pooler_forward.10} parent=11 // pred_region
        _
      $region16: #{attentive_pooler_forward.10} parent=11 // pred_fallthru
        _
      // Predicated region
      $region17: #{attentive_pooler_forward.10} parent=11 // pred_check
        %p236 = pneg %p108
      $region18: #{attentive_pooler_forward.10} parent=11 // pred_check_branch
        %238 = sbr.rel (%p236) target = $region20
      $region19: #{attentive_pooler_forward.10} parent=11 // pred_region
        _
      $region20: #{attentive_pooler_forward.10} parent=11 // pred_fallthru
        _
      // Predicated region
      $region21: #{attentive_pooler_forward.10} parent=11 // pred_check
        %p239 = pneg %p129
      $region22: #{attentive_pooler_forward.10} parent=11 // pred_check_branch
        %241 = sbr.rel (%p239) target = $region24
      $region23: #{attentive_pooler_forward.10} parent=11 // pred_region
        _
      $region24: #{attentive_pooler_forward.10} parent=11 // pred_fallthru
        _
      // Predicated region
      $region25: #{attentive_pooler_forward.10} parent=11 // pred_check
        %p242 = pneg %p150
      $region26: #{attentive_pooler_forward.10} parent=11 // pred_check_branch
        %244 = sbr.rel (%p242) target = $region28
      $region27: #{attentive_pooler_forward.10} parent=11 // pred_region
        _
      $region28: #{attentive_pooler_forward.10} parent=11 // pred_fallthru
        _
      // Predicated region
      $region29: #{attentive_pooler_forward.10} parent=11 // pred_check
        %p245 = pneg %p171
      $region30: #{attentive_pooler_forward.10} parent=11 // pred_check_branch
        %247 = sbr.rel (%p245) target = $region32
      $region31: #{attentive_pooler_forward.10} parent=11 // pred_region
        _
      $region32: #{attentive_pooler_forward.10} parent=11 // pred_fallthru
        _
      // Predicated region
      $region33: #{attentive_pooler_forward.10} parent=11 // pred_check
        %p248 = pneg %p192
      $region34: #{attentive_pooler_forward.10} parent=11 // pred_check_branch
        %250 = sbr.rel (%p248) target = $region36
      $region35: #{attentive_pooler_forward.10} parent=11 // pred_region
        _
      $region36: #{attentive_pooler_forward.10} parent=11 // pred_fallthru
        _
    $region12: #{attentive_pooler_forward.10} parent=5 // pred_fallthru
      _
    %p251 = scmp.lt.s32.totalorder %s14, 2
    // Predicated region
    $region37: #{attentive_pooler_forward.10} parent=5 // pred_check
      %p252 = pneg %p251
    $region38: #{attentive_pooler_forward.10} parent=5 // pred_check_branch
      %254 = sbr.rel (%p252) target = $region40
    $region39: #{attentive_pooler_forward.10} parent=5 // pred_region
      // Predicated region
      $region41: #{attentive_pooler_forward.10} parent=39 // pred_check
        %p255 = pneg %p34
      $region42: #{attentive_pooler_forward.10} parent=39 // pred_check_branch
        %257 = sbr.rel (%p255) target = $region44
      $region43: #{attentive_pooler_forward.10} parent=39 // pred_region
        %p258 = scmp.lt.s32.totalorder %s14, 1
        %s259 = scalar_select %p258, %s14, 1
        %s260 = smul.addr %s259, 8
        %s261 = scalar_lea.vmem %s0, %s260
      $region44: #{attentive_pooler_forward.10} parent=39 // pred_fallthru
        _
      // Predicated region
      $region45: #{attentive_pooler_forward.10} parent=39 // pred_check
        %p262 = pneg %p60
      $region46: #{attentive_pooler_forward.10} parent=39 // pred_check_branch
        %264 = sbr.rel (%p262) target = $region48
      $region47: #{attentive_pooler_forward.10} parent=39 // pred_region
        %p265 = scmp.lt.s32.totalorder %s14, 1
        %s266 = scalar_select %p265, %s14, 1
        %s267 = smul.addr %s266, 8
        %s268 = scalar_lea.vmem %s1, %s267
      $region48: #{attentive_pooler_forward.10} parent=39 // pred_fallthru
        _
    $region40: #{attentive_pooler_forward.10} parent=5 // pred_fallthru
      _
    %p269 = scmp.le.s32.totalorder 1, %s14
    %p270 = scmp.lt.s32.totalorder %s14, 3
    %p271 = pnand %p269, %p270
    %p272 = pneg %p271
    // Predicated region
    $region49: #{attentive_pooler_forward.10} parent=5 // pred_check
      _
    $region50: #{attentive_pooler_forward.10} parent=5 // pred_check_branch
      %274 = sbr.rel (%p271) target = $region52
    $region51: #{attentive_pooler_forward.10} parent=5 // pred_region
      %s275 = ssub.s32 %s14, 1
      %p276 = scmp.lt.s32.totalorder %s19, 1
      %s277 = scalar_select %p276, %s19, 1
      %s278 = smul.addr %s277, 8
      %s279 = scalar_lea.vmem %s0, %s278
      %p280 = pneg %p40
      %p281 = pneg %p37
      %p282 = scmp.lt.s32.totalorder %s19, 1
      %s283 = scalar_select %p282, %s19, 1
      %s284 = smul.addr %s283, 8
      %s285 = scalar_lea.vmem %s1, %s284
      %p286 = pneg %p66
      %p287 = pneg %p63
      %p288 = pneg %p87
      %p289 = pneg %p84
      %p290 = pneg %p108
      %p291 = pneg %p105
      %p292 = pneg %p129
      %p293 = pneg %p126
      %p294 = pneg %p150
      %p295 = pneg %p147
      %p296 = pneg %p171
      %p297 = pneg %p168
      %p298 = pneg %p192
      %p299 = pneg %p189
      %p300 = pneg %p218
      %p301 = pneg %p215
      %p302 = scmp.lt.s32.totalorder %s19, 1
      %s303 = scalar_select %p302, %s19, 1
      %s304 = smul.addr %s303, 8
      %s305 = scalar_lea.vmem %s8, %s304
      %p306 = scmp.lt.s32.totalorder %s19, 1
      %s307 = scalar_select %p306, %s19, 1
      %s308 = smul.addr %s307, 8
      %s309 = scalar_lea.vmem %s0, %s308
      %p310 = scmp.lt.s32.totalorder %s19, 1
      %s311 = scalar_select %p310, %s19, 1
      %s312 = smul.addr %s311, 8
      %s313 = scalar_lea.vmem %s1, %s312
      %p314 = scmp.lt.s32.totalorder %s19, 1
      %s315 = scalar_select %p314, %s19, 1
      %s316 = smul.addr %s315, 8
      %s317 = scalar_lea.vmem %s8, %s316
      %v318 = vld [vmem:[%s309] sm:$0xff]
      %v319 = vld [vmem:[%s313] sm:$0xff]
      %v320 = vadd.f32 %v318, %v319
      %v321 = vld [vmem:[%s2] sm:$0x1]
      %v322 = vld [vmem:[%s3] sm:$0x1]
      %vm323 = vcmask 261120
      %v324 = vsel %vm323, %v320, 0.0
      %325 = vadd.xlane.f32.xlu0 %v324
      %v326 = vpop.xlane.xlu0 %325
      %v327 = vrcp.pop 32.0
      %v328 = vmul.f32 %v326, %v327
      %v329 = vsub.f32 %v320, %v328
      %v330 = vmul.f32 %v329, %v329
      %v331 = vsel %vm323, %v330, 0.0
      %332 = vadd.xlane.f32.xlu0 %v331
      %v333 = vpop.xlane.xlu0 %332
      %v334 = vmul.f32 %v333, %v327
      %v335 = vadd.f32 %v334, 1e-06
      %v336 = vrsqrt.pop %v335
      %v337 = vmul.f32 %v329, %v336
      %v339 = vlaneseq
      %v340 = vshrl.u32 %v339, 7
      %v341 = vsub.s32 0, %v340
      %v342 = vrot.slane %v321, %v341
      %v344 = vmul.f32 %v337, %v342
      %v346 = vlaneseq
      %v347 = vshrl.u32 %v346, 7
      %v348 = vsub.s32 0, %v347
      %v349 = vrot.slane %v322, %v348
      %v351 = vadd.f32 %v344, %v349
      %v352 = vld [vmem:[%s4] sm:$0xff]
      %v353 = vld [vmem:[%s4 + $0x8] sm:$0xff]
      %v354 = vld [vmem:[%s4 + $0x10] sm:$0xff]
      %v355 = vld [vmem:[%s4 + $0x18] sm:$0xff]
      %v356 = vld [vmem:[%s5] sm:$0x1]
      %v358 = vlaneseq
      %v359 = vshrl.u32 %v358, 7
      %v360 = vsub.s32 0, %v359
      %v361 = vrot.slane %v356, %v360
      %v364 = vsel %vm323, %v351, 0
      %366 = vmatprep.subr.mxu0 0.0
      %367 = vmatpush1.msra.mxu0 0.0
      %368 = vmatprep.subr.mxu0 0.0
      %369 = vmatpush1.msra.mxu0 0.0
      %370 = vmatprep.subr.mxu0 0.0
      %371 = vmatpush1.msra.mxu0 0.0
      %372 = vmatprep.subr.mxu0 0.0
      %373 = vmatpush1.msra.mxu0 0.0
      %374 = vmatprep.subr.mxu0 0.0
      %375 = vmatpush1.msra.mxu0 0.0
      %376 = vmatprep.subr.mxu0 0.0
      %377 = vmatpush1.msra.mxu0 0.0
      %378 = vmatprep.subr.mxu0 0.0
      %379 = vmatpush1.msra.mxu0 0.0
      %380 = vmatprep.subr.mxu0 0.0
      %381 = vmatpush1.msra.mxu0 0.0
      %382 = vmatprep.subr.mxu0 0.0
      %383 = vmatpush1.msra.mxu0 0.0
      %384 = vmatprep.subr.mxu0 0.0
      %385 = vmatpush1.msra.mxu0 0.0
      %386 = vmatprep.subr.mxu0 0.0
      %387 = vmatpush1.msra.mxu0 0.0
      %388 = vmatprep.subr.mxu0 0.0
      %389 = vmatpush1.msra.mxu0 0.0
      %390 = vmatprep.subr.mxu0 0.0
      %391 = vmatpush1.msra.mxu0 %v355
      %392 = vmatprep.subr.mxu0 0.0
      %393 = vmatpush1.msra.mxu0 %v354
      %394 = vmatprep.subr.mxu0 0.0
      %395 = vmatpush1.msra.mxu0 %v353
      %396 = vmatprep.subr.mxu0 0.0
      %397 = vmatpush1.msra.mxu0 %v352
      %398 = vmatprep.subr.mxu0 0.0
      %399 = vmatpush2.msra.mxu0 0.0
      %400 = vmatprep.subr.mxu0 0.0
      %401 = vmatpush2.msra.mxu0 0.0
      %402 = vmatprep.subr.mxu0 0.0
      %403 = vmatpush2.msra.mxu0 0.0
      %404 = vmatprep.subr.mxu0 0.0
      %405 = vmatpush2.msra.mxu0 0.0
      %406 = vmatprep.subr.mxu0 0.0
      %407 = vmatpush2.msra.mxu0 0.0
      %408 = vmatprep.subr.mxu0 0.0
      %409 = vmatpush2.msra.mxu0 0.0
      %410 = vmatprep.subr.mxu0 0.0
      %411 = vmatpush2.msra.mxu0 0.0
      %412 = vmatprep.subr.mxu0 0.0
      %413 = vmatpush2.msra.mxu0 0.0
      %414 = vmatprep.subr.mxu0 0.0
      %415 = vmatpush2.msra.mxu0 0.0
      %416 = vmatprep.subr.mxu0 0.0
      %417 = vmatpush2.msra.mxu0 0.0
      %418 = vmatprep.subr.mxu0 0.0
      %419 = vmatpush2.msra.mxu0 0.0
      %420 = vmatprep.subr.mxu0 0.0
      %421 = vmatpush2.msra.mxu0 0.0
      %422 = vmatprep.subr.mxu0 0.0
      %423 = vmatpush2.msra.mxu0 0.0
      %424 = vmatprep.subr.mxu0 0.0
      %425 = vmatpush2.msra.mxu0 0.0
      %426 = vmatprep.subr.mxu0 0.0
      %427 = vmatpush2.msra.mxu0 0.0
      %428 = vmatprep.subr.mxu0 0.0
      %429 = vmatpush2.msra.mxu0 0.0
      %430 = vmatprep.mubr.f32.mxu0 0.0
      %431 = vmatmul.mubr.f32.gmra.mxu0 %v364
      %v432 = vpop.f32.mrf.mxu0
      %v433 = vadd.f32 %v361, %v432
      %v434 = vpop.f32.mrf.mxu0
      %435 = vdwg.mxu0
      %v436 = vmul.f32 %v433, 0.5
      %v437 = vmul.f32 %v433, 0.70710677
      %vm438 = vcmp.lt.f32.partialorder %v437, 0.0
      %v439 = vsel %vm438, -1.0, 1.0
      %v440 = vand.u32 2147483647, %v437
      %v441 = vmul.f32 %v440, 0.3275911
      %v442 = vadd.f32 %v441, 1.0
      %v443 = vrcp.pop %v442
      %v444 = vmul.f32 1.0, %v443
      %v445 = vmul.f32 %v444, 1.0614054
      %v446 = vadd.f32 %v445, -1.4531521
      %v447 = vmul.f32 %v446, %v444
      %v448 = vadd.f32 %v447, 1.4214138
      %v449 = vmul.f32 %v448, %v444
      %v450 = vadd.f32 %v449, -0.28449672
      %v451 = vmul.f32 %v450, %v444
      %v452 = vadd.f32 %v451, 0.2548296
      %v453 = vmul.f32 %v452, %v444
      %v454 = vsub.f32 0.0, %v440
      %v455 = vmul.f32 %v454, %v440
      %v456 = vmul.f32 %v455, 1.442695
      %v457 = vpow.pop %v456
      %v458 = vmul.f32 %v453, %v457
      %v459 = vsub.f32 1.0, %v458
      %v460 = vmul.f32 %v439, %v459
      %v461 = vadd.f32 %v460, 1.0
      %v462 = vmul.f32 %v436, %v461
      %v463 = vld [vmem:[%s6] sm:$0xff]
      %v464 = vld [vmem:[%s6 + $0x8] sm:$0xff]
      %v465 = vld [vmem:[%s6 + $0x10] sm:$0xff]
      %v466 = vld [vmem:[%s6 + $0x18] sm:$0xff]
      %v467 = vld [vmem:[%s6 + $0x20] sm:$0xff]
      %v468 = vld [vmem:[%s6 + $0x28] sm:$0xff]
      %v469 = vld [vmem:[%s6 + $0x30] sm:$0xff]
      %v470 = vld [vmem:[%s6 + $0x38] sm:$0xff]
      %v471 = vld [vmem:[%s6 + $0x40] sm:$0xff]
      %v472 = vld [vmem:[%s6 + $0x48] sm:$0xff]
      %v473 = vld [vmem:[%s6 + $0x50] sm:$0xff]
      %v474 = vld [vmem:[%s6 + $0x58] sm:$0xff]
      %v475 = vld [vmem:[%s6 + $0x60] sm:$0xff]
      %v476 = vld [vmem:[%s6 + $0x68] sm:$0xff]
      %v477 = vld [vmem:[%s6 + $0x70] sm:$0xff]
      %v478 = vld [vmem:[%s6 + $0x78] sm:$0xff]
      %v479 = vld [vmem:[%s7] sm:$0x1]
      %v481 = vlaneseq
      %v482 = vshrl.u32 %v481, 7
      %v483 = vsub.s32 0, %v482
      %v484 = vrot.slane %v479, %v483
      %486 = vmatprep.subr.mxu0 0.0
      %487 = vmatpush1.msra.mxu0 %v478
      %488 = vmatprep.subr.mxu0 0.0
      %489 = vmatpush1.msra.mxu0 %v477
      %490 = vmatprep.subr.mxu0 0.0
      %491 = vmatpush1.msra.mxu0 %v476
      %492 = vmatprep.subr.mxu0 0.0
      %493 = vmatpush1.msra.mxu0 %v475
      %494 = vmatprep.subr.mxu0 0.0
      %495 = vmatpush1.msra.mxu0 %v474
      %496 = vmatprep.subr.mxu0 0.0
      %497 = vmatpush1.msra.mxu0 %v473
      %498 = vmatprep.subr.mxu0 0.0
      %499 = vmatpush1.msra.mxu0 %v472
      %500 = vmatprep.subr.mxu0 0.0
      %501 = vmatpush1.msra.mxu0 %v471
      %502 = vmatprep.subr.mxu0 0.0
      %503 = vmatpush1.msra.mxu0 %v470
      %504 = vmatprep.subr.mxu0 0.0
      %505 = vmatpush1.msra.mxu0 %v469
      %506 = vmatprep.subr.mxu0 0.0
      %507 = vmatpush1.msra.mxu0 %v468
      %508 = vmatprep.subr.mxu0 0.0
      %509 = vmatpush1.msra.mxu0 %v467
      %510 = vmatprep.subr.mxu0 0.0
      %511 = vmatpush1.msra.mxu0 %v466
      %512 = vmatprep.subr.mxu0 0.0
      %513 = vmatpush1.msra.mxu0 %v465
      %514 = vmatprep.subr.mxu0 0.0
      %515 = vmatpush1.msra.mxu0 %v464
      %516 = vmatprep.subr.mxu0 0.0
      %517 = vmatpush1.msra.mxu0 %v463
      %518 = vmatprep.subr.mxu0 0.0
      %519 = vmatpush2.msra.mxu0 0.0
      %520 = vmatprep.subr.mxu0 0.0
      %521 = vmatpush2.msra.mxu0 0.0
      %522 = vmatprep.subr.mxu0 0.0
      %523 = vmatpush2.msra.mxu0 0.0
      %524 = vmatprep.subr.mxu0 0.0
      %525 = vmatpush2.msra.mxu0 0.0
      %526 = vmatprep.subr.mxu0 0.0
      %527 = vmatpush2.msra.mxu0 0.0
      %528 = vmatprep.subr.mxu0 0.0
      %529 = vmatpush2.msra.mxu0 0.0
      %530 = vmatprep.subr.mxu0 0.0
      %531 = vmatpush2.msra.mxu0 0.0
      %532 = vmatprep.subr.mxu0 0.0
      %533 = vmatpush2.msra.mxu0 0.0
      %534 = vmatprep.subr.mxu0 0.0
      %535 = vmatpush2.msra.mxu0 0.0
      %536 = vmatprep.subr.mxu0 0.0
      %537 = vmatpush2.msra.mxu0 0.0
      %538 = vmatprep.subr.mxu0 0.0
      %539 = vmatpush2.msra.mxu0 0.0
      %540 = vmatprep.subr.mxu0 0.0
      %541 = vmatpush2.msra.mxu0 0.0
      %542 = vmatprep.subr.mxu0 0.0
      %543 = vmatpush2.msra.mxu0 0.0
      %544 = vmatprep.subr.mxu0 0.0
      %545 = vmatpush2.msra.mxu0 0.0
      %546 = vmatprep.subr.mxu0 0.0
      %547 = vmatpush2.msra.mxu0 0.0
      %548 = vmatprep.subr.mxu0 0.0
      %549 = vmatpush2.msra.mxu0 0.0
      %550 = vmatprep.mubr.f32.mxu0 0.0
      %551 = vmatmul.mubr.f32.gmra.mxu0 %v462
      %v552 = vpop.f32.mrf.mxu0
      %v553 = vadd.f32 %v484, %v552
      %v554 = vpop.f32.mrf.mxu0
      %555 = vdwg.mxu0
      %v556 = vadd.f32 %v320, %v553
      %557 = vst.msk [vmem:[%s317] sm:$0xff] %vm323, %v556
      %p558 = scmp.lt.s32.totalorder %s19, 1
      %s559 = scalar_select %p558, %s19, 1
      %s560 = smul.addr %s559, 8
      %s561 = scalar_lea.vmem %s8, %s560
      // Predicated region
      $region53: #{attentive_pooler_forward.10} parent=51 // pred_check
        %p562 = pneg %p215
      $region54: #{attentive_pooler_forward.10} parent=51 // pred_check_branch
        %564 = sbr.rel (%p562) target = $region56
      $region55: #{attentive_pooler_forward.10} parent=51 // pred_region
        _
      $region56: #{attentive_pooler_forward.10} parent=51 // pred_fallthru
        _
    $region52: #{attentive_pooler_forward.10} parent=5 // pred_fallthru
      _
    %p565 = scmp.le.s32.totalorder 2, %s14
    // Predicated region
    $region57: #{attentive_pooler_forward.10} parent=5 // pred_check
      %p566 = pneg %p565
    $region58: #{attentive_pooler_forward.10} parent=5 // pred_check_branch
      %568 = sbr.rel (%p566) target = $region60
    $region59: #{attentive_pooler_forward.10} parent=5 // pred_region
      %s569 = ssub.s32 %s14, 2
      // Predicated region
      $region61: #{attentive_pooler_forward.10} parent=59 // pred_check
        %p570 = pneg %p221
      $region62: #{attentive_pooler_forward.10} parent=59 // pred_check_branch
        %572 = sbr.rel (%p570) target = $region64
      $region63: #{attentive_pooler_forward.10} parent=59 // pred_region
        %p573 = scmp.lt.s32.totalorder %s20, 1
        %s574 = scalar_select %p573, %s20, 1
        %s575 = smul.addr %s574, 8
        %s576 = scalar_lea.vmem %s8, %s575
      $region64: #{attentive_pooler_forward.10} parent=59 // pred_fallthru
        _
    $region60: #{attentive_pooler_forward.10} parent=5 // pred_fallthru
      _
  $region6: #{attentive_pooler_forward.10} parent=0 // loop_footer
    %s18 = sadd.s32 1, %s14
  $region7: #{attentive_pooler_forward.10} parent=0 // loop_footer_branch
    %13 = sbr.rel target = $region3
  $region8: #{attentive_pooler_forward.10} parent=0 // loop_exit
    _

// kernel: attentive_pooler_forward.9
$region0: #{attentive_pooler_forward.9}
  #allocation0 [shape = 'u32[]', space=smem, size = 0x4, offset = 0x4, fixed_abs, tag = 'smem constant byte address 0x4 - core index']
  #allocation1 [shape = 'u32[144,128]{1,0:T(1,128)}', space=vmem, size = 0x12000, scoped, tag = 'internal scratch']
  %s0 = inlined_call_operand.vmem [shape: f32[2,8,96], index: 0, kind: input, shape index: {}]
  %s1 = inlined_call_operand.vmem [shape: f32[32,32], index: 1, kind: input, shape index: {}]
  %s2 = inlined_call_operand.vmem [shape: f32[1,32], index: 2, kind: input, shape index: {}]
  %s3 = inlined_call_operand.vmem [shape: f32[2,8,32], index: 3, kind: output, shape index: {}]
  %s4 = sld [smem:[#allocation0]]
  $region45: #{attentive_pooler_forward.9} parent=0
    _
  %s6 = ssub.s32 1, %s4
  %s7 = scalar_select 0, %s6, %s4
  loop: start=0, step=1, limit=4
  $region2: #{attentive_pooler_forward.9} parent=0 // loop_pre_header
    _
  $region3: #{attentive_pooler_forward.9} parent=0 // loop_header
    %s9 = sphi 0, %s13
    %p10 = scmp.ge.s32.totalorder %s9, 4
    %s19 = sphi 0, %s21
    %s22 = sphi 0, %s19
    %s23 = sphi 0, %s22
    %s39 = sphi 0, %s23
    %s43 = sphi 0, %s43
    %s45 = sphi 0, %s43
    %s46 = sphi 0, %s45
    %s60 = sphi 0, %s46
    %s64 = sphi 0, %s64
    %s66 = sphi 0, %s64
    %s67 = sphi 0, %s66
    %s81 = sphi 0, %s67
    %s87 = sphi 0, %s89
    %s90 = sphi 0, %s87
    %s91 = sphi 0, %s90
    %s107 = sphi 0, %s91
  $region4: #{attentive_pooler_forward.9} parent=0 // loop_header_branch
    %12 = sbr.rel (%p10) target = $region8
  $region5: #{attentive_pooler_forward.9} parent=0 // loop_body
    %s14 = ssub.s32 %s9, 1
    %s15 = ssub.s32 %s9, 2
    %s16 = sadd.s32 %s9, 1
    %s17 = ssub.s32 %s9, %s16
    %p18 = scmp.eq.s32.totalorder %s17, 0
    %s20 = sadd.s32 %s19, 1
    %s21 = scalar_select %p18, %s19, %s20
    %p24 = pneg %p18
    %p25 = scmp.eq.s32.totalorder %s9, 1
    %p26 = por %p24, %p25
    %p27 = scmp.ne.s32.totalorder %s19, %s22
    %p28 = scmp.eq.s32.totalorder %s9, 0
    %p29 = por %p27, %p28
    %p30 = scmp.ne.s32.totalorder %s19, %s22
    %p31 = scmp.eq.s32.totalorder %s14, 1
    %p32 = por %p30, %p31
    %p33 = scmp.ne.s32.totalorder %s22, %s23
    %p34 = scmp.eq.s32.totalorder %s14, 0
    %p35 = por %p33, %p34
    %p36 = scmp.ne.s32.totalorder %s22, %s23
    %p37 = scmp.eq.s32.totalorder %s15, 1
    %p38 = por %p36, %p37
    %p40 = scmp.ne.s32.totalorder %s23, %s39
    %p41 = scmp.eq.s32.totalorder %s15, 0
    %p42 = por %p40, %p41
    %s44 = sadd.s32 %s43, 1
    %p47 = scmp.eq.s32.totalorder %s9, 1
    %p48 = scmp.ne.s32.totalorder %s43, %s45
    %p49 = scmp.eq.s32.totalorder %s9, 0
    %p50 = por %p48, %p49
    %p51 = scmp.ne.s32.totalorder %s43, %s45
    %p52 = scmp.eq.s32.totalorder %s14, 1
    %p53 = por %p51, %p52
    %p54 = scmp.ne.s32.totalorder %s45, %s46
    %p55 = scmp.eq.s32.totalorder %s14, 0
    %p56 = por %p54, %p55
    %p57 = scmp.ne.s32.totalorder %s45, %s46
    %p58 = scmp.eq.s32.totalorder %s15, 1
    %p59 = por %p57, %p58
    %p61 = scmp.ne.s32.totalorder %s46, %s60
    %p62 = scmp.eq.s32.totalorder %s15, 0
    %p63 = por %p61, %p62
    %s65 = sadd.s32 %s64, 1
    %p68 = scmp.eq.s32.totalorder %s9, 1
    %p69 = scmp.ne.s32.totalorder %s64, %s66
    %p70 = scmp.eq.s32.totalorder %s9, 0
    %p71 = por %p69, %p70
    %p72 = scmp.ne.s32.totalorder %s64, %s66
    %p73 = scmp.eq.s32.totalorder %s14, 1
    %p74 = por %p72, %p73
    %p75 = scmp.ne.s32.totalorder %s66, %s67
    %p76 = scmp.eq.s32.totalorder %s14, 0
    %p77 = por %p75, %p76
    %p78 = scmp.ne.s32.totalorder %s66, %s67
    %p79 = scmp.eq.s32.totalorder %s15, 1
    %p80 = por %p78, %p79
    %p82 = scmp.ne.s32.totalorder %s67, %s81
    %p83 = scmp.eq.s32.totalorder %s15, 0
    %p84 = por %p82, %p83
    %s85 = ssub.s32 %s9, %s16
    %p86 = scmp.eq.s32.totalorder %s85, 0
    %s88 = sadd.s32 %s87, 1
    %s89 = scalar_select %p86, %s87, %s88
    %p92 = pneg %p86
    %p93 = scmp.eq.s32.totalorder %s9, 1
    %p94 = por %p92, %p93
    %p95 = scmp.ne.s32.totalorder %s87, %s90
    %p96 = scmp.eq.s32.totalorder %s9, 0
    %p97 = por %p95, %p96
    %p98 = scmp.ne.s32.totalorder %s87, %s90
    %p99 = scmp.eq.s32.totalorder %s14, 1
    %p100 = por %p98, %p99
    %p101 = scmp.ne.s32.totalorder %s90, %s91
    %p102 = scmp.eq.s32.totalorder %s14, 0
    %p103 = por %p101, %p102
    %p104 = scmp.ne.s32.totalorder %s90, %s91
    %p105 = scmp.eq.s32.totalorder %s15, 1
    %p106 = por %p104, %p105
    %p108 = scmp.ne.s32.totalorder %s91, %s107
    %p109 = scmp.eq.s32.totalorder %s15, 0
    %p110 = por %p108, %p109
    %p111 = scmp.le.s32.totalorder 1, %s9
    %p112 = scmp.lt.s32.totalorder %s9, 3
    %p113 = pnand %p111, %p112
    %p114 = pneg %p113
    // Predicated region
    $region9: #{attentive_pooler_forward.9} parent=5 // pred_check
      _
    $region10: #{attentive_pooler_forward.9} parent=5 // pred_check_branch
      %116 = sbr.rel (%p113) target = $region12
    $region11: #{attentive_pooler_forward.9} parent=5 // pred_region
      %s117 = ssub.s32 %s9, 1
      // Predicated region
      $region13: #{attentive_pooler_forward.9} parent=11 // pred_check
        %p118 = pneg %p56
      $region14: #{attentive_pooler_forward.9} parent=11 // pred_check_branch
        %120 = sbr.rel (%p118) target = $region16
      $region15: #{attentive_pooler_forward.9} parent=11 // pred_region
        _
      $region16: #{attentive_pooler_forward.9} parent=11 // pred_fallthru
        _
      // Predicated region
      $region17: #{attentive_pooler_forward.9} parent=11 // pred_check
        %p121 = pneg %p77
      $region18: #{attentive_pooler_forward.9} parent=11 // pred_check_branch
        %123 = sbr.rel (%p121) target = $region20
      $region19: #{attentive_pooler_forward.9} parent=11 // pred_region
        _
      $region20: #{attentive_pooler_forward.9} parent=11 // pred_fallthru
        _
    $region12: #{attentive_pooler_forward.9} parent=5 // pred_fallthru
      _
    %p124 = scmp.lt.s32.totalorder %s9, 2
    // Predicated region
    $region21: #{attentive_pooler_forward.9} parent=5 // pred_check
      %p125 = pneg %p124
    $region22: #{attentive_pooler_forward.9} parent=5 // pred_check_branch
      %127 = sbr.rel (%p125) target = $region24
    $region23: #{attentive_pooler_forward.9} parent=5 // pred_region
      // Predicated region
      $region25: #{attentive_pooler_forward.9} parent=23 // pred_check
        %p128 = pneg %p29
      $region26: #{attentive_pooler_forward.9} parent=23 // pred_check_branch
        %130 = sbr.rel (%p128) target = $region28
      $region27: #{attentive_pooler_forward.9} parent=23 // pred_region
        %p131 = scmp.lt.s32.totalorder %s9, 1
        %s132 = scalar_select %p131, %s9, 1
        %s133 = smul.addr %s132, 8
        %s134 = scalar_lea.vmem %s0, %s133
      $region28: #{attentive_pooler_forward.9} parent=23 // pred_fallthru
        _
    $region24: #{attentive_pooler_forward.9} parent=5 // pred_fallthru
      _
    %p135 = scmp.le.s32.totalorder 1, %s9
    %p136 = scmp.lt.s32.totalorder %s9, 3
    %p137 = pnand %p135, %p136
    %p138 = pneg %p137
    // Predicated region
    $region29: #{attentive_pooler_forward.9} parent=5 // pred_check
      _
    $region30: #{attentive_pooler_forward.9} parent=5 // pred_check_branch
      %140 = sbr.rel (%p137) target = $region32
    $region31: #{attentive_pooler_forward.9} parent=5 // pred_region
      %s141 = ssub.s32 %s9, 1
      %p142 = scmp.lt.s32.totalorder %s14, 1
      %s143 = scalar_select %p142, %s14, 1
      %s144 = smul.addr %s143, 8
      %s145 = scalar_lea.vmem %s0, %s144
      %p146 = pneg %p35
      %p147 = pneg %p32
      %p148 = pneg %p56
      %p149 = pneg %p53
      %p150 = pneg %p77
      %p151 = pneg %p74
      %p152 = pneg %p103
      %p153 = pneg %p100
      %p154 = scmp.lt.s32.totalorder %s14, 1
      %s155 = scalar_select %p154, %s14, 1
      %s156 = smul.addr %s155, 8
      %s157 = scalar_lea.vmem %s3, %s156
      %p158 = scmp.lt.s32.totalorder %s14, 1
      %s159 = scalar_select %p158, %s14, 1
      %s160 = smul.addr %s159, 8
      %s161 = scalar_lea.vmem %s0, %s160
      %p162 = scmp.lt.s32.totalorder %s14, 1
      %s163 = scalar_select %p162, %s14, 1
      %s164 = smul.addr %s163, 8
      %s165 = scalar_lea.vmem %s3, %s164
      %v166 = vld [vmem:[%s161] sm:$0xff]
      %168 = vrot.lane.b32.xlu0 %v166, 96
      %v169 = vpop.permute.xlu0 %168
      %vm170 = vcmask 64512
      %v171 = vsel %vm170, %v166, 0
      %v173 = vsel %vm170, %v169, 0
      %175 = vmatprep.subr.mxu0 0.0
      %176 = vmatpush1.xpose.msra.mxu0 0.0
      %177 = vmatprep.subr.mxu0 0.0
      %178 = vmatpush1.xpose.msra.mxu0 0.0
      %179 = vmatprep.subr.mxu0 0.0
      %180 = vmatpush1.xpose.msra.mxu0 0.0
      %181 = vmatprep.subr.mxu0 0.0
      %182 = vmatpush1.xpose.msra.mxu0 0.0
      %183 = vmatprep.subr.mxu0 0.0
      %184 = vmatpush1.xpose.msra.mxu0 0.0
      %185 = vmatprep.subr.mxu0 0.0
      %186 = vmatpush1.xpose.msra.mxu0 0.0
      %187 = vmatprep.subr.mxu0 0.0
      %188 = vmatpush1.xpose.msra.mxu0 0.0
      %189 = vmatprep.subr.mxu0 0.0
      %190 = vmatpush1.xpose.msra.mxu0 0.0
      %191 = vmatprep.subr.mxu0 0.0
      %192 = vmatpush1.xpose.msra.mxu0 0.0
      %193 = vmatprep.subr.mxu0 0.0
      %194 = vmatpush1.xpose.msra.mxu0 0.0
      %195 = vmatprep.subr.mxu0 0.0
      %196 = vmatpush1.xpose.msra.mxu0 0.0
      %197 = vmatprep.subr.mxu0 0.0
      %198 = vmatpush1.xpose.msra.mxu0 0.0
      %199 = vmatprep.subr.mxu0 0.0
      %200 = vmatpush1.xpose.msra.mxu0 0.0
      %201 = vmatprep.subr.mxu0 0.0
      %202 = vmatpush1.xpose.msra.mxu0 0.0
      %203 = vmatprep.subr.mxu0 0.0
      %204 = vmatpush1.xpose.msra.mxu0 0.0
      %205 = vmatprep.subr.mxu0 0.0
      %206 = vmatpush1.xpose.msra.mxu0 %v173
      %207 = vmatprep.subr.mxu0 0.0
      %208 = vmatpush2.xpose.msra.mxu0 0.0
      %209 = vmatprep.subr.mxu0 0.0
      %210 = vmatpush2.xpose.msra.mxu0 0.0
      %211 = vmatprep.subr.mxu0 0.0
      %212 = vmatpush2.xpose.msra.mxu0 0.0
      %213 = vmatprep.subr.mxu0 0.0
      %214 = vmatpush2.xpose.msra.mxu0 0.0
      %215 = vmatprep.subr.mxu0 0.0
      %216 = vmatpush2.xpose.msra.mxu0 0.0
      %217 = vmatprep.subr.mxu0 0.0
      %218 = vmatpush2.xpose.msra.mxu0 0.0
      %219 = vmatprep.subr.mxu0 0.0
      %220 = vmatpush2.xpose.msra.mxu0 0.0
      %221 = vmatprep.subr.mxu0 0.0
      %222 = vmatpush2.xpose.msra.mxu0 0.0
      %223 = vmatprep.subr.mxu0 0.0
      %224 = vmatpush2.xpose.msra.mxu0 0.0
      %225 = vmatprep.subr.mxu0 0.0
      %226 = vmatpush2.xpose.msra.mxu0 0.0
      %227 = vmatprep.subr.mxu0 0.0
      %228 = vmatpush2.xpose.msra.mxu0 0.0
      %229 = vmatprep.subr.mxu0 0.0
      %230 = vmatpush2.xpose.msra.mxu0 0.0
      %231 = vmatprep.subr.mxu0 0.0
      %232 = vmatpush2.xpose.msra.mxu0 0.0
      %233 = vmatprep.subr.mxu0 0.0
      %234 = vmatpush2.xpose.msra.mxu0 0.0
      %235 = vmatprep.subr.mxu0 0.0
      %236 = vmatpush2.xpose.msra.mxu0 0.0
      %237 = vmatprep.subr.mxu0 0.0
      %238 = vmatpush2.xpose.msra.mxu0 0.0
      %239 = vmatprep.mubr.f32.mxu0 0.0
      %240 = vmatmul.mubr.f32.gmra.mxu0 %v171
      %v241 = vpop.f32.mrf.mxu0
      %v242 = vadd.f32 0.0, %v241
      %v243 = vpop.f32.mrf.mxu0
      %244 = vdwg.mxu0
      %v245 = vmul.f32 %v242, 0.35355338
      %v246 = vsel %vm170, %v245, -inf
      %247 = vmax.xlane.f32.xlu0 %v246
      %v248 = vpop.xlane.xlu0 %247
      %v249 = vsub.f32 %v245, %v248
      %v250 = vmul.f32 %v249, 1.442695
      %v251 = vpow.pop %v250
      %v252 = vsel %vm170, %v251, 0.0
      %253 = vadd.xlane.f32.xlu0 %v252
      %v254 = vpop.xlane.xlu0 %253
      %v255 = vrcp.pop %v254
      %v256 = vmul.f32 1.0, %v255
      %v257 = vmul.f32 %v251, %v256
      %258 = vrot.lane.b32.xlu0 %v166, 64
      %v259 = vpop.permute.xlu0 %258
      %v262 = vsel %vm170, %v257, 0
      %264 = vmatprep.subr.mxu0 0.0
      %265 = vmatpush1.msra.mxu0 0.0
      %266 = vmatprep.subr.mxu0 0.0
      %267 = vmatpush1.msra.mxu0 0.0
      %268 = vmatprep.subr.mxu0 0.0
      %269 = vmatpush1.msra.mxu0 0.0
      %270 = vmatprep.subr.mxu0 0.0
      %271 = vmatpush1.msra.mxu0 0.0
      %272 = vmatprep.subr.mxu0 0.0
      %273 = vmatpush1.msra.mxu0 0.0
      %274 = vmatprep.subr.mxu0 0.0
      %275 = vmatpush1.msra.mxu0 0.0
      %276 = vmatprep.subr.mxu0 0.0
      %277 = vmatpush1.msra.mxu0 0.0
      %278 = vmatprep.subr.mxu0 0.0
      %279 = vmatpush1.msra.mxu0 0.0
      %280 = vmatprep.subr.mxu0 0.0
      %281 = vmatpush1.msra.mxu0 0.0
      %282 = vmatprep.subr.mxu0 0.0
      %283 = vmatpush1.msra.mxu0 0.0
      %284 = vmatprep.subr.mxu0 0.0
      %285 = vmatpush1.msra.mxu0 0.0
      %286 = vmatprep.subr.mxu0 0.0
      %287 = vmatpush1.msra.mxu0 0.0
      %288 = vmatprep.subr.mxu0 0.0
      %289 = vmatpush1.msra.mxu0 0.0
      %290 = vmatprep.subr.mxu0 0.0
      %291 = vmatpush1.msra.mxu0 0.0
      %292 = vmatprep.subr.mxu0 0.0
      %293 = vmatpush1.msra.mxu0 0.0
      %294 = vmatprep.subr.mxu0 0.0
      %295 = vmatpush1.msra.mxu0 %v259
      %296 = vmatprep.subr.mxu0 0.0
      %297 = vmatpush2.msra.mxu0 0.0
      %298 = vmatprep.subr.mxu0 0.0
      %299 = vmatpush2.msra.mxu0 0.0
      %300 = vmatprep.subr.mxu0 0.0
      %301 = vmatpush2.msra.mxu0 0.0
      %302 = vmatprep.subr.mxu0 0.0
      %303 = vmatpush2.msra.mxu0 0.0
      %304 = vmatprep.subr.mxu0 0.0
      %305 = vmatpush2.msra.mxu0 0.0
      %306 = vmatprep.subr.mxu0 0.0
      %307 = vmatpush2.msra.mxu0 0.0
      %308 = vmatprep.subr.mxu0 0.0
      %309 = vmatpush2.msra.mxu0 0.0
      %310 = vmatprep.subr.mxu0 0.0
      %311 = vmatpush2.msra.mxu0 0.0
      %312 = vmatprep.subr.mxu0 0.0
      %313 = vmatpush2.msra.mxu0 0.0
      %314 = vmatprep.subr.mxu0 0.0
      %315 = vmatpush2.msra.mxu0 0.0
      %316 = vmatprep.subr.mxu0 0.0
      %317 = vmatpush2.msra.mxu0 0.0
      %318 = vmatprep.subr.mxu0 0.0
      %319 = vmatpush2.msra.mxu0 0.0
      %320 = vmatprep.subr.mxu0 0.0
      %321 = vmatpush2.msra.mxu0 0.0
      %322 = vmatprep.subr.mxu0 0.0
      %323 = vmatpush2.msra.mxu0 0.0
      %324 = vmatprep.subr.mxu0 0.0
      %325 = vmatpush2.msra.mxu0 0.0
      %326 = vmatprep.subr.mxu0 0.0
      %327 = vmatpush2.msra.mxu0 0.0
      %328 = vmatprep.mubr.f32.mxu0 0.0
      %329 = vmatmul.mubr.f32.gmra.mxu0 %v262
      %v330 = vpop.f32.mrf.mxu0
      %v331 = vadd.f32 0.0, %v330
      %v332 = vpop.f32.mrf.mxu0
      %333 = vdwg.mxu0
      %v334 = vld [vmem:[%s1] sm:$0xff]
      %335 = vrot.lane.b32.xlu0 %v166, 120
      %v336 = vpop.permute.xlu0 %335
      %337 = vrot.lane.b32.xlu0 %v166, 88
      %v338 = vpop.permute.xlu0 %337
      %v339 = vsel %vm170, %v336, 0
      %v341 = vsel %vm170, %v338, 0
      %343 = vmatprep.subr.mxu0 0.0
      %344 = vmatpush1.xpose.msra.mxu0 0.0
      %345 = vmatprep.subr.mxu0 0.0
      %346 = vmatpush1.xpose.msra.mxu0 0.0
      %347 = vmatprep.subr.mxu0 0.0
      %348 = vmatpush1.xpose.msra.mxu0 0.0
      %349 = vmatprep.subr.mxu0 0.0
      %350 = vmatpush1.xpose.msra.mxu0 0.0
      %351 = vmatprep.subr.mxu0 0.0
      %352 = vmatpush1.xpose.msra.mxu0 0.0
      %353 = vmatprep.subr.mxu0 0.0
      %354 = vmatpush1.xpose.msra.mxu0 0.0
      %355 = vmatprep.subr.mxu0 0.0
      %356 = vmatpush1.xpose.msra.mxu0 0.0
      %357 = vmatprep.subr.mxu0 0.0
      %358 = vmatpush1.xpose.msra.mxu0 0.0
      %359 = vmatprep.subr.mxu0 0.0
      %360 = vmatpush1.xpose.msra.mxu0 0.0
      %361 = vmatprep.subr.mxu0 0.0
      %362 = vmatpush1.xpose.msra.mxu0 0.0
      %363 = vmatprep.subr.mxu0 0.0
      %364 = vmatpush1.xpose.msra.mxu0 0.0
      %365 = vmatprep.subr.mxu0 0.0
      %366 = vmatpush1.xpose.msra.mxu0 0.0
      %367 = vmatprep.subr.mxu0 0.0
      %368 = vmatpush1.xpose.msra.mxu0 0.0
      %369 = vmatprep.subr.mxu0 0.0
      %370 = vmatpush1.xpose.msra.mxu0 0.0
      %371 = vmatprep.subr.mxu0 0.0
      %372 = vmatpush1.xpose.msra.mxu0 0.0
      %373 = vmatprep.subr.mxu0 0.0
      %374 = vmatpush1.xpose.msra.mxu0 %v341
      %375 = vmatprep.subr.mxu0 0.0
      %376 = vmatpush2.xpose.msra.mxu0 0.0
      %377 = vmatprep.subr.mxu0 0.0
      %378 = vmatpush2.xpose.msra.mxu0 0.0
      %379 = vmatprep.subr.mxu0 0.0
      %380 = vmatpush2.xpose.msra.mxu0 0.0
      %381 = vmatprep.subr.mxu0 0.0
      %382 = vmatpush2.xpose.msra.mxu0 0.0
      %383 = vmatprep.subr.mxu0 0.0
      %384 = vmatpush2.xpose.msra.mxu0 0.0
      %385 = vmatprep.subr.mxu0 0.0
      %386 = vmatpush2.xpose.msra.mxu0 0.0
      %387 = vmatprep.subr.mxu0 0.0
      %388 = vmatpush2.xpose.msra.mxu0 0.0
      %389 = vmatprep.subr.mxu0 0.0
      %390 = vmatpush2.xpose.msra.mxu0 0.0
      %391 = vmatprep.subr.mxu0 0.0
      %392 = vmatpush2.xpose.msra.mxu0 0.0
      %393 = vmatprep.subr.mxu0 0.0
      %394 = vmatpush2.xpose.msra.mxu0 0.0
      %395 = vmatprep.subr.mxu0 0.0
      %396 = vmatpush2.xpose.msra.mxu0 0.0
      %397 = vmatprep.subr.mxu0 0.0
      %398 = vmatpush2.xpose.msra.mxu0 0.0
      %399 = vmatprep.subr.mxu0 0.0
      %400 = vmatpush2.xpose.msra.mxu0 0.0
      %401 = vmatprep.subr.mxu0 0.0
      %402 = vmatpush2.xpose.msra.mxu0 0.0
      %403 = vmatprep.subr.mxu0 0.0
      %404 = vmatpush2.xpose.msra.mxu0 0.0
      %405 = vmatprep.subr.mxu0 0.0
      %406 = vmatpush2.xpose.msra.mxu0 0.0
      %407 = vmatprep.mubr.f32.mxu0 0.0
      %408 = vmatmul.mubr.f32.gmra.mxu0 %v339
      %v409 = vpop.f32.mrf.mxu0
      %v410 = vadd.f32 0.0, %v409
      %v411 = vpop.f32.mrf.mxu0
      %412 = vdwg.mxu0
      %v413 = vmul.f32 %v410, 0.35355338
      %v414 = vsel %vm170, %v413, -inf
      %415 = vmax.xlane.f32.xlu0 %v414
      %v416 = vpop.xlane.xlu0 %415
      %v417 = vsub.f32 %v413, %v416
      %v418 = vmul.f32 %v417, 1.442695
      %v419 = vpow.pop %v418
      %v420 = vsel %vm170, %v419, 0.0
      %421 = vadd.xlane.f32.xlu0 %v420
      %v422 = vpop.xlane.xlu0 %421
      %v423 = vrcp.pop %v422
      %v424 = vmul.f32 1.0, %v423
      %v425 = vmul.f32 %v419, %v424
      %426 = vrot.lane.b32.xlu0 %v166, 56
      %v427 = vpop.permute.xlu0 %426
      %v430 = vsel %vm170, %v425, 0
      %432 = vmatprep.subr.mxu0 0.0
      %433 = vmatpush1.msra.mxu0 0.0
      %434 = vmatprep.subr.mxu0 0.0
      %435 = vmatpush1.msra.mxu0 0.0
      %436 = vmatprep.subr.mxu0 0.0
      %437 = vmatpush1.msra.mxu0 0.0
      %438 = vmatprep.subr.mxu0 0.0
      %439 = vmatpush1.msra.mxu0 0.0
      %440 = vmatprep.subr.mxu0 0.0
      %441 = vmatpush1.msra.mxu0 0.0
      %442 = vmatprep.subr.mxu0 0.0
      %443 = vmatpush1.msra.mxu0 0.0
      %444 = vmatprep.subr.mxu0 0.0
      %445 = vmatpush1.msra.mxu0 0.0
      %446 = vmatprep.subr.mxu0 0.0
      %447 = vmatpush1.msra.mxu0 0.0
      %448 = vmatprep.subr.mxu0 0.0
      %449 = vmatpush1.msra.mxu0 0.0
      %450 = vmatprep.subr.mxu0 0.0
      %451 = vmatpush1.msra.mxu0 0.0
      %452 = vmatprep.subr.mxu0 0.0
      %453 = vmatpush1.msra.mxu0 0.0
      %454 = vmatprep.subr.mxu0 0.0
      %455 = vmatpush1.msra.mxu0 0.0
      %456 = vmatprep.subr.mxu0 0.0
      %457 = vmatpush1.msra.mxu0 0.0
      %458 = vmatprep.subr.mxu0 0.0
      %459 = vmatpush1.msra.mxu0 0.0
      %460 = vmatprep.subr.mxu0 0.0
      %461 = vmatpush1.msra.mxu0 0.0
      %462 = vmatprep.subr.mxu0 0.0
      %463 = vmatpush1.msra.mxu0 %v427
      %464 = vmatprep.subr.mxu0 0.0
      %465 = vmatpush2.msra.mxu0 0.0
      %466 = vmatprep.subr.mxu0 0.0
      %467 = vmatpush2.msra.mxu0 0.0
      %468 = vmatprep.subr.mxu0 0.0
      %469 = vmatpush2.msra.mxu0 0.0
      %470 = vmatprep.subr.mxu0 0.0
      %471 = vmatpush2.msra.mxu0 0.0
      %472 = vmatprep.subr.mxu0 0.0
      %473 = vmatpush2.msra.mxu0 0.0
      %474 = vmatprep.subr.mxu0 0.0
      %475 = vmatpush2.msra.mxu0 0.0
      %476 = vmatprep.subr.mxu0 0.0
      %477 = vmatpush2.msra.mxu0 0.0
      %478 = vmatprep.subr.mxu0 0.0
      %479 = vmatpush2.msra.mxu0 0.0
      %480 = vmatprep.subr.mxu0 0.0
      %481 = vmatpush2.msra.mxu0 0.0
      %482 = vmatprep.subr.mxu0 0.0
      %483 = vmatpush2.msra.mxu0 0.0
      %484 = vmatprep.subr.mxu0 0.0
      %485 = vmatpush2.msra.mxu0 0.0
      %486 = vmatprep.subr.mxu0 0.0
      %487 = vmatpush2.msra.mxu0 0.0
      %488 = vmatprep.subr.mxu0 0.0
      %489 = vmatpush2.msra.mxu0 0.0
      %490 = vmatprep.subr.mxu0 0.0
      %491 = vmatpush2.msra.mxu0 0.0
      %492 = vmatprep.subr.mxu0 0.0
      %493 = vmatpush2.msra.mxu0 0.0
      %494 = vmatprep.subr.mxu0 0.0
      %495 = vmatpush2.msra.mxu0 0.0
      %496 = vmatprep.mubr.f32.mxu0 0.0
      %497 = vmatmul.mubr.f32.gmra.mxu0 %v430
      %v498 = vpop.f32.mrf.mxu0
      %v499 = vadd.f32 0.0, %v498
      %v500 = vpop.f32.mrf.mxu0
      %501 = vdwg.mxu0
      %v502 = vld [vmem:[%s1 + $0x8] sm:$0xff]
      %v504 = vsel %vm170, %v499, 0
      %506 = vmatprep.subr.mxu0 0.0
      %507 = vmatpush1.msra.mxu0 0.0
      %508 = vmatprep.subr.mxu0 0.0
      %509 = vmatpush1.msra.mxu0 0.0
      %510 = vmatprep.subr.mxu0 0.0
      %511 = vmatpush1.msra.mxu0 0.0
      %512 = vmatprep.subr.mxu0 0.0
      %513 = vmatpush1.msra.mxu0 0.0
      %514 = vmatprep.subr.mxu0 0.0
      %515 = vmatpush1.msra.mxu0 0.0
      %516 = vmatprep.subr.mxu0 0.0
      %517 = vmatpush1.msra.mxu0 0.0
      %518 = vmatprep.subr.mxu0 0.0
      %519 = vmatpush1.msra.mxu0 0.0
      %520 = vmatprep.subr.mxu0 0.0
      %521 = vmatpush1.msra.mxu0 0.0
      %522 = vmatprep.subr.mxu0 0.0
      %523 = vmatpush1.msra.mxu0 0.0
      %524 = vmatprep.subr.mxu0 0.0
      %525 = vmatpush1.msra.mxu0 0.0
      %526 = vmatprep.subr.mxu0 0.0
      %527 = vmatpush1.msra.mxu0 0.0
      %528 = vmatprep.subr.mxu0 0.0
      %529 = vmatpush1.msra.mxu0 0.0
      %530 = vmatprep.subr.mxu0 0.0
      %531 = vmatpush1.msra.mxu0 0.0
      %532 = vmatprep.subr.mxu0 0.0
      %533 = vmatpush1.msra.mxu0 0.0
      %534 = vmatprep.subr.mxu0 0.0
      %535 = vmatpush1.msra.mxu0 0.0
      %536 = vmatprep.subr.mxu0 0.0
      %537 = vmatpush1.msra.mxu0 %v502
      %538 = vmatprep.subr.mxu0 0.0
      %539 = vmatpush2.msra.mxu0 0.0
      %540 = vmatprep.subr.mxu0 0.0
      %541 = vmatpush2.msra.mxu0 0.0
      %542 = vmatprep.subr.mxu0 0.0
      %543 = vmatpush2.msra.mxu0 0.0
      %544 = vmatprep.subr.mxu0 0.0
      %545 = vmatpush2.msra.mxu0 0.0
      %546 = vmatprep.subr.mxu0 0.0
      %547 = vmatpush2.msra.mxu0 0.0
      %548 = vmatprep.subr.mxu0 0.0
      %549 = vmatpush2.msra.mxu0 0.0
      %550 = vmatprep.subr.mxu0 0.0
      %551 = vmatpush2.msra.mxu0 0.0
      %552 = vmatprep.subr.mxu0 0.0
      %553 = vmatpush2.msra.mxu0 0.0
      %554 = vmatprep.subr.mxu0 0.0
      %555 = vmatpush2.msra.mxu0 0.0
      %556 = vmatprep.subr.mxu0 0.0
      %557 = vmatpush2.msra.mxu0 0.0
      %558 = vmatprep.subr.mxu0 0.0
      %559 = vmatpush2.msra.mxu0 0.0
      %560 = vmatprep.subr.mxu0 0.0
      %561 = vmatpush2.msra.mxu0 0.0
      %562 = vmatprep.subr.mxu0 0.0
      %563 = vmatpush2.msra.mxu0 0.0
      %564 = vmatprep.subr.mxu0 0.0
      %565 = vmatpush2.msra.mxu0 0.0
      %566 = vmatprep.subr.mxu0 0.0
      %567 = vmatpush2.msra.mxu0 0.0
      %568 = vmatprep.subr.mxu0 0.0
      %569 = vmatpush2.msra.mxu0 0.0
      %570 = vmatprep.mubr.f32.mxu0 0.0
      %571 = vmatmul.mubr.f32.gmra.mxu0 %v504
      %v572 = vpop.f32.mrf.mxu0
      %v573 = vadd.f32 0.0, %v572
      %v574 = vpop.f32.mrf.mxu0
      %575 = vdwg.mxu0
      %v577 = vsel %vm170, %v331, 0
      %579 = vmatprep.subr.mxu0 0.0
      %580 = vmatpush1.msra.mxu0 0.0
      %581 = vmatprep.subr.mxu0 0.0
      %582 = vmatpush1.msra.mxu0 0.0
      %583 = vmatprep.subr.mxu0 0.0
      %584 = vmatpush1.msra.mxu0 0.0
      %585 = vmatprep.subr.mxu0 0.0
      %586 = vmatpush1.msra.mxu0 0.0
      %587 = vmatprep.subr.mxu0 0.0
      %588 = vmatpush1.msra.mxu0 0.0
      %589 = vmatprep.subr.mxu0 0.0
      %590 = vmatpush1.msra.mxu0 0.0
      %591 = vmatprep.subr.mxu0 0.0
      %592 = vmatpush1.msra.mxu0 0.0
      %593 = vmatprep.subr.mxu0 0.0
      %594 = vmatpush1.msra.mxu0 0.0
      %595 = vmatprep.subr.mxu0 0.0
      %596 = vmatpush1.msra.mxu0 0.0
      %597 = vmatprep.subr.mxu0 0.0
      %598 = vmatpush1.msra.mxu0 0.0
      %599 = vmatprep.subr.mxu0 0.0
      %600 = vmatpush1.msra.mxu0 0.0
      %601 = vmatprep.subr.mxu0 0.0
      %602 = vmatpush1.msra.mxu0 0.0
      %603 = vmatprep.subr.mxu0 0.0
      %604 = vmatpush1.msra.mxu0 0.0
      %605 = vmatprep.subr.mxu0 0.0
      %606 = vmatpush1.msra.mxu0 0.0
      %607 = vmatprep.subr.mxu0 0.0
      %608 = vmatpush1.msra.mxu0 0.0
      %609 = vmatprep.subr.mxu0 0.0
      %610 = vmatpush1.msra.mxu0 %v334
      %611 = vmatprep.subr.mxu0 0.0
      %612 = vmatpush2.msra.mxu0 0.0
      %613 = vmatprep.subr.mxu0 0.0
      %614 = vmatpush2.msra.mxu0 0.0
      %615 = vmatprep.subr.mxu0 0.0
      %616 = vmatpush2.msra.mxu0 0.0
      %617 = vmatprep.subr.mxu0 0.0
      %618 = vmatpush2.msra.mxu0 0.0
      %619 = vmatprep.subr.mxu0 0.0
      %620 = vmatpush2.msra.mxu0 0.0
      %621 = vmatprep.subr.mxu0 0.0
      %622 = vmatpush2.msra.mxu0 0.0
      %623 = vmatprep.subr.mxu0 0.0
      %624 = vmatpush2.msra.mxu0 0.0
      %625 = vmatprep.subr.mxu0 0.0
      %626 = vmatpush2.msra.mxu0 0.0
      %627 = vmatprep.subr.mxu0 0.0
      %628 = vmatpush2.msra.mxu0 0.0
      %629 = vmatprep.subr.mxu0 0.0
      %630 = vmatpush2.msra.mxu0 0.0
      %631 = vmatprep.subr.mxu0 0.0
      %632 = vmatpush2.msra.mxu0 0.0
      %633 = vmatprep.subr.mxu0 0.0
      %634 = vmatpush2.msra.mxu0 0.0
      %635 = vmatprep.subr.mxu0 0.0
      %636 = vmatpush2.msra.mxu0 0.0
      %637 = vmatprep.subr.mxu0 0.0
      %638 = vmatpush2.msra.mxu0 0.0
      %639 = vmatprep.subr.mxu0 0.0
      %640 = vmatpush2.msra.mxu0 0.0
      %641 = vmatprep.subr.mxu0 0.0
      %642 = vmatpush2.msra.mxu0 0.0
      %643 = vmatprep.mubr.f32.mxu0 0.0
      %644 = vmatmul.mubr.f32.gmra.mxu0 %v577
      %v645 = vpop.f32.mrf.mxu0
      %v646 = vadd.f32 %v573, %v645
      %v647 = vpop.f32.mrf.mxu0
      %648 = vdwg.mxu0
      %649 = vrot.lane.b32.xlu0 %v166, 112
      %v650 = vpop.permute.xlu0 %649
      %651 = vrot.lane.b32.xlu0 %v166, 80
      %v652 = vpop.permute.xlu0 %651
      %v653 = vsel %vm170, %v650, 0
      %v655 = vsel %vm170, %v652, 0
      %657 = vmatprep.subr.mxu0 0.0
      %658 = vmatpush1.xpose.msra.mxu0 0.0
      %659 = vmatprep.subr.mxu0 0.0
      %660 = vmatpush1.xpose.msra.mxu0 0.0
      %661 = vmatprep.subr.mxu0 0.0
      %662 = vmatpush1.xpose.msra.mxu0 0.0
      %663 = vmatprep.subr.mxu0 0.0
      %664 = vmatpush1.xpose.msra.mxu0 0.0
      %665 = vmatprep.subr.mxu0 0.0
      %666 = vmatpush1.xpose.msra.mxu0 0.0
      %667 = vmatprep.subr.mxu0 0.0
      %668 = vmatpush1.xpose.msra.mxu0 0.0
      %669 = vmatprep.subr.mxu0 0.0
      %670 = vmatpush1.xpose.msra.mxu0 0.0
      %671 = vmatprep.subr.mxu0 0.0
      %672 = vmatpush1.xpose.msra.mxu0 0.0
      %673 = vmatprep.subr.mxu0 0.0
      %674 = vmatpush1.xpose.msra.mxu0 0.0
      %675 = vmatprep.subr.mxu0 0.0
      %676 = vmatpush1.xpose.msra.mxu0 0.0
      %677 = vmatprep.subr.mxu0 0.0
      %678 = vmatpush1.xpose.msra.mxu0 0.0
      %679 = vmatprep.subr.mxu0 0.0
      %680 = vmatpush1.xpose.msra.mxu0 0.0
      %681 = vmatprep.subr.mxu0 0.0
      %682 = vmatpush1.xpose.msra.mxu0 0.0
      %683 = vmatprep.subr.mxu0 0.0
      %684 = vmatpush1.xpose.msra.mxu0 0.0
      %685 = vmatprep.subr.mxu0 0.0
      %686 = vmatpush1.xpose.msra.mxu0 0.0
      %687 = vmatprep.subr.mxu0 0.0
      %688 = vmatpush1.xpose.msra.mxu0 %v655
      %689 = vmatprep.subr.mxu0 0.0
      %690 = vmatpush2.xpose.msra.mxu0 0.0
      %691 = vmatprep.subr.mxu0 0.0
      %692 = vmatpush2.xpose.msra.mxu0 0.0
      %693 = vmatprep.subr.mxu0 0.0
      %694 = vmatpush2.xpose.msra.mxu0 0.0
      %695 = vmatprep.subr.mxu0 0.0
      %696 = vmatpush2.xpose.msra.mxu0 0.0
      %697 = vmatprep.subr.mxu0 0.0
      %698 = vmatpush2.xpose.msra.mxu0 0.0
      %699 = vmatprep.subr.mxu0 0.0
      %700 = vmatpush2.xpose.msra.mxu0 0.0
      %701 = vmatprep.subr.mxu0 0.0
      %702 = vmatpush2.xpose.msra.mxu0 0.0
      %703 = vmatprep.subr.mxu0 0.0
      %704 = vmatpush2.xpose.msra.mxu0 0.0
      %705 = vmatprep.subr.mxu0 0.0
      %706 = vmatpush2.xpose.msra.mxu0 0.0
      %707 = vmatprep.subr.mxu0 0.0
      %708 = vmatpush2.xpose.msra.mxu0 0.0
      %709 = vmatprep.subr.mxu0 0.0
      %710 = vmatpush2.xpose.msra.mxu0 0.0
      %711 = vmatprep.subr.mxu0 0.0
      %712 = vmatpush2.xpose.msra.mxu0 0.0
      %713 = vmatprep.subr.mxu0 0.0
      %714 = vmatpush2.xpose.msra.mxu0 0.0
      %715 = vmatprep.subr.mxu0 0.0
      %716 = vmatpush2.xpose.msra.mxu0 0.0
      %717 = vmatprep.subr.mxu0 0.0
      %718 = vmatpush2.xpose.msra.mxu0 0.0
      %719 = vmatprep.subr.mxu0 0.0
      %720 = vmatpush2.xpose.msra.mxu0 0.0
      %721 = vmatprep.mubr.f32.mxu0 0.0
      %722 = vmatmul.mubr.f32.gmra.mxu0 %v653
      %v723 = vpop.f32.mrf.mxu0
      %v724 = vadd.f32 0.0, %v723
      %v725 = vpop.f32.mrf.mxu0
      %726 = vdwg.mxu0
      %v727 = vmul.f32 %v724, 0.35355338
      %v728 = vsel %vm170, %v727, -inf
      %729 = vmax.xlane.f32.xlu0 %v728
      %v730 = vpop.xlane.xlu0 %729
      %v731 = vsub.f32 %v727, %v730
      %v732 = vmul.f32 %v731, 1.442695
      %v733 = vpow.pop %v732
      %v734 = vsel %vm170, %v733, 0.0
      %735 = vadd.xlane.f32.xlu0 %v734
      %v736 = vpop.xlane.xlu0 %735
      %v737 = vrcp.pop %v736
      %v738 = vmul.f32 1.0, %v737
      %v739 = vmul.f32 %v733, %v738
      %740 = vrot.lane.b32.xlu0 %v166, 48
      %v741 = vpop.permute.xlu0 %740
      %v744 = vsel %vm170, %v739, 0
      %746 = vmatprep.subr.mxu0 0.0
      %747 = vmatpush1.msra.mxu0 0.0
      %748 = vmatprep.subr.mxu0 0.0
      %749 = vmatpush1.msra.mxu0 0.0
      %750 = vmatprep.subr.mxu0 0.0
      %751 = vmatpush1.msra.mxu0 0.0
      %752 = vmatprep.subr.mxu0 0.0
      %753 = vmatpush1.msra.mxu0 0.0
      %754 = vmatprep.subr.mxu0 0.0
      %755 = vmatpush1.msra.mxu0 0.0
      %756 = vmatprep.subr.mxu0 0.0
      %757 = vmatpush1.msra.mxu0 0.0
      %758 = vmatprep.subr.mxu0 0.0
      %759 = vmatpush1.msra.mxu0 0.0
      %760 = vmatprep.subr.mxu0 0.0
      %761 = vmatpush1.msra.mxu0 0.0
      %762 = vmatprep.subr.mxu0 0.0
      %763 = vmatpush1.msra.mxu0 0.0
      %764 = vmatprep.subr.mxu0 0.0
      %765 = vmatpush1.msra.mxu0 0.0
      %766 = vmatprep.subr.mxu0 0.0
      %767 = vmatpush1.msra.mxu0 0.0
      %768 = vmatprep.subr.mxu0 0.0
      %769 = vmatpush1.msra.mxu0 0.0
      %770 = vmatprep.subr.mxu0 0.0
      %771 = vmatpush1.msra.mxu0 0.0
      %772 = vmatprep.subr.mxu0 0.0
      %773 = vmatpush1.msra.mxu0 0.0
      %774 = vmatprep.subr.mxu0 0.0
      %775 = vmatpush1.msra.mxu0 0.0
      %776 = vmatprep.subr.mxu0 0.0
      %777 = vmatpush1.msra.mxu0 %v741
      %778 = vmatprep.subr.mxu0 0.0
      %779 = vmatpush2.msra.mxu0 0.0
      %780 = vmatprep.subr.mxu0 0.0
      %781 = vmatpush2.msra.mxu0 0.0
      %782 = vmatprep.subr.mxu0 0.0
      %783 = vmatpush2.msra.mxu0 0.0
      %784 = vmatprep.subr.mxu0 0.0
      %785 = vmatpush2.msra.mxu0 0.0
      %786 = vmatprep.subr.mxu0 0.0
      %787 = vmatpush2.msra.mxu0 0.0
      %788 = vmatprep.subr.mxu0 0.0
      %789 = vmatpush2.msra.mxu0 0.0
      %790 = vmatprep.subr.mxu0 0.0
      %791 = vmatpush2.msra.mxu0 0.0
      %792 = vmatprep.subr.mxu0 0.0
      %793 = vmatpush2.msra.mxu0 0.0
      %794 = vmatprep.subr.mxu0 0.0
      %795 = vmatpush2.msra.mxu0 0.0
      %796 = vmatprep.subr.mxu0 0.0
      %797 = vmatpush2.msra.mxu0 0.0
      %798 = vmatprep.subr.mxu0 0.0
      %799 = vmatpush2.msra.mxu0 0.0
      %800 = vmatprep.subr.mxu0 0.0
      %801 = vmatpush2.msra.mxu0 0.0
      %802 = vmatprep.subr.mxu0 0.0
      %803 = vmatpush2.msra.mxu0 0.0
      %804 = vmatprep.subr.mxu0 0.0
      %805 = vmatpush2.msra.mxu0 0.0
      %806 = vmatprep.subr.mxu0 0.0
      %807 = vmatpush2.msra.mxu0 0.0
      %808 = vmatprep.subr.mxu0 0.0
      %809 = vmatpush2.msra.mxu0 0.0
      %810 = vmatprep.mubr.f32.mxu0 0.0
      %811 = vmatmul.mubr.f32.gmra.mxu0 %v744
      %v812 = vpop.f32.mrf.mxu0
      %v813 = vadd.f32 0.0, %v812
      %v814 = vpop.f32.mrf.mxu0
      %815 = vdwg.mxu0
      %v816 = vld [vmem:[%s1 + $0x10] sm:$0xff]
      %v818 = vsel %vm170, %v813, 0
      %820 = vmatprep.subr.mxu0 0.0
      %821 = vmatpush1.msra.mxu0 0.0
      %822 = vmatprep.subr.mxu0 0.0
      %823 = vmatpush1.msra.mxu0 0.0
      %824 = vmatprep.subr.mxu0 0.0
      %825 = vmatpush1.msra.mxu0 0.0
      %826 = vmatprep.subr.mxu0 0.0
      %827 = vmatpush1.msra.mxu0 0.0
      %828 = vmatprep.subr.mxu0 0.0
      %829 = vmatpush1.msra.mxu0 0.0
      %830 = vmatprep.subr.mxu0 0.0
      %831 = vmatpush1.msra.mxu0 0.0
      %832 = vmatprep.subr.mxu0 0.0
      %833 = vmatpush1.msra.mxu0 0.0
      %834 = vmatprep.subr.mxu0 0.0
      %835 = vmatpush1.msra.mxu0 0.0
      %836 = vmatprep.subr.mxu0 0.0
      %837 = vmatpush1.msra.mxu0 0.0
      %838 = vmatprep.subr.mxu0 0.0
      %839 = vmatpush1.msra.mxu0 0.0
      %840 = vmatprep.subr.mxu0 0.0
      %841 = vmatpush1.msra.mxu0 0.0
      %842 = vmatprep.subr.mxu0 0.0
      %843 = vmatpush1.msra.mxu0 0.0
      %844 = vmatprep.subr.mxu0 0.0
      %845 = vmatpush1.msra.mxu0 0.0
      %846 = vmatprep.subr.mxu0 0.0
      %847 = vmatpush1.msra.mxu0 0.0
      %848 = vmatprep.subr.mxu0 0.0
      %849 = vmatpush1.msra.mxu0 0.0
      %850 = vmatprep.subr.mxu0 0.0
      %851 = vmatpush1.msra.mxu0 %v816
      %852 = vmatprep.subr.mxu0 0.0
      %853 = vmatpush2.msra.mxu0 0.0
      %854 = vmatprep.subr.mxu0 0.0
      %855 = vmatpush2.msra.mxu0 0.0
      %856 = vmatprep.subr.mxu0 0.0
      %857 = vmatpush2.msra.mxu0 0.0
      %858 = vmatprep.subr.mxu0 0.0
      %859 = vmatpush2.msra.mxu0 0.0
      %860 = vmatprep.subr.mxu0 0.0
      %861 = vmatpush2.msra.mxu0 0.0
      %862 = vmatprep.subr.mxu0 0.0
      %863 = vmatpush2.msra.mxu0 0.0
      %864 = vmatprep.subr.mxu0 0.0
      %865 = vmatpush2.msra.mxu0 0.0
      %866 = vmatprep.subr.mxu0 0.0
      %867 = vmatpush2.msra.mxu0 0.0
      %868 = vmatprep.subr.mxu0 0.0
      %869 = vmatpush2.msra.mxu0 0.0
      %870 = vmatprep.subr.mxu0 0.0
      %871 = vmatpush2.msra.mxu0 0.0
      %872 = vmatprep.subr.mxu0 0.0
      %873 = vmatpush2.msra.mxu0 0.0
      %874 = vmatprep.subr.mxu0 0.0
      %875 = vmatpush2.msra.mxu0 0.0
      %876 = vmatprep.subr.mxu0 0.0
      %877 = vmatpush2.msra.mxu0 0.0
      %878 = vmatprep.subr.mxu0 0.0
      %879 = vmatpush2.msra.mxu0 0.0
      %880 = vmatprep.subr.mxu0 0.0
      %881 = vmatpush2.msra.mxu0 0.0
      %882 = vmatprep.subr.mxu0 0.0
      %883 = vmatpush2.msra.mxu0 0.0
      %884 = vmatprep.mubr.f32.mxu0 0.0
      %885 = vmatmul.mubr.f32.gmra.mxu0 %v818
      %v886 = vpop.f32.mrf.mxu0
      %v887 = vadd.f32 0.0, %v886
      %v888 = vpop.f32.mrf.mxu0
      %889 = vdwg.mxu0
      %v890 = vadd.f32 %v646, %v887
      %891 = vrot.lane.b32.xlu0 %v166, 104
      %v892 = vpop.permute.xlu0 %891
      %893 = vrot.lane.b32.xlu0 %v166, 72
      %v894 = vpop.permute.xlu0 %893
      %v895 = vsel %vm170, %v892, 0
      %v897 = vsel %vm170, %v894, 0
      %899 = vmatprep.subr.mxu0 0.0
      %900 = vmatpush1.xpose.msra.mxu0 0.0
      %901 = vmatprep.subr.mxu0 0.0
      %902 = vmatpush1.xpose.msra.mxu0 0.0
      %903 = vmatprep.subr.mxu0 0.0
      %904 = vmatpush1.xpose.msra.mxu0 0.0
      %905 = vmatprep.subr.mxu0 0.0
      %906 = vmatpush1.xpose.msra.mxu0 0.0
      %907 = vmatprep.subr.mxu0 0.0
      %908 = vmatpush1.xpose.msra.mxu0 0.0
      %909 = vmatprep.subr.mxu0 0.0
      %910 = vmatpush1.xpose.msra.mxu0 0.0
      %911 = vmatprep.subr.mxu0 0.0
      %912 = vmatpush1.xpose.msra.mxu0 0.0
      %913 = vmatprep.subr.mxu0 0.0
      %914 = vmatpush1.xpose.msra.mxu0 0.0
      %915 = vmatprep.subr.mxu0 0.0
      %916 = vmatpush1.xpose.msra.mxu0 0.0
      %917 = vmatprep.subr.mxu0 0.0
      %918 = vmatpush1.xpose.msra.mxu0 0.0
      %919 = vmatprep.subr.mxu0 0.0
      %920 = vmatpush1.xpose.msra.mxu0 0.0
      %921 = vmatprep.subr.mxu0 0.0
      %922 = vmatpush1.xpose.msra.mxu0 0.0
      %923 = vmatprep.subr.mxu0 0.0
      %924 = vmatpush1.xpose.msra.mxu0 0.0
      %925 = vmatprep.subr.mxu0 0.0
      %926 = vmatpush1.xpose.msra.mxu0 0.0
      %927 = vmatprep.subr.mxu0 0.0
      %928 = vmatpush1.xpose.msra.mxu0 0.0
      %929 = vmatprep.subr.mxu0 0.0
      %930 = vmatpush1.xpose.msra.mxu0 %v897
      %931 = vmatprep.subr.mxu0 0.0
      %932 = vmatpush2.xpose.msra.mxu0 0.0
      %933 = vmatprep.subr.mxu0 0.0
      %934 = vmatpush2.xpose.msra.mxu0 0.0
      %935 = vmatprep.subr.mxu0 0.0
      %936 = vmatpush2.xpose.msra.mxu0 0.0
      %937 = vmatprep.subr.mxu0 0.0
      %938 = vmatpush2.xpose.msra.mxu0 0.0
      %939 = vmatprep.subr.mxu0 0.0
      %940 = vmatpush2.xpose.msra.mxu0 0.0
      %941 = vmatprep.subr.mxu0 0.0
      %942 = vmatpush2.xpose.msra.mxu0 0.0
      %943 = vmatprep.subr.mxu0 0.0
      %944 = vmatpush2.xpose.msra.mxu0 0.0
      %945 = vmatprep.subr.mxu0 0.0
      %946 = vmatpush2.xpose.msra.mxu0 0.0
      %947 = vmatprep.subr.mxu0 0.0
      %948 = vmatpush2.xpose.msra.mxu0 0.0
      %949 = vmatprep.subr.mxu0 0.0
      %950 = vmatpush2.xpose.msra.mxu0 0.0
      %951 = vmatprep.subr.mxu0 0.0
      %952 = vmatpush2.xpose.msra.mxu0 0.0
      %953 = vmatprep.subr.mxu0 0.0
      %954 = vmatpush2.xpose.msra.mxu0 0.0
      %955 = vmatprep.subr.mxu0 0.0
      %956 = vmatpush2.xpose.msra.mxu0 0.0
      %957 = vmatprep.subr.mxu0 0.0
      %958 = vmatpush2.xpose.msra.mxu0 0.0
      %959 = vmatprep.subr.mxu0 0.0
      %960 = vmatpush2.xpose.msra.mxu0 0.0
      %961 = vmatprep.subr.mxu0 0.0
      %962 = vmatpush2.xpose.msra.mxu0 0.0
      %963 = vmatprep.mubr.f32.mxu0 0.0
      %964 = vmatmul.mubr.f32.gmra.mxu0 %v895
      %v965 = vpop.f32.mrf.mxu0
      %v966 = vadd.f32 0.0, %v965
      %v967 = vpop.f32.mrf.mxu0
      %968 = vdwg.mxu0
      %v969 = vmul.f32 %v966, 0.35355338
      %v970 = vsel %vm170, %v969, -inf
      %971 = vmax.xlane.f32.xlu0 %v970
      %v972 = vpop.xlane.xlu0 %971
      %v973 = vsub.f32 %v969, %v972
      %v974 = vmul.f32 %v973, 1.442695
      %v975 = vpow.pop %v974
      %v976 = vsel %vm170, %v975, 0.0
      %977 = vadd.xlane.f32.xlu0 %v976
      %v978 = vpop.xlane.xlu0 %977
      %v979 = vrcp.pop %v978
      %v980 = vmul.f32 1.0, %v979
      %v981 = vmul.f32 %v975, %v980
      %982 = vrot.lane.b32.xlu0 %v166, 40
      %v983 = vpop.permute.xlu0 %982
      %v986 = vsel %vm170, %v981, 0
      %988 = vmatprep.subr.mxu0 0.0
      %989 = vmatpush1.msra.mxu0 0.0
      %990 = vmatprep.subr.mxu0 0.0
      %991 = vmatpush1.msra.mxu0 0.0
      %992 = vmatprep.subr.mxu0 0.0
      %993 = vmatpush1.msra.mxu0 0.0
      %994 = vmatprep.subr.mxu0 0.0
      %995 = vmatpush1.msra.mxu0 0.0
      %996 = vmatprep.subr.mxu0 0.0
      %997 = vmatpush1.msra.mxu0 0.0
      %998 = vmatprep.subr.mxu0 0.0
      %999 = vmatpush1.msra.mxu0 0.0
      %1000 = vmatprep.subr.mxu0 0.0
      %1001 = vmatpush1.msra.mxu0 0.0
      %1002 = vmatprep.subr.mxu0 0.0
      %1003 = vmatpush1.msra.mxu0 0.0
      %1004 = vmatprep.subr.mxu0 0.0
      %1005 = vmatpush1.msra.mxu0 0.0
      %1006 = vmatprep.subr.mxu0 0.0
      %1007 = vmatpush1.msra.mxu0 0.0
      %1008 = vmatprep.subr.mxu0 0.0
      %1009 = vmatpush1.msra.mxu0 0.0
      %1010 = vmatprep.subr.mxu0 0.0
      %1011 = vmatpush1.msra.mxu0 0.0
      %1012 = vmatprep.subr.mxu0 0.0
      %1013 = vmatpush1.msra.mxu0 0.0
      %1014 = vmatprep.subr.mxu0 0.0
      %1015 = vmatpush1.msra.mxu0 0.0
      %1016 = vmatprep.subr.mxu0 0.0
      %1017 = vmatpush1.msra.mxu0 0.0
      %1018 = vmatprep.subr.mxu0 0.0
      %1019 = vmatpush1.msra.mxu0 %v983
      %1020 = vmatprep.subr.mxu0 0.0
      %1021 = vmatpush2.msra.mxu0 0.0
      %1022 = vmatprep.subr.mxu0 0.0
      %1023 = vmatpush2.msra.mxu0 0.0
      %1024 = vmatprep.subr.mxu0 0.0
      %1025 = vmatpush2.msra.mxu0 0.0
      %1026 = vmatprep.subr.mxu0 0.0
      %1027 = vmatpush2.msra.mxu0 0.0
      %1028 = vmatprep.subr.mxu0 0.0
      %1029 = vmatpush2.msra.mxu0 0.0
      %1030 = vmatprep.subr.mxu0 0.0
      %1031 = vmatpush2.msra.mxu0 0.0
      %1032 = vmatprep.subr.mxu0 0.0
      %1033 = vmatpush2.msra.mxu0 0.0
      %1034 = vmatprep.subr.mxu0 0.0
      %1035 = vmatpush2.msra.mxu0 0.0
      %1036 = vmatprep.subr.mxu0 0.0
      %1037 = vmatpush2.msra.mxu0 0.0
      %1038 = vmatprep.subr.mxu0 0.0
      %1039 = vmatpush2.msra.mxu0 0.0
      %1040 = vmatprep.subr.mxu0 0.0
      %1041 = vmatpush2.msra.mxu0 0.0
      %1042 = vmatprep.subr.mxu0 0.0
      %1043 = vmatpush2.msra.mxu0 0.0
      %1044 = vmatprep.subr.mxu0 0.0
      %1045 = vmatpush2.msra.mxu0 0.0
      %1046 = vmatprep.subr.mxu0 0.0
      %1047 = vmatpush2.msra.mxu0 0.0
      %1048 = vmatprep.subr.mxu0 0.0
      %1049 = vmatpush2.msra.mxu0 0.0
      %1050 = vmatprep.subr.mxu0 0.0
      %1051 = vmatpush2.msra.mxu0 0.0
      %1052 = vmatprep.mubr.f32.mxu0 0.0
      %1053 = vmatmul.mubr.f32.gmra.mxu0 %v986
      %v1054 = vpop.f32.mrf.mxu0
      %v1055 = vadd.f32 0.0, %v1054
      %v1056 = vpop.f32.mrf.mxu0
      %1057 = vdwg.mxu0
      %v1058 = vld [vmem:[%s1 + $0x18] sm:$0xff]
      %v1060 = vsel %vm170, %v1055, 0
      %1062 = vmatprep.subr.mxu0 0.0
      %1063 = vmatpush1.msra.mxu0 0.0
      %1064 = vmatprep.subr.mxu0 0.0
      %1065 = vmatpush1.msra.mxu0 0.0
      %1066 = vmatprep.subr.mxu0 0.0
      %1067 = vmatpush1.msra.mxu0 0.0
      %1068 = vmatprep.subr.mxu0 0.0
      %1069 = vmatpush1.msra.mxu0 0.0
      %1070 = vmatprep.subr.mxu0 0.0
      %1071 = vmatpush1.msra.mxu0 0.0
      %1072 = vmatprep.subr.mxu0 0.0
      %1073 = vmatpush1.msra.mxu0 0.0
      %1074 = vmatprep.subr.mxu0 0.0
      %1075 = vmatpush1.msra.mxu0 0.0
      %1076 = vmatprep.subr.mxu0 0.0
      %1077 = vmatpush1.msra.mxu0 0.0
      %1078 = vmatprep.subr.mxu0 0.0
      %1079 = vmatpush1.msra.mxu0 0.0
      %1080 = vmatprep.subr.mxu0 0.0
      %1081 = vmatpush1.msra.mxu0 0.0
      %1082 = vmatprep.subr.mxu0 0.0
      %1083 = vmatpush1.msra.mxu0 0.0
      %1084 = vmatprep.subr.mxu0 0.0
      %1085 = vmatpush1.msra.mxu0 0.0
      %1086 = vmatprep.subr.mxu0 0.0
      %1087 = vmatpush1.msra.mxu0 0.0
      %1088 = vmatprep.subr.mxu0 0.0
      %1089 = vmatpush1.msra.mxu0 0.0
      %1090 = vmatprep.subr.mxu0 0.0
      %1091 = vmatpush1.msra.mxu0 0.0
      %1092 = vmatprep.subr.mxu0 0.0
      %1093 = vmatpush1.msra.mxu0 %v1058
      %1094 = vmatprep.subr.mxu0 0.0
      %1095 = vmatpush2.msra.mxu0 0.0
      %1096 = vmatprep.subr.mxu0 0.0
      %1097 = vmatpush2.msra.mxu0 0.0
      %1098 = vmatprep.subr.mxu0 0.0
      %1099 = vmatpush2.msra.mxu0 0.0
      %1100 = vmatprep.subr.mxu0 0.0
      %1101 = vmatpush2.msra.mxu0 0.0
      %1102 = vmatprep.subr.mxu0 0.0
      %1103 = vmatpush2.msra.mxu0 0.0
      %1104 = vmatprep.subr.mxu0 0.0
      %1105 = vmatpush2.msra.mxu0 0.0
      %1106 = vmatprep.subr.mxu0 0.0
      %1107 = vmatpush2.msra.mxu0 0.0
      %1108 = vmatprep.subr.mxu0 0.0
      %1109 = vmatpush2.msra.mxu0 0.0
      %1110 = vmatprep.subr.mxu0 0.0
      %1111 = vmatpush2.msra.mxu0 0.0
      %1112 = vmatprep.subr.mxu0 0.0
      %1113 = vmatpush2.msra.mxu0 0.0
      %1114 = vmatprep.subr.mxu0 0.0
      %1115 = vmatpush2.msra.mxu0 0.0
      %1116 = vmatprep.subr.mxu0 0.0
      %1117 = vmatpush2.msra.mxu0 0.0
      %1118 = vmatprep.subr.mxu0 0.0
      %1119 = vmatpush2.msra.mxu0 0.0
      %1120 = vmatprep.subr.mxu0 0.0
      %1121 = vmatpush2.msra.mxu0 0.0
      %1122 = vmatprep.subr.mxu0 0.0
      %1123 = vmatpush2.msra.mxu0 0.0
      %1124 = vmatprep.subr.mxu0 0.0
      %1125 = vmatpush2.msra.mxu0 0.0
      %1126 = vmatprep.mubr.f32.mxu0 0.0
      %1127 = vmatmul.mubr.f32.gmra.mxu0 %v1060
      %v1128 = vpop.f32.mrf.mxu0
      %v1129 = vadd.f32 0.0, %v1128
      %v1130 = vpop.f32.mrf.mxu0
      %1131 = vdwg.mxu0
      %v1132 = vadd.f32 %v890, %v1129
      %v1133 = vld [vmem:[%s2] sm:$0x1]
      %v1135 = vlaneseq
      %v1136 = vshrl.u32 %v1135, 7
      %v1137 = vsub.s32 0, %v1136
      %v1138 = vrot.slane %v1133, %v1137
      %v1140 = vadd.f32 %v1132, %v1138
      %vm1141 = vcmask 261120
      %1142 = vst.msk [vmem:[%s165] sm:$0xff] %vm1141, %v1140
      %p1143 = scmp.lt.s32.totalorder %s14, 1
      %s1144 = scalar_select %p1143, %s14, 1
      %s1145 = smul.addr %s1144, 8
      %s1146 = scalar_lea.vmem %s3, %s1145
      // Predicated region
      $region33: #{attentive_pooler_forward.9} parent=31 // pred_check
        %p1147 = pneg %p100
      $region34: #{attentive_pooler_forward.9} parent=31 // pred_check_branch
        %1149 = sbr.rel (%p1147) target = $region36
      $region35: #{attentive_pooler_forward.9} parent=31 // pred_region
        _
      $region36: #{attentive_pooler_forward.9} parent=31 // pred_fallthru
        _
    $region32: #{attentive_pooler_forward.9} parent=5 // pred_fallthru
      _
    %p1150 = scmp.le.s32.totalorder 2, %s9
    // Predicated region
    $region37: #{attentive_pooler_forward.9} parent=5 // pred_check
      %p1151 = pneg %p1150
    $region38: #{attentive_pooler_forward.9} parent=5 // pred_check_branch
      %1153 = sbr.rel (%p1151) target = $region40
    $region39: #{attentive_pooler_forward.9} parent=5 // pred_region
      %s1154 = ssub.s32 %s9, 2
      // Predicated region
      $region41: #{attentive_pooler_forward.9} parent=39 // pred_check
        %p1155 = pneg %p106
      $region42: #{attentive_pooler_forward.9} parent=39 // pred_check_branch
        %1157 = sbr.rel (%p1155) target = $region44
      $region43: #{attentive_pooler_forward.9} parent=39 // pred_region
        %p1158 = scmp.lt.s32.totalorder %s15, 1
        %s1159 = scalar_select %p1158, %s15, 1
        %s1160 = smul.addr %s1159, 8
        %s1161 = scalar_lea.vmem %s3, %s1160
      $region44: #{attentive_pooler_forward.9} parent=39 // pred_fallthru
        _
    $region40: #{attentive_pooler_forward.9} parent=5 // pred_fallthru
      _
  $region6: #{attentive_pooler_forward.9} parent=0 // loop_footer
    %s13 = sadd.s32 1, %s9
  $region7: #{attentive_pooler_forward.9} parent=0 // loop_footer_branch
    %8 = sbr.rel target = $region3
  $region8: #{attentive_pooler_forward.9} parent=0 // loop_exit
    _

// kernel: attentive_pooler_forward.14
$region0: #{attentive_pooler_forward.14}
  #allocation0 [shape = 'u32[]', space=smem, size = 0x4, offset = 0x4, fixed_abs, tag = 'smem constant byte address 0x4 - core index']
  #allocation1 [shape = 'u32[144,128]{1,0:T(1,128)}', space=vmem, size = 0x12000, scoped, tag = 'internal scratch']
  %s0 = inlined_call_operand.vmem [shape: f32[2,8,32], index: 0, kind: input, shape index: {}]
  %s1 = inlined_call_operand.vmem [shape: f32[1,32], index: 1, kind: input, shape index: {}]
  %s2 = inlined_call_operand.vmem [shape: f32[1,32], index: 2, kind: input, shape index: {}]
  %s3 = inlined_call_operand.vmem [shape: f32[32,64], index: 3, kind: input, shape index: {}]
  %s4 = inlined_call_operand.vmem [shape: f32[1,64], index: 4, kind: input, shape index: {}]
  %s5 = inlined_call_operand.vmem [shape: f32[1,32], index: 5, kind: input, shape index: {}]
  %s6 = inlined_call_operand.vmem [shape: f32[32,4], index: 6, kind: input, shape index: {}]
  %s7 = inlined_call_operand.vmem [shape: f32[4,32], index: 7, kind: input, shape index: {}]
  %s8 = inlined_call_operand.vmem [shape: f32[2,1,32], index: 8, kind: output, shape index: {}]
  %s9 = sld [smem:[#allocation0]]
  $region65: #{attentive_pooler_forward.14} parent=0
    _
  %s11 = ssub.s32 1, %s9
  %s12 = scalar_select 0, %s11, %s9
  loop: start=0, step=1, limit=4
  $region2: #{attentive_pooler_forward.14} parent=0 // loop_pre_header
    _
  $region3: #{attentive_pooler_forward.14} parent=0 // loop_header
    %s14 = sphi 0, %s18
    %p15 = scmp.ge.s32.totalorder %s14, 4
    %s24 = sphi 0, %s26
    %s27 = sphi 0, %s24
    %s28 = sphi 0, %s27
    %s44 = sphi 0, %s28
    %s48 = sphi 0, %s48
    %s50 = sphi 0, %s48
    %s51 = sphi 0, %s50
    %s65 = sphi 0, %s51
    %s69 = sphi 0, %s69
    %s71 = sphi 0, %s69
    %s72 = sphi 0, %s71
    %s86 = sphi 0, %s72
    %s90 = sphi 0, %s90
    %s92 = sphi 0, %s90
    %s93 = sphi 0, %s92
    %s107 = sphi 0, %s93
    %s111 = sphi 0, %s111
    %s113 = sphi 0, %s111
    %s114 = sphi 0, %s113
    %s128 = sphi 0, %s114
    %s132 = sphi 0, %s132
    %s134 = sphi 0, %s132
    %s135 = sphi 0, %s134
    %s149 = sphi 0, %s135
    %s153 = sphi 0, %s153
    %s155 = sphi 0, %s153
    %s156 = sphi 0, %s155
    %s170 = sphi 0, %s156
    %s174 = sphi 0, %s174
    %s176 = sphi 0, %s174
    %s177 = sphi 0, %s176
    %s191 = sphi 0, %s177
    %s197 = sphi 0, %s199
    %s200 = sphi 0, %s197
    %s201 = sphi 0, %s200
    %s217 = sphi 0, %s201
  $region4: #{attentive_pooler_forward.14} parent=0 // loop_header_branch
    %17 = sbr.rel (%p15) target = $region8
  $region5: #{attentive_pooler_forward.14} parent=0 // loop_body
    %s19 = ssub.s32 %s14, 1
    %s20 = ssub.s32 %s14, 2
    %s21 = sadd.s32 %s14, 1
    %s22 = ssub.s32 %s14, %s21
    %p23 = scmp.eq.s32.totalorder %s22, 0
    %s25 = sadd.s32 %s24, 1
    %s26 = scalar_select %p23, %s24, %s25
    %p29 = pneg %p23
    %p30 = scmp.eq.s32.totalorder %s14, 1
    %p31 = por %p29, %p30
    %p32 = scmp.ne.s32.totalorder %s24, %s27
    %p33 = scmp.eq.s32.totalorder %s14, 0
    %p34 = por %p32, %p33
    %p35 = scmp.ne.s32.totalorder %s24, %s27
    %p36 = scmp.eq.s32.totalorder %s19, 1
    %p37 = por %p35, %p36
    %p38 = scmp.ne.s32.totalorder %s27, %s28
    %p39 = scmp.eq.s32.totalorder %s19, 0
    %p40 = por %p38, %p39
    %p41 = scmp.ne.s32.totalorder %s27, %s28
    %p42 = scmp.eq.s32.totalorder %s20, 1
    %p43 = por %p41, %p42
    %p45 = scmp.ne.s32.totalorder %s28, %s44
    %p46 = scmp.eq.s32.totalorder %s20, 0
    %p47 = por %p45, %p46
    %s49 = sadd.s32 %s48, 1
    %p52 = scmp.eq.s32.totalorder %s14, 1
    %p53 = scmp.ne.s32.totalorder %s48, %s50
    %p54 = scmp.eq.s32.totalorder %s14, 0
    %p55 = por %p53, %p54
    %p56 = scmp.ne.s32.totalorder %s48, %s50
    %p57 = scmp.eq.s32.totalorder %s19, 1
    %p58 = por %p56, %p57
    %p59 = scmp.ne.s32.totalorder %s50, %s51
    %p60 = scmp.eq.s32.totalorder %s19, 0
    %p61 = por %p59, %p60
    %p62 = scmp.ne.s32.totalorder %s50, %s51
    %p63 = scmp.eq.s32.totalorder %s20, 1
    %p64 = por %p62, %p63
    %p66 = scmp.ne.s32.totalorder %s51, %s65
    %p67 = scmp.eq.s32.totalorder %s20, 0
    %p68 = por %p66, %p67
    %s70 = sadd.s32 %s69, 1
    %p73 = scmp.eq.s32.totalorder %s14, 1
    %p74 = scmp.ne.s32.totalorder %s69, %s71
    %p75 = scmp.eq.s32.totalorder %s14, 0
    %p76 = por %p74, %p75
    %p77 = scmp.ne.s32.totalorder %s69, %s71
    %p78 = scmp.eq.s32.totalorder %s19, 1
    %p79 = por %p77, %p78
    %p80 = scmp.ne.s32.totalorder %s71, %s72
    %p81 = scmp.eq.s32.totalorder %s19, 0
    %p82 = por %p80, %p81
    %p83 = scmp.ne.s32.totalorder %s71, %s72
    %p84 = scmp.eq.s32.totalorder %s20, 1
    %p85 = por %p83, %p84
    %p87 = scmp.ne.s32.totalorder %s72, %s86
    %p88 = scmp.eq.s32.totalorder %s20, 0
    %p89 = por %p87, %p88
    %s91 = sadd.s32 %s90, 1
    %p94 = scmp.eq.s32.totalorder %s14, 1
    %p95 = scmp.ne.s32.totalorder %s90, %s92
    %p96 = scmp.eq.s32.totalorder %s14, 0
    %p97 = por %p95, %p96
    %p98 = scmp.ne.s32.totalorder %s90, %s92
    %p99 = scmp.eq.s32.totalorder %s19, 1
    %p100 = por %p98, %p99
    %p101 = scmp.ne.s32.totalorder %s92, %s93
    %p102 = scmp.eq.s32.totalorder %s19, 0
    %p103 = por %p101, %p102
    %p104 = scmp.ne.s32.totalorder %s92, %s93
    %p105 = scmp.eq.s32.totalorder %s20, 1
    %p106 = por %p104, %p105
    %p108 = scmp.ne.s32.totalorder %s93, %s107
    %p109 = scmp.eq.s32.totalorder %s20, 0
    %p110 = por %p108, %p109
    %s112 = sadd.s32 %s111, 1
    %p115 = scmp.eq.s32.totalorder %s14, 1
    %p116 = scmp.ne.s32.totalorder %s111, %s113
    %p117 = scmp.eq.s32.totalorder %s14, 0
    %p118 = por %p116, %p117
    %p119 = scmp.ne.s32.totalorder %s111, %s113
    %p120 = scmp.eq.s32.totalorder %s19, 1
    %p121 = por %p119, %p120
    %p122 = scmp.ne.s32.totalorder %s113, %s114
    %p123 = scmp.eq.s32.totalorder %s19, 0
    %p124 = por %p122, %p123
    %p125 = scmp.ne.s32.totalorder %s113, %s114
    %p126 = scmp.eq.s32.totalorder %s20, 1
    %p127 = por %p125, %p126
    %p129 = scmp.ne.s32.totalorder %s114, %s128
    %p130 = scmp.eq.s32.totalorder %s20, 0
    %p131 = por %p129, %p130
    %s133 = sadd.s32 %s132, 1
    %p136 = scmp.eq.s32.totalorder %s14, 1
    %p137 = scmp.ne.s32.totalorder %s132, %s134
    %p138 = scmp.eq.s32.totalorder %s14, 0
    %p139 = por %p137, %p138
    %p140 = scmp.ne.s32.totalorder %s132, %s134
    %p141 = scmp.eq.s32.totalorder %s19, 1
    %p142 = por %p140, %p141
    %p143 = scmp.ne.s32.totalorder %s134, %s135
    %p144 = scmp.eq.s32.totalorder %s19, 0
    %p145 = por %p143, %p144
    %p146 = scmp.ne.s32.totalorder %s134, %s135
    %p147 = scmp.eq.s32.totalorder %s20, 1
    %p148 = por %p146, %p147
    %p150 = scmp.ne.s32.totalorder %s135, %s149
    %p151 = scmp.eq.s32.totalorder %s20, 0
    %p152 = por %p150, %p151
    %s154 = sadd.s32 %s153, 1
    %p157 = scmp.eq.s32.totalorder %s14, 1
    %p158 = scmp.ne.s32.totalorder %s153, %s155
    %p159 = scmp.eq.s32.totalorder %s14, 0
    %p160 = por %p158, %p159
    %p161 = scmp.ne.s32.totalorder %s153, %s155
    %p162 = scmp.eq.s32.totalorder %s19, 1
    %p163 = por %p161, %p162
    %p164 = scmp.ne.s32.totalorder %s155, %s156
    %p165 = scmp.eq.s32.totalorder %s19, 0
    %p166 = por %p164, %p165
    %p167 = scmp.ne.s32.totalorder %s155, %s156
    %p168 = scmp.eq.s32.totalorder %s20, 1
    %p169 = por %p167, %p168
    %p171 = scmp.ne.s32.totalorder %s156, %s170
    %p172 = scmp.eq.s32.totalorder %s20, 0
    %p173 = por %p171, %p172
    %s175 = sadd.s32 %s174, 1
    %p178 = scmp.eq.s32.totalorder %s14, 1
    %p179 = scmp.ne.s32.totalorder %s174, %s176
    %p180 = scmp.eq.s32.totalorder %s14, 0
    %p181 = por %p179, %p180
    %p182 = scmp.ne.s32.totalorder %s174, %s176
    %p183 = scmp.eq.s32.totalorder %s19, 1
    %p184 = por %p182, %p183
    %p185 = scmp.ne.s32.totalorder %s176, %s177
    %p186 = scmp.eq.s32.totalorder %s19, 0
    %p187 = por %p185, %p186
    %p188 = scmp.ne.s32.totalorder %s176, %s177
    %p189 = scmp.eq.s32.totalorder %s20, 1
    %p190 = por %p188, %p189
    %p192 = scmp.ne.s32.totalorder %s177, %s191
    %p193 = scmp.eq.s32.totalorder %s20, 0
    %p194 = por %p192, %p193
    %s195 = ssub.s32 %s14, %s21
    %p196 = scmp.eq.s32.totalorder %s195, 0
    %s198 = sadd.s32 %s197, 1
    %s199 = scalar_select %p196, %s197, %s198
    %p202 = pneg %p196
    %p203 = scmp.eq.s32.totalorder %s14, 1
    %p204 = por %p202, %p203
    %p205 = scmp.ne.s32.totalorder %s197, %s200
    %p206 = scmp.eq.s32.totalorder %s14, 0
    %p207 = por %p205, %p206
    %p208 = scmp.ne.s32.totalorder %s197, %s200
    %p209 = scmp.eq.s32.totalorder %s19, 1
    %p210 = por %p208, %p209
    %p211 = scmp.ne.s32.totalorder %s200, %s201
    %p212 = scmp.eq.s32.totalorder %s19, 0
    %p213 = por %p211, %p212
    %p214 = scmp.ne.s32.totalorder %s200, %s201
    %p215 = scmp.eq.s32.totalorder %s20, 1
    %p216 = por %p214, %p215
    %p218 = scmp.ne.s32.totalorder %s201, %s217
    %p219 = scmp.eq.s32.totalorder %s20, 0
    %p220 = por %p218, %p219
    %p221 = scmp.le.s32.totalorder 1, %s14
    %p222 = scmp.lt.s32.totalorder %s14, 3
    %p223 = pnand %p221, %p222
    %p224 = pneg %p223
    // Predicated region
    $region9: #{attentive_pooler_forward.14} parent=5 // pred_check
      _
    $region10: #{attentive_pooler_forward.14} parent=5 // pred_check_branch
      %226 = sbr.rel (%p223) target = $region12
    $region11: #{attentive_pooler_forward.14} parent=5 // pred_region
      %s227 = ssub.s32 %s14, 1
      // Predicated region
      $region13: #{attentive_pooler_forward.14} parent=11 // pred_check
        %p228 = pneg %p61
      $region14: #{attentive_pooler_forward.14} parent=11 // pred_check_branch
        %230 = sbr.rel (%p228) target = $region16
      $region15: #{attentive_pooler_forward.14} parent=11 // pred_region
        _
      $region16: #{attentive_pooler_forward.14} parent=11 // pred_fallthru
        _
      // Predicated region
      $region17: #{attentive_pooler_forward.14} parent=11 // pred_check
        %p231 = pneg %p82
      $region18: #{attentive_pooler_forward.14} parent=11 // pred_check_branch
        %233 = sbr.rel (%p231) target = $region20
      $region19: #{attentive_pooler_forward.14} parent=11 // pred_region
        _
      $region20: #{attentive_pooler_forward.14} parent=11 // pred_fallthru
        _
      // Predicated region
      $region21: #{attentive_pooler_forward.14} parent=11 // pred_check
        %p234 = pneg %p103
      $region22: #{attentive_pooler_forward.14} parent=11 // pred_check_branch
        %236 = sbr.rel (%p234) target = $region24
      $region23: #{attentive_pooler_forward.14} parent=11 // pred_region
        _
      $region24: #{attentive_pooler_forward.14} parent=11 // pred_fallthru
        _
      // Predicated region
      $region25: #{attentive_pooler_forward.14} parent=11 // pred_check
        %p237 = pneg %p124
      $region26: #{attentive_pooler_forward.14} parent=11 // pred_check_branch
        %239 = sbr.rel (%p237) target = $region28
      $region27: #{attentive_pooler_forward.14} parent=11 // pred_region
        _
      $region28: #{attentive_pooler_forward.14} parent=11 // pred_fallthru
        _
      // Predicated region
      $region29: #{attentive_pooler_forward.14} parent=11 // pred_check
        %p240 = pneg %p145
      $region30: #{attentive_pooler_forward.14} parent=11 // pred_check_branch
        %242 = sbr.rel (%p240) target = $region32
      $region31: #{attentive_pooler_forward.14} parent=11 // pred_region
        _
      $region32: #{attentive_pooler_forward.14} parent=11 // pred_fallthru
        _
      // Predicated region
      $region33: #{attentive_pooler_forward.14} parent=11 // pred_check
        %p243 = pneg %p166
      $region34: #{attentive_pooler_forward.14} parent=11 // pred_check_branch
        %245 = sbr.rel (%p243) target = $region36
      $region35: #{attentive_pooler_forward.14} parent=11 // pred_region
        _
      $region36: #{attentive_pooler_forward.14} parent=11 // pred_fallthru
        _
      // Predicated region
      $region37: #{attentive_pooler_forward.14} parent=11 // pred_check
        %p246 = pneg %p187
      $region38: #{attentive_pooler_forward.14} parent=11 // pred_check_branch
        %248 = sbr.rel (%p246) target = $region40
      $region39: #{attentive_pooler_forward.14} parent=11 // pred_region
        _
      $region40: #{attentive_pooler_forward.14} parent=11 // pred_fallthru
        _
    $region12: #{attentive_pooler_forward.14} parent=5 // pred_fallthru
      _
    %p249 = scmp.lt.s32.totalorder %s14, 2
    // Predicated region
    $region41: #{attentive_pooler_forward.14} parent=5 // pred_check
      %p250 = pneg %p249
    $region42: #{attentive_pooler_forward.14} parent=5 // pred_check_branch
      %252 = sbr.rel (%p250) target = $region44
    $region43: #{attentive_pooler_forward.14} parent=5 // pred_region
      // Predicated region
      $region45: #{attentive_pooler_forward.14} parent=43 // pred_check
        %p253 = pneg %p34
      $region46: #{attentive_pooler_forward.14} parent=43 // pred_check_branch
        %255 = sbr.rel (%p253) target = $region48
      $region47: #{attentive_pooler_forward.14} parent=43 // pred_region
        %p256 = scmp.lt.s32.totalorder %s14, 1
        %s257 = scalar_select %p256, %s14, 1
        %s258 = smul.addr %s257, 8
        %s259 = scalar_lea.vmem %s0, %s258
      $region48: #{attentive_pooler_forward.14} parent=43 // pred_fallthru
        _
    $region44: #{attentive_pooler_forward.14} parent=5 // pred_fallthru
      _
    %p260 = scmp.le.s32.totalorder 1, %s14
    %p261 = scmp.lt.s32.totalorder %s14, 3
    %p262 = pnand %p260, %p261
    %p263 = pneg %p262
    // Predicated region
    $region49: #{attentive_pooler_forward.14} parent=5 // pred_check
      _
    $region50: #{attentive_pooler_forward.14} parent=5 // pred_check_branch
      %265 = sbr.rel (%p262) target = $region52
    $region51: #{attentive_pooler_forward.14} parent=5 // pred_region
      %s266 = ssub.s32 %s14, 1
      %p267 = scmp.lt.s32.totalorder %s19, 1
      %s268 = scalar_select %p267, %s19, 1
      %s269 = smul.addr %s268, 8
      %s270 = scalar_lea.vmem %s0, %s269
      %p271 = pneg %p40
      %p272 = pneg %p37
      %p273 = pneg %p61
      %p274 = pneg %p58
      %p275 = pneg %p82
      %p276 = pneg %p79
      %p277 = pneg %p103
      %p278 = pneg %p100
      %p279 = pneg %p124
      %p280 = pneg %p121
      %p281 = pneg %p145
      %p282 = pneg %p142
      %p283 = pneg %p166
      %p284 = pneg %p163
      %p285 = pneg %p187
      %p286 = pneg %p184
      %p287 = pneg %p213
      %p288 = pneg %p210
      %p289 = scmp.lt.s32.totalorder %s19, 1
      %s290 = scalar_select %p289, %s19, 1
      %s291 = scalar_lea.vmem %s8, %s290
      %p292 = scmp.lt.s32.totalorder %s19, 1
      %s293 = scalar_select %p292, %s19, 1
      %s294 = smul.addr %s293, 8
      %s295 = scalar_lea.vmem %s0, %s294
      %p296 = scmp.lt.s32.totalorder %s19, 1
      %s297 = scalar_select %p296, %s19, 1
      %s298 = scalar_lea.vmem %s8, %s297
      %v299 = vld [vmem:[%s295] sm:$0xff]
      %v300 = vld [vmem:[%s1] sm:$0x1]
      %v301 = vld [vmem:[%s2] sm:$0x1]
      %vm302 = vcmask 261120
      %v303 = vsel %vm302, %v299, 0.0
      %304 = vadd.xlane.f32.xlu0 %v303
      %v305 = vpop.xlane.xlu0 %304
      %v306 = vrcp.pop 32.0
      %v307 = vmul.f32 %v305, %v306
      %v308 = vsub.f32 %v299, %v307
      %v309 = vmul.f32 %v308, %v308
      %v310 = vsel %vm302, %v309, 0.0
      %311 = vadd.xlane.f32.xlu0 %v310
      %v312 = vpop.xlane.xlu0 %311
      %v313 = vmul.f32 %v312, %v306
      %v314 = vadd.f32 %v313, 1e-06
      %v315 = vrsqrt.pop %v314
      %v316 = vmul.f32 %v308, %v315
      %v318 = vlaneseq
      %v319 = vshrl.u32 %v318, 7
      %v320 = vsub.s32 0, %v319
      %v321 = vrot.slane %v300, %v320
      %v323 = vmul.f32 %v316, %v321
      %v325 = vlaneseq
      %v326 = vshrl.u32 %v325, 7
      %v327 = vsub.s32 0, %v326
      %v328 = vrot.slane %v301, %v327
      %v330 = vadd.f32 %v323, %v328
      %v331 = vld [vmem:[%s3] sm:$0xff]
      %v332 = vld [vmem:[%s3 + $0x8] sm:$0xff]
      %v333 = vld [vmem:[%s3 + $0x10] sm:$0xff]
      %v334 = vld [vmem:[%s3 + $0x18] sm:$0xff]
      %v335 = vld [vmem:[%s4] sm:$0x1]
      %v337 = vlaneseq
      %v338 = vshrl.u32 %v337, 7
      %v339 = vsub.s32 0, %v338
      %v340 = vrot.slane %v335, %v339
      %v343 = vsel %vm302, %v330, 0
      %345 = vmatprep.subr.mxu0 0.0
      %346 = vmatpush1.msra.mxu0 0.0
      %347 = vmatprep.subr.mxu0 0.0
      %348 = vmatpush1.msra.mxu0 0.0
      %349 = vmatprep.subr.mxu0 0.0
      %350 = vmatpush1.msra.mxu0 0.0
      %351 = vmatprep.subr.mxu0 0.0
      %352 = vmatpush1.msra.mxu0 0.0
      %353 = vmatprep.subr.mxu0 0.0
      %354 = vmatpush1.msra.mxu0 0.0
      %355 = vmatprep.subr.mxu0 0.0
      %356 = vmatpush1.msra.mxu0 0.0
      %357 = vmatprep.subr.mxu0 0.0
      %358 = vmatpush1.msra.mxu0 0.0
      %359 = vmatprep.subr.mxu0 0.0
      %360 = vmatpush1.msra.mxu0 0.0
      %361 = vmatprep.subr.mxu0 0.0
      %362 = vmatpush1.msra.mxu0 0.0
      %363 = vmatprep.subr.mxu0 0.0
      %364 = vmatpush1.msra.mxu0 0.0
      %365 = vmatprep.subr.mxu0 0.0
      %366 = vmatpush1.msra.mxu0 0.0
      %367 = vmatprep.subr.mxu0 0.0
      %368 = vmatpush1.msra.mxu0 0.0
      %369 = vmatprep.subr.mxu0 0.0
      %370 = vmatpush1.msra.mxu0 %v334
      %371 = vmatprep.subr.mxu0 0.0
      %372 = vmatpush1.msra.mxu0 %v333
      %373 = vmatprep.subr.mxu0 0.0
      %374 = vmatpush1.msra.mxu0 %v332
      %375 = vmatprep.subr.mxu0 0.0
      %376 = vmatpush1.msra.mxu0 %v331
      %377 = vmatprep.subr.mxu0 0.0
      %378 = vmatpush2.msra.mxu0 0.0
      %379 = vmatprep.subr.mxu0 0.0
      %380 = vmatpush2.msra.mxu0 0.0
      %381 = vmatprep.subr.mxu0 0.0
      %382 = vmatpush2.msra.mxu0 0.0
      %383 = vmatprep.subr.mxu0 0.0
      %384 = vmatpush2.msra.mxu0 0.0
      %385 = vmatprep.subr.mxu0 0.0
      %386 = vmatpush2.msra.mxu0 0.0
      %387 = vmatprep.subr.mxu0 0.0
      %388 = vmatpush2.msra.mxu0 0.0
      %389 = vmatprep.subr.mxu0 0.0
      %390 = vmatpush2.msra.mxu0 0.0
      %391 = vmatprep.subr.mxu0 0.0
      %392 = vmatpush2.msra.mxu0 0.0
      %393 = vmatprep.subr.mxu0 0.0
      %394 = vmatpush2.msra.mxu0 0.0
      %395 = vmatprep.subr.mxu0 0.0
      %396 = vmatpush2.msra.mxu0 0.0
      %397 = vmatprep.subr.mxu0 0.0
      %398 = vmatpush2.msra.mxu0 0.0
      %399 = vmatprep.subr.mxu0 0.0
      %400 = vmatpush2.msra.mxu0 0.0
      %401 = vmatprep.subr.mxu0 0.0
      %402 = vmatpush2.msra.mxu0 0.0
      %403 = vmatprep.subr.mxu0 0.0
      %404 = vmatpush2.msra.mxu0 0.0
      %405 = vmatprep.subr.mxu0 0.0
      %406 = vmatpush2.msra.mxu0 0.0
      %407 = vmatprep.subr.mxu0 0.0
      %408 = vmatpush2.msra.mxu0 0.0
      %409 = vmatprep.mubr.f32.mxu0 0.0
      %410 = vmatmul.mubr.f32.gmra.mxu0 %v343
      %v411 = vpop.f32.mrf.mxu0
      %v412 = vadd.f32 %v340, %v411
      %v413 = vpop.f32.mrf.mxu0
      %414 = vdwg.mxu0
      %v415 = vld [vmem:[%s5] sm:$0x1]
      %v417 = vlaneseq
      %v418 = vshrl.u32 %v417, 7
      %v419 = vsub.s32 0, %v418
      %v420 = vrot.slane %v415, %v419
      %v422 = vmul.f32 %v412, %v420
      %v423 = vld [vmem:[%s6] sm:$0xff]
      %v424 = vld [vmem:[%s6 + $0x8] sm:$0xff]
      %v425 = vld [vmem:[%s6 + $0x10] sm:$0xff]
      %v426 = vld [vmem:[%s6 + $0x18] sm:$0xff]
      %v428 = vsel %vm302, %v422, 0
      %430 = vmatprep.subr.mxu0 0.0
      %431 = vmatpush1.msra.mxu0 0.0
      %432 = vmatprep.subr.mxu0 0.0
      %433 = vmatpush1.msra.mxu0 0.0
      %434 = vmatprep.subr.mxu0 0.0
      %435 = vmatpush1.msra.mxu0 0.0
      %436 = vmatprep.subr.mxu0 0.0
      %437 = vmatpush1.msra.mxu0 0.0
      %438 = vmatprep.subr.mxu0 0.0
      %439 = vmatpush1.msra.mxu0 0.0
      %440 = vmatprep.subr.mxu0 0.0
      %441 = vmatpush1.msra.mxu0 0.0
      %442 = vmatprep.subr.mxu0 0.0
      %443 = vmatpush1.msra.mxu0 0.0
      %444 = vmatprep.subr.mxu0 0.0
      %445 = vmatpush1.msra.mxu0 0.0
      %446 = vmatprep.subr.mxu0 0.0
      %447 = vmatpush1.msra.mxu0 0.0
      %448 = vmatprep.subr.mxu0 0.0
      %449 = vmatpush1.msra.mxu0 0.0
      %450 = vmatprep.subr.mxu0 0.0
      %451 = vmatpush1.msra.mxu0 0.0
      %452 = vmatprep.subr.mxu0 0.0
      %453 = vmatpush1.msra.mxu0 0.0
      %454 = vmatprep.subr.mxu0 0.0
      %455 = vmatpush1.msra.mxu0 %v426
      %456 = vmatprep.subr.mxu0 0.0
      %457 = vmatpush1.msra.mxu0 %v425
      %458 = vmatprep.subr.mxu0 0.0
      %459 = vmatpush1.msra.mxu0 %v424
      %460 = vmatprep.subr.mxu0 0.0
      %461 = vmatpush1.msra.mxu0 %v423
      %462 = vmatprep.subr.mxu0 0.0
      %463 = vmatpush2.msra.mxu0 0.0
      %464 = vmatprep.subr.mxu0 0.0
      %465 = vmatpush2.msra.mxu0 0.0
      %466 = vmatprep.subr.mxu0 0.0
      %467 = vmatpush2.msra.mxu0 0.0
      %468 = vmatprep.subr.mxu0 0.0
      %469 = vmatpush2.msra.mxu0 0.0
      %470 = vmatprep.subr.mxu0 0.0
      %471 = vmatpush2.msra.mxu0 0.0
      %472 = vmatprep.subr.mxu0 0.0
      %473 = vmatpush2.msra.mxu0 0.0
      %474 = vmatprep.subr.mxu0 0.0
      %475 = vmatpush2.msra.mxu0 0.0
      %476 = vmatprep.subr.mxu0 0.0
      %477 = vmatpush2.msra.mxu0 0.0
      %478 = vmatprep.subr.mxu0 0.0
      %479 = vmatpush2.msra.mxu0 0.0
      %480 = vmatprep.subr.mxu0 0.0
      %481 = vmatpush2.msra.mxu0 0.0
      %482 = vmatprep.subr.mxu0 0.0
      %483 = vmatpush2.msra.mxu0 0.0
      %484 = vmatprep.subr.mxu0 0.0
      %485 = vmatpush2.msra.mxu0 0.0
      %486 = vmatprep.subr.mxu0 0.0
      %487 = vmatpush2.msra.mxu0 0.0
      %488 = vmatprep.subr.mxu0 0.0
      %489 = vmatpush2.msra.mxu0 0.0
      %490 = vmatprep.subr.mxu0 0.0
      %491 = vmatpush2.msra.mxu0 0.0
      %492 = vmatprep.subr.mxu0 0.0
      %493 = vmatpush2.msra.mxu0 0.0
      %494 = vmatprep.mubr.f32.mxu0 0.0
      %495 = vmatmul.mubr.f32.gmra.mxu0 %v428
      %v496 = vpop.f32.mrf.mxu0
      %v497 = vadd.f32 0.0, %v496
      %v498 = vpop.f32.mrf.mxu0
      %499 = vdwg.mxu0
      %v500 = vmul.f32 %v497, 0.35355338
      %vm501 = vcmask 31744
      %v502 = vsel %vm501, %v500, -inf
      %v503 = vrot.slane %v502, 4
      %v504 = vmax.f32 %v502, %v503
      %v505 = vrot.slane %v504, 2
      %v506 = vmax.f32 %v504, %v505
      %v507 = vrot.slane %v506, 1
      %v508 = vmax.f32 %v506, %v507
      %v509 = vsub.f32 %v500, %v508
      %v510 = vmul.f32 %v509, 1.442695
      %v511 = vpow.pop %v510
      %v512 = vsel %vm501, %v511, 0.0
      %v513 = vrot.slane %v512, 4
      %v514 = vadd.f32 %v512, %v513
      %v515 = vrot.slane %v514, 2
      %v516 = vadd.f32 %v514, %v515
      %v517 = vrot.slane %v516, 1
      %v518 = vadd.f32 %v516, %v517
      %v519 = vrcp.pop %v518
      %v520 = vmul.f32 1.0, %v519
      %v521 = vmul.f32 %v511, %v520
      %v522 = vld [vmem:[%s7] sm:$0xf]
      %v524 = vsel %vm501, %v521, 0
      %vm526 = vcmask 1043456
      %v528 = vsel %vm526, %v522, 0
      %530 = vmatprep.subr.mxu0 0.0
      %531 = vmatpush1.msra.mxu0 0.0
      %532 = vmatprep.subr.mxu0 0.0
      %533 = vmatpush1.msra.mxu0 0.0
      %534 = vmatprep.subr.mxu0 0.0
      %535 = vmatpush1.msra.mxu0 0.0
      %536 = vmatprep.subr.mxu0 0.0
      %537 = vmatpush1.msra.mxu0 0.0
      %538 = vmatprep.subr.mxu0 0.0
      %539 = vmatpush1.msra.mxu0 0.0
      %540 = vmatprep.subr.mxu0 0.0
      %541 = vmatpush1.msra.mxu0 0.0
      %542 = vmatprep.subr.mxu0 0.0
      %543 = vmatpush1.msra.mxu0 0.0
      %544 = vmatprep.subr.mxu0 0.0
      %545 = vmatpush1.msra.mxu0 0.0
      %546 = vmatprep.subr.mxu0 0.0
      %547 = vmatpush1.msra.mxu0 0.0
      %548 = vmatprep.subr.mxu0 0.0
      %549 = vmatpush1.msra.mxu0 0.0
      %550 = vmatprep.subr.mxu0 0.0
      %551 = vmatpush1.msra.mxu0 0.0
      %552 = vmatprep.subr.mxu0 0.0
      %553 = vmatpush1.msra.mxu0 0.0
      %554 = vmatprep.subr.mxu0 0.0
      %555 = vmatpush1.msra.mxu0 0.0
      %556 = vmatprep.subr.mxu0 0.0
      %557 = vmatpush1.msra.mxu0 0.0
      %558 = vmatprep.subr.mxu0 0.0
      %559 = vmatpush1.msra.mxu0 0.0
      %560 = vmatprep.subr.mxu0 0.0
      %561 = vmatpush1.msra.mxu0 %v528
      %562 = vmatprep.subr.mxu0 0.0
      %563 = vmatpush2.msra.mxu0 0.0
      %564 = vmatprep.subr.mxu0 0.0
      %565 = vmatpush2.msra.mxu0 0.0
      %566 = vmatprep.subr.mxu0 0.0
      %567 = vmatpush2.msra.mxu0 0.0
      %568 = vmatprep.subr.mxu0 0.0
      %569 = vmatpush2.msra.mxu0 0.0
      %570 = vmatprep.subr.mxu0 0.0
      %571 = vmatpush2.msra.mxu0 0.0
      %572 = vmatprep.subr.mxu0 0.0
      %573 = vmatpush2.msra.mxu0 0.0
      %574 = vmatprep.subr.mxu0 0.0
      %575 = vmatpush2.msra.mxu0 0.0
      %576 = vmatprep.subr.mxu0 0.0
      %577 = vmatpush2.msra.mxu0 0.0
      %578 = vmatprep.subr.mxu0 0.0
      %579 = vmatpush2.msra.mxu0 0.0
      %580 = vmatprep.subr.mxu0 0.0
      %581 = vmatpush2.msra.mxu0 0.0
      %582 = vmatprep.subr.mxu0 0.0
      %583 = vmatpush2.msra.mxu0 0.0
      %584 = vmatprep.subr.mxu0 0.0
      %585 = vmatpush2.msra.mxu0 0.0
      %586 = vmatprep.subr.mxu0 0.0
      %587 = vmatpush2.msra.mxu0 0.0
      %588 = vmatprep.subr.mxu0 0.0
      %589 = vmatpush2.msra.mxu0 0.0
      %590 = vmatprep.subr.mxu0 0.0
      %591 = vmatpush2.msra.mxu0 0.0
      %592 = vmatprep.subr.mxu0 0.0
      %593 = vmatpush2.msra.mxu0 0.0
      %594 = vmatprep.mubr.f32.mxu0 0.0
      %595 = vmatmul.mubr.f32.gmra.mxu0 %v524
      %v596 = vpop.f32.mrf.mxu0
      %v597 = vadd.f32 0.0, %v596
      %v598 = vpop.f32.mrf.mxu0
      %599 = vdwg.mxu0
      %601 = vrot.lane.b32.xlu0 %v412, 96
      %v602 = vpop.permute.xlu0 %601
      %v604 = vmul.f32 %v597, %v602
      %v605 = vsel %vm302, %v604, 0.0
      %v606 = vrot.slane %v605, 4
      %v607 = vadd.f32 %v605, %v606
      %v608 = vrot.slane %v607, 2
      %v609 = vadd.f32 %v607, %v608
      %v610 = vrot.slane %v609, 1
      %v611 = vadd.f32 %v609, %v610
      %vm612 = vcmask 253952
      %613 = vst.msk [vmem:[%s298] sm:$0x1] %vm612, %v611
      %p614 = scmp.lt.s32.totalorder %s19, 1
      %s615 = scalar_select %p614, %s19, 1
      %s616 = scalar_lea.vmem %s8, %s615
      // Predicated region
      $region53: #{attentive_pooler_forward.14} parent=51 // pred_check
        %p617 = pneg %p210
      $region54: #{attentive_pooler_forward.14} parent=51 // pred_check_branch
        %619 = sbr.rel (%p617) target = $region56
      $region55: #{attentive_pooler_forward.14} parent=51 // pred_region
        _
      $region56: #{attentive_pooler_forward.14} parent=51 // pred_fallthru
        _
    $region52: #{attentive_pooler_forward.14} parent=5 // pred_fallthru
      _
    %p620 = scmp.le.s32.totalorder 2, %s14
    // Predicated region
    $region57: #{attentive_pooler_forward.14} parent=5 // pred_check
      %p621 = pneg %p620
    $region58: #{attentive_pooler_forward.14} parent=5 // pred_check_branch
      %623 = sbr.rel (%p621) target = $region60
    $region59: #{attentive_pooler_forward.14} parent=5 // pred_region
      %s624 = ssub.s32 %s14, 2
      // Predicated region
      $region61: #{attentive_pooler_forward.14} parent=59 // pred_check
        %p625 = pneg %p216
      $region62: #{attentive_pooler_forward.14} parent=59 // pred_check_branch
        %627 = sbr.rel (%p625) target = $region64
      $region63: #{attentive_pooler_forward.14} parent=59 // pred_region
        %p628 = scmp.lt.s32.totalorder %s20, 1
        %s629 = scalar_select %p628, %s20, 1
        %s630 = scalar_lea.vmem %s8, %s629
      $region64: #{attentive_pooler_forward.14} parent=59 // pred_fallthru
        _
    $region60: #{attentive_pooler_forward.14} parent=5 // pred_fallthru
      _
  $region6: #{attentive_pooler_forward.14} parent=0 // loop_footer
    %s18 = sadd.s32 1, %s14
  $region7: #{attentive_pooler_forward.14} parent=0 // loop_footer_branch
    %13 = sbr.rel target = $region3
  $region8: #{attentive_pooler_forward.14} parent=0 // loop_exit
    _

// kernel: attentive_pooler_forward.15
$region0: #{attentive_pooler_forward.15}
  #allocation0 [shape = 'u32[]', space=smem, size = 0x4, offset = 0x4, fixed_abs, tag = 'smem constant byte address 0x4 - core index']
  #allocation1 [shape = 'u32[144,128]{1,0:T(1,128)}', space=vmem, size = 0x12000, scoped, tag = 'internal scratch']
  %s0 = inlined_call_operand.vmem [shape: f32[2,32], index: 0, kind: input, shape index: {}]
  %s1 = inlined_call_operand.vmem [shape: f32[1,32], index: 1, kind: input, shape index: {}]
  %s2 = inlined_call_operand.vmem [shape: f32[1,32], index: 2, kind: input, shape index: {}]
  %s3 = inlined_call_operand.vmem [shape: f32[1,32], index: 3, kind: input, shape index: {}]
  %s4 = inlined_call_operand.vmem [shape: f32[32,128], index: 4, kind: input, shape index: {}]
  %s5 = inlined_call_operand.vmem [shape: f32[1,128], index: 5, kind: input, shape index: {}]
  %s6 = inlined_call_operand.vmem [shape: f32[128,32], index: 6, kind: input, shape index: {}]
  %s7 = inlined_call_operand.vmem [shape: f32[1,32], index: 7, kind: input, shape index: {}]
  %s8 = inlined_call_operand.hbm [shape: f32[2,32], index: 8, kind: output, shape index: {}]
  %s9 = sld [smem:[#allocation0]]
  $region42: #{attentive_pooler_forward.15} parent=0
    _
  %s11 = ssub.s32 1, %s9
  %s12 = scalar_select 0, %s11, %s9
  $region1: #{attentive_pooler_forward.15} parent=0
    #allocation2 [shape = 'u8[1024]{0}', space=vmem, size = 0x400, scoped, tag = 'output window, operand 0, single buffered']
    #allocation3 [shape = 's32[1]{0}', space=sflag, size = 0x4, scoped, tag = 'scoped memory for attentive_pooler_forward.15']
    %13 = vsyncpa [#allocation3], 0
    // Predicated region
    $region2: #{attentive_pooler_forward.15} parent=1 // pred_check
      _
    $region3: #{attentive_pooler_forward.15} parent=1 // pred_check_branch
      %15 = sbr.rel (0) target = $region5
    $region4: #{attentive_pooler_forward.15} parent=1 // pred_region
      _
    $region5: #{attentive_pooler_forward.15} parent=1 // pred_fallthru
      _
    // Predicated region
    $region6: #{attentive_pooler_forward.15} parent=1 // pred_check
      _
    $region7: #{attentive_pooler_forward.15} parent=1 // pred_check_branch
      %17 = sbr.rel (0) target = $region9
    $region8: #{attentive_pooler_forward.15} parent=1 // pred_region
      _
    $region9: #{attentive_pooler_forward.15} parent=1 // pred_fallthru
      _
    // Predicated region
    $region10: #{attentive_pooler_forward.15} parent=1 // pred_check
      _
    $region11: #{attentive_pooler_forward.15} parent=1 // pred_check_branch
      %19 = sbr.rel (0) target = $region13
    $region12: #{attentive_pooler_forward.15} parent=1 // pred_region
      _
    $region13: #{attentive_pooler_forward.15} parent=1 // pred_fallthru
      _
    // Predicated region
    $region14: #{attentive_pooler_forward.15} parent=1 // pred_check
      _
    $region15: #{attentive_pooler_forward.15} parent=1 // pred_check_branch
      %21 = sbr.rel (0) target = $region17
    $region16: #{attentive_pooler_forward.15} parent=1 // pred_region
      _
    $region17: #{attentive_pooler_forward.15} parent=1 // pred_fallthru
      _
    // Predicated region
    $region18: #{attentive_pooler_forward.15} parent=1 // pred_check
      _
    $region19: #{attentive_pooler_forward.15} parent=1 // pred_check_branch
      %23 = sbr.rel (0) target = $region21
    $region20: #{attentive_pooler_forward.15} parent=1 // pred_region
      _
    $region21: #{attentive_pooler_forward.15} parent=1 // pred_fallthru
      _
    // Predicated region
    $region22: #{attentive_pooler_forward.15} parent=1 // pred_check
      _
    $region23: #{attentive_pooler_forward.15} parent=1 // pred_check_branch
      %25 = sbr.rel (0) target = $region25
    $region24: #{attentive_pooler_forward.15} parent=1 // pred_region
      _
    $region25: #{attentive_pooler_forward.15} parent=1 // pred_fallthru
      _
    // Predicated region
    $region26: #{attentive_pooler_forward.15} parent=1 // pred_check
      _
    $region27: #{attentive_pooler_forward.15} parent=1 // pred_check_branch
      %27 = sbr.rel (0) target = $region29
    $region28: #{attentive_pooler_forward.15} parent=1 // pred_region
      _
    $region29: #{attentive_pooler_forward.15} parent=1 // pred_fallthru
      _
    // Predicated region
    $region30: #{attentive_pooler_forward.15} parent=1 // pred_check
      _
    $region31: #{attentive_pooler_forward.15} parent=1 // pred_check_branch
      %29 = sbr.rel (0) target = $region33
    $region32: #{attentive_pooler_forward.15} parent=1 // pred_region
      _
    $region33: #{attentive_pooler_forward.15} parent=1 // pred_fallthru
      _
    %v30 = vld [vmem:[%s1] sm:$0x1]
    %v31 = vld [vmem:[%s0] sm:$0x3]
    %v33 = vlaneseq
    %v34 = vshrl.u32 %v33, 7
    %v35 = vsub.s32 0, %v34
    %v36 = vrot.slane %v30, %v35
    %v38 = vadd.f32 %v36, %v31
    %v39 = vld [vmem:[%s2] sm:$0x1]
    %v40 = vld [vmem:[%s3] sm:$0x1]
    %vm41 = vcmask 254976
    %v42 = vsel %vm41, %v38, 0.0
    %43 = vadd.xlane.f32.xlu0 %v42
    %v44 = vpop.xlane.xlu0 %43
    %v45 = vrcp.pop 32.0
    %v46 = vmul.f32 %v44, %v45
    %v47 = vsub.f32 %v38, %v46
    %v48 = vmul.f32 %v47, %v47
    %v49 = vsel %vm41, %v48, 0.0
    %50 = vadd.xlane.f32.xlu0 %v49
    %v51 = vpop.xlane.xlu0 %50
    %v52 = vmul.f32 %v51, %v45
    %v53 = vadd.f32 %v52, 1e-06
    %v54 = vrsqrt.pop %v53
    %v55 = vmul.f32 %v47, %v54
    %v57 = vlaneseq
    %v58 = vshrl.u32 %v57, 7
    %v59 = vsub.s32 0, %v58
    %v60 = vrot.slane %v39, %v59
    %v62 = vmul.f32 %v55, %v60
    %v64 = vlaneseq
    %v65 = vshrl.u32 %v64, 7
    %v66 = vsub.s32 0, %v65
    %v67 = vrot.slane %v40, %v66
    %v69 = vadd.f32 %v62, %v67
    %v70 = vld [vmem:[%s4] sm:$0xff]
    %v71 = vld [vmem:[%s4 + $0x8] sm:$0xff]
    %v72 = vld [vmem:[%s4 + $0x10] sm:$0xff]
    %v73 = vld [vmem:[%s4 + $0x18] sm:$0xff]
    %v74 = vld [vmem:[%s5] sm:$0x1]
    %v76 = vlaneseq
    %v77 = vshrl.u32 %v76, 7
    %v78 = vsub.s32 0, %v77
    %v79 = vrot.slane %v74, %v78
    %vm81 = vcmask 261120
    %v83 = vsel %vm81, %v69, 0
    %85 = vmatprep.subr.mxu0 0.0
    %86 = vmatpush1.msra.mxu0 0.0
    %87 = vmatprep.subr.mxu0 0.0
    %88 = vmatpush1.msra.mxu0 0.0
    %89 = vmatprep.subr.mxu0 0.0
    %90 = vmatpush1.msra.mxu0 0.0
    %91 = vmatprep.subr.mxu0 0.0
    %92 = vmatpush1.msra.mxu0 0.0
    %93 = vmatprep.subr.mxu0 0.0
    %94 = vmatpush1.msra.mxu0 0.0
    %95 = vmatprep.subr.mxu0 0.0
    %96 = vmatpush1.msra.mxu0 0.0
    %97 = vmatprep.subr.mxu0 0.0
    %98 = vmatpush1.msra.mxu0 0.0
    %99 = vmatprep.subr.mxu0 0.0
    %100 = vmatpush1.msra.mxu0 0.0
    %101 = vmatprep.subr.mxu0 0.0
    %102 = vmatpush1.msra.mxu0 0.0
    %103 = vmatprep.subr.mxu0 0.0
    %104 = vmatpush1.msra.mxu0 0.0
    %105 = vmatprep.subr.mxu0 0.0
    %106 = vmatpush1.msra.mxu0 0.0
    %107 = vmatprep.subr.mxu0 0.0
    %108 = vmatpush1.msra.mxu0 0.0
    %109 = vmatprep.subr.mxu0 0.0
    %110 = vmatpush1.msra.mxu0 %v73
    %111 = vmatprep.subr.mxu0 0.0
    %112 = vmatpush1.msra.mxu0 %v72
    %113 = vmatprep.subr.mxu0 0.0
    %114 = vmatpush1.msra.mxu0 %v71
    %115 = vmatprep.subr.mxu0 0.0
    %116 = vmatpush1.msra.mxu0 %v70
    %117 = vmatprep.subr.mxu0 0.0
    %118 = vmatpush2.msra.mxu0 0.0
    %119 = vmatprep.subr.mxu0 0.0
    %120 = vmatpush2.msra.mxu0 0.0
    %121 = vmatprep.subr.mxu0 0.0
    %122 = vmatpush2.msra.mxu0 0.0
    %123 = vmatprep.subr.mxu0 0.0
    %124 = vmatpush2.msra.mxu0 0.0
    %125 = vmatprep.subr.mxu0 0.0
    %126 = vmatpush2.msra.mxu0 0.0
    %127 = vmatprep.subr.mxu0 0.0
    %128 = vmatpush2.msra.mxu0 0.0
    %129 = vmatprep.subr.mxu0 0.0
    %130 = vmatpush2.msra.mxu0 0.0
    %131 = vmatprep.subr.mxu0 0.0
    %132 = vmatpush2.msra.mxu0 0.0
    %133 = vmatprep.subr.mxu0 0.0
    %134 = vmatpush2.msra.mxu0 0.0
    %135 = vmatprep.subr.mxu0 0.0
    %136 = vmatpush2.msra.mxu0 0.0
    %137 = vmatprep.subr.mxu0 0.0
    %138 = vmatpush2.msra.mxu0 0.0
    %139 = vmatprep.subr.mxu0 0.0
    %140 = vmatpush2.msra.mxu0 0.0
    %141 = vmatprep.subr.mxu0 0.0
    %142 = vmatpush2.msra.mxu0 0.0
    %143 = vmatprep.subr.mxu0 0.0
    %144 = vmatpush2.msra.mxu0 0.0
    %145 = vmatprep.subr.mxu0 0.0
    %146 = vmatpush2.msra.mxu0 0.0
    %147 = vmatprep.subr.mxu0 0.0
    %148 = vmatpush2.msra.mxu0 0.0
    %149 = vmatprep.mubr.f32.mxu0 0.0
    %150 = vmatmul.mubr.f32.gmra.mxu0 %v83
    %v151 = vpop.f32.mrf.mxu0
    %v152 = vadd.f32 %v79, %v151
    %v153 = vpop.f32.mrf.mxu0
    %154 = vdwg.mxu0
    %v155 = vmul.f32 %v152, 0.5
    %v156 = vmul.f32 %v152, 0.70710677
    %vm157 = vcmp.lt.f32.partialorder %v156, 0.0
    %v158 = vsel %vm157, -1.0, 1.0
    %v159 = vand.u32 2147483647, %v156
    %v160 = vmul.f32 %v159, 0.3275911
    %v161 = vadd.f32 %v160, 1.0
    %v162 = vrcp.pop %v161
    %v163 = vmul.f32 1.0, %v162
    %v164 = vmul.f32 %v163, 1.0614054
    %v165 = vadd.f32 %v164, -1.4531521
    %v166 = vmul.f32 %v165, %v163
    %v167 = vadd.f32 %v166, 1.4214138
    %v168 = vmul.f32 %v167, %v163
    %v169 = vadd.f32 %v168, -0.28449672
    %v170 = vmul.f32 %v169, %v163
    %v171 = vadd.f32 %v170, 0.2548296
    %v172 = vmul.f32 %v171, %v163
    %v173 = vsub.f32 0.0, %v159
    %v174 = vmul.f32 %v173, %v159
    %v175 = vmul.f32 %v174, 1.442695
    %v176 = vpow.pop %v175
    %v177 = vmul.f32 %v172, %v176
    %v178 = vsub.f32 1.0, %v177
    %v179 = vmul.f32 %v158, %v178
    %v180 = vadd.f32 %v179, 1.0
    %v181 = vmul.f32 %v155, %v180
    %v182 = vld [vmem:[%s6] sm:$0xff]
    %v183 = vld [vmem:[%s6 + $0x8] sm:$0xff]
    %v184 = vld [vmem:[%s6 + $0x10] sm:$0xff]
    %v185 = vld [vmem:[%s6 + $0x18] sm:$0xff]
    %v186 = vld [vmem:[%s6 + $0x20] sm:$0xff]
    %v187 = vld [vmem:[%s6 + $0x28] sm:$0xff]
    %v188 = vld [vmem:[%s6 + $0x30] sm:$0xff]
    %v189 = vld [vmem:[%s6 + $0x38] sm:$0xff]
    %v190 = vld [vmem:[%s6 + $0x40] sm:$0xff]
    %v191 = vld [vmem:[%s6 + $0x48] sm:$0xff]
    %v192 = vld [vmem:[%s6 + $0x50] sm:$0xff]
    %v193 = vld [vmem:[%s6 + $0x58] sm:$0xff]
    %v194 = vld [vmem:[%s6 + $0x60] sm:$0xff]
    %v195 = vld [vmem:[%s6 + $0x68] sm:$0xff]
    %v196 = vld [vmem:[%s6 + $0x70] sm:$0xff]
    %v197 = vld [vmem:[%s6 + $0x78] sm:$0xff]
    %v198 = vld [vmem:[%s7] sm:$0x1]
    %v200 = vlaneseq
    %v201 = vshrl.u32 %v200, 7
    %v202 = vsub.s32 0, %v201
    %v203 = vrot.slane %v198, %v202
    %205 = vmatprep.subr.mxu0 0.0
    %206 = vmatpush1.msra.mxu0 %v197
    %207 = vmatprep.subr.mxu0 0.0
    %208 = vmatpush1.msra.mxu0 %v196
    %209 = vmatprep.subr.mxu0 0.0
    %210 = vmatpush1.msra.mxu0 %v195
    %211 = vmatprep.subr.mxu0 0.0
    %212 = vmatpush1.msra.mxu0 %v194
    %213 = vmatprep.subr.mxu0 0.0
    %214 = vmatpush1.msra.mxu0 %v193
    %215 = vmatprep.subr.mxu0 0.0
    %216 = vmatpush1.msra.mxu0 %v192
    %217 = vmatprep.subr.mxu0 0.0
    %218 = vmatpush1.msra.mxu0 %v191
    %219 = vmatprep.subr.mxu0 0.0
    %220 = vmatpush1.msra.mxu0 %v190
    %221 = vmatprep.subr.mxu0 0.0
    %222 = vmatpush1.msra.mxu0 %v189
    %223 = vmatprep.subr.mxu0 0.0
    %224 = vmatpush1.msra.mxu0 %v188
    %225 = vmatprep.subr.mxu0 0.0
    %226 = vmatpush1.msra.mxu0 %v187
    %227 = vmatprep.subr.mxu0 0.0
    %228 = vmatpush1.msra.mxu0 %v186
    %229 = vmatprep.subr.mxu0 0.0
    %230 = vmatpush1.msra.mxu0 %v185
    %231 = vmatprep.subr.mxu0 0.0
    %232 = vmatpush1.msra.mxu0 %v184
    %233 = vmatprep.subr.mxu0 0.0
    %234 = vmatpush1.msra.mxu0 %v183
    %235 = vmatprep.subr.mxu0 0.0
    %236 = vmatpush1.msra.mxu0 %v182
    %237 = vmatprep.subr.mxu0 0.0
    %238 = vmatpush2.msra.mxu0 0.0
    %239 = vmatprep.subr.mxu0 0.0
    %240 = vmatpush2.msra.mxu0 0.0
    %241 = vmatprep.subr.mxu0 0.0
    %242 = vmatpush2.msra.mxu0 0.0
    %243 = vmatprep.subr.mxu0 0.0
    %244 = vmatpush2.msra.mxu0 0.0
    %245 = vmatprep.subr.mxu0 0.0
    %246 = vmatpush2.msra.mxu0 0.0
    %247 = vmatprep.subr.mxu0 0.0
    %248 = vmatpush2.msra.mxu0 0.0
    %249 = vmatprep.subr.mxu0 0.0
    %250 = vmatpush2.msra.mxu0 0.0
    %251 = vmatprep.subr.mxu0 0.0
    %252 = vmatpush2.msra.mxu0 0.0
    %253 = vmatprep.subr.mxu0 0.0
    %254 = vmatpush2.msra.mxu0 0.0
    %255 = vmatprep.subr.mxu0 0.0
    %256 = vmatpush2.msra.mxu0 0.0
    %257 = vmatprep.subr.mxu0 0.0
    %258 = vmatpush2.msra.mxu0 0.0
    %259 = vmatprep.subr.mxu0 0.0
    %260 = vmatpush2.msra.mxu0 0.0
    %261 = vmatprep.subr.mxu0 0.0
    %262 = vmatpush2.msra.mxu0 0.0
    %263 = vmatprep.subr.mxu0 0.0
    %264 = vmatpush2.msra.mxu0 0.0
    %265 = vmatprep.subr.mxu0 0.0
    %266 = vmatpush2.msra.mxu0 0.0
    %267 = vmatprep.subr.mxu0 0.0
    %268 = vmatpush2.msra.mxu0 0.0
    %269 = vmatprep.mubr.f32.mxu0 0.0
    %270 = vmatmul.mubr.f32.gmra.mxu0 %v181
    %v271 = vpop.f32.mrf.mxu0
    %v272 = vadd.f32 %v203, %v271
    %v273 = vpop.f32.mrf.mxu0
    %274 = vdwg.mxu0
    %v275 = vadd.f32 %v38, %v272
    %276 = vst.msk [vmem:[#allocation2] sm:$0x3] %vm41, %v275
    // Predicated region
    $region34: #{attentive_pooler_forward.15} parent=1 // pred_check
      _
    $region35: #{attentive_pooler_forward.15} parent=1 // pred_check_branch
      %278 = sbr.rel (0) target = $region37
    $region36: #{attentive_pooler_forward.15} parent=1 // pred_region
      %s280 = ssub.s32 32, 32
      %281 = vsyncadd [#allocation3], %s280
      %s283 = sshll.u32 [#allocation2], 4
      %s284 = int_to_ptr.vmem [resolvable:$true] %s283
      %286 = dma.vmem_to_hbm [thread:$0]  %s284, 32, %s8, [#allocation3]
    $region37: #{attentive_pooler_forward.15} parent=1 // pred_fallthru
      _
    // Predicated region
    $region38: #{attentive_pooler_forward.15} parent=1 // pred_check
      _
    $region39: #{attentive_pooler_forward.15} parent=1 // pred_check_branch
      %288 = sbr.rel (0) target = $region41
    $region40: #{attentive_pooler_forward.15} parent=1 // pred_region
      %289 = dma.done [#allocation3], 32
    $region41: #{attentive_pooler_forward.15} parent=1 // pred_fallthru
      _
    %290 = vsyncpa [#allocation3], 1

</llo_original>
